<compile_context>
chip_gen: v6e
topology: v6e:2x2x1
jax: 0.10.0
libtpu: 0.0.40
codegen_flags: <defaults>
</compile_context>

<pallas_src>
import math
import jax
import jax.numpy as jnp
from jax import lax
from jax.experimental import pallas as pl
from jax.experimental.pallas import tpu as pltpu

# ---------------- small synthetic config ----------------
B = 2            # batch
T = 8            # sequence length (<= n_step)
N_STEP = 16      # max positions
C = 32           # model_dim
H = 4            # n_head
D = C // H       # head dim
N_LAYER = 2
VOCAB = 128
EPS = 1e-5       # nn.LayerNorm default
BT = B * T


# ---------------- in-kernel helpers ----------------
def _layernorm(x, w, b):
    mu = jnp.mean(x, axis=-1, keepdims=True)
    var = jnp.mean((x - mu) ** 2, axis=-1, keepdims=True)
    return (x - mu) * lax.rsqrt(var + EPS) * w + b


def _new_gelu(x):
    return 0.5 * x * (1.0 + jnp.tanh(math.sqrt(2.0 / math.pi)
                                     * (x + 0.044715 * x ** 3)))


# ---------------- fused GPT kernel (single invocation, layers unrolled) -----
# lnb slab rows (sublane-sliced): 0 ln1w | 1 ln1b | 2 ln2w | 3 ln2b | 4 bo | 5 bpr
def gpt_kernel(x0_ref, mask_ref, wqkv_ref, wo_ref, wfc_ref, wpr_ref,
               bqkv_ref, bfc_ref, lnb_ref, lnf_ref, whead_ref, bhead_ref,
               logits_ref):
    x = x0_ref[...]                                   # (BT, C) embeddings
    mask = mask_ref[...]                              # (BT, BT) additive mask

    for l in range(N_LAYER):                          # static unroll (all resident)
        lnb = lnb_ref[l]                              # (6, C) sublane-sliced slab
        ln1w, ln1b = lnb[0:1], lnb[1:2]
        ln2w, ln2b = lnb[2:3], lnb[3:4]
        bo, bpr = lnb[4:5], lnb[5:6]

        # --- causal self-attention (whole batch, head-batched matmuls) ---
        h = _layernorm(x, ln1w, ln1b)
        qkv = (jnp.dot(h, wqkv_ref[l], preferred_element_type=jnp.float32)
               + bqkv_ref[l])                         # (BT, 3C); q pre-scaled
        qkv3 = jnp.transpose(qkv.reshape(BT, 3 * H, D), (1, 0, 2))  # (3H, BT, D)
        q3 = qkv3[0:H]                                # leading-dim slices (free)
        k3 = qkv3[H:2 * H]
        v3 = qkv3[2 * H:3 * H]

        s = jnp.einsum('hqd,hkd->hqk', q3, k3,
                       preferred_element_type=jnp.float32) + mask   # (H, BT, BT)
        s = s - jnp.max(s, axis=-1, keepdims=True)
        p = jnp.exp(s)
        p = p * pl.reciprocal(jnp.sum(p, axis=-1, keepdims=True), approx=True)
        o3 = jnp.einsum('hqk,hkd->hqd', p, v3,
                        preferred_element_type=jnp.float32)         # (H, BT, D)
        attn = jnp.transpose(o3, (1, 0, 2)).reshape(BT, C)
        x = x + jnp.dot(attn, wo_ref[l], preferred_element_type=jnp.float32) + bo

        # --- FFN branch ---
        h2 = _layernorm(x, ln2w, ln2b)
        f = _new_gelu(jnp.dot(h2, wfc_ref[l],
                              preferred_element_type=jnp.float32) + bfc_ref[l])
        x = x + jnp.dot(f, wpr_ref[l], preferred_element_type=jnp.float32) + bpr

    # --- final LN + tied-weight head on the last token of each sequence ---
    lnf = lnf_ref[...]                                # (2, C): w | b
    xl = jnp.concatenate(
        [x[(b + 1) * T - 1:(b + 1) * T, :] for b in range(B)], axis=0)  # (B, C)
    hl = _layernorm(xl, lnf[0:1], lnf[1:2])
    logits_ref[...] = (jnp.dot(hl, whead_ref[...],
                               preferred_element_type=jnp.float32)
                       + bhead_ref[...])              # (B, VOCAB) lane-dense


# ---------------- packing (done once, outside the kernel) ----------------
def pack_params(params):
    scale = 1.0 / math.sqrt(D)
    wqkv_l, wo_l, wfc_l, wpr_l, bqkv_l, bfc_l, lnb_l = [], [], [], [], [], [], []
    for p in params["blocks"]:
        # fold 1/sqrt(D) into the q columns of the QKV projection (weight+bias)
        wqkv_l.append(jnp.concatenate([p["wqkv"][:, :C] * scale,
                                       p["wqkv"][:, C:]], axis=1))   # (C, 3C)
        bqkv_l.append(jnp.concatenate([p["bqkv"][:, :C] * scale,
                                       p["bqkv"][:, C:]], axis=1))   # (1, 3C)
        wo_l.append(p["wo"])                                         # (C, C)
        wfc_l.append(p["wfc"])                                       # (C, 4C)
        wpr_l.append(p["wpr"])                                       # (4C, C)
        bfc_l.append(p["bfc"])                                       # (1, 4C)
        lnb_l.append(jnp.concatenate([p["ln1w"], p["ln1b"],
                                      p["ln2w"], p["ln2b"],
                                      p["bo"], p["bpr"]], axis=0))   # (6, C)
    # block-diagonal (per-batch) causal additive mask over flattened (B*T) rows
    idx = jnp.arange(BT, dtype=jnp.int32)
    same = (idx[:, None] // T) == (idx[None, :] // T)
    causal = (idx[:, None] % T) >= (idx[None, :] % T)
    mask = jnp.where(same & causal, 0.0, -1e30).astype(jnp.float32)
    return {
        "wqkv": jnp.stack(wqkv_l, axis=0),            # (L, C, 3C)
        "wo": jnp.stack(wo_l, axis=0),                # (L, C, C)
        "wfc": jnp.stack(wfc_l, axis=0),              # (L, C, 4C)
        "wpr": jnp.stack(wpr_l, axis=0),              # (L, 4C, C)
        "bqkv": jnp.stack(bqkv_l, axis=0),            # (L, 1, 3C)
        "bfc": jnp.stack(bfc_l, axis=0),              # (L, 1, 4C)
        "lnb": jnp.stack(lnb_l, axis=0),              # (L, 6, C)
        "lnf": jnp.concatenate([params["lnf_w"], params["lnf_b"]], axis=0),  # (2,C)
        "whead": params["wte"].T,                     # (C, VOCAB) tied, transposed once
        "bhead": params["head_b"],                    # (1, VOCAB)
        "mask": mask,                                 # (BT, BT)
    }


# ---------------- wrapper ----------------
def gpt_forward(token_ids, params, packed=None):
    if packed is None:
        packed = pack_params(params)
    # embedding gather + positional add are glue (pure JAX); dropout = identity
    tok = jnp.take(params["wte"], token_ids, axis=0)          # (B, T, C)
    pos = params["wpe"][:T][None, :, :]
    x0 = (tok + pos).reshape(BT, C).astype(jnp.float32)

    vmem = pl.BlockSpec(memory_space=pltpu.MemorySpace.VMEM)  # full array in VMEM
    # TODO(synk): when scaling up, switch to a layer grid with pl.Buffered(2-3)
    # weight streaming, a VOCAB-tiled head, bf16 matmul operands (f32 acc) and a
    # leading "parallel" axis for v7x's two TensorCores.
    logits = pl.pallas_call(
        gpt_kernel,
        out_shape=jax.ShapeDtypeStruct((B, VOCAB), jnp.float32),
        in_specs=[vmem] * 12,
        out_specs=vmem,
        compiler_params=pltpu.CompilerParams(
            vmem_limit_bytes=32 * 1024 * 1024),
    )(x0, packed["mask"], packed["wqkv"], packed["wo"], packed["wfc"],
      packed["wpr"], packed["bqkv"], packed["bfc"], packed["lnb"],
      packed["lnf"], packed["whead"], packed["bhead"])
    return logits[:, None, :]                                  # (B, 1, VOCAB)


# ---------------- deterministic parameter init ----------------
def init_params(key):
    std = 0.02
    std_out = 0.02 / math.sqrt(2 * N_LAYER)                    # linear_out.weight init
    keys = iter(jax.random.split(key, 4 + 4 * N_LAYER))
    params = {
        "wte": std * jax.random.normal(next(keys), (VOCAB, C), jnp.float32),
        "wpe": std * jax.random.normal(next(keys), (N_STEP, C), jnp.float32),
        "lnf_w": jnp.ones((1, C), jnp.float32),
        "lnf_b": jnp.zeros((1, C), jnp.float32),
        "head_b": jnp.zeros((1, VOCAB), jnp.float32),
        "blocks": [],
    }
    for _ in range(N_LAYER):
        blk = {
            "ln1w": jnp.ones((1, C), jnp.float32),
            "ln1b": jnp.zeros((1, C), jnp.float32),
            "wqkv": std * jax.random.normal(next(keys), (C, 3 * C), jnp.float32),
            "bqkv": jnp.zeros((1, 3 * C), jnp.float32),
            "wo": std_out * jax.random.normal(next(keys), (C, C), jnp.float32),
            "bo": jnp.zeros((1, C), jnp.float32),
            "ln2w": jnp.ones((1, C), jnp.float32),
            "ln2b": jnp.zeros((1, C), jnp.float32),
            "wfc": std * jax.random.normal(next(keys), (C, 4 * C), jnp.float32),
            "bfc": jnp.zeros((1, 4 * C), jnp.float32),
            "wpr": std_out * jax.random.normal(next(keys), (4 * C, C), jnp.float32),
            "bpr": jnp.zeros((1, C), jnp.float32),
        }
        params["blocks"].append(blk)
    return params


# ---------------- pure-JAX reference (for verification) ----------------
def gpt_reference(token_ids, params):
    x = jnp.take(params["wte"], token_ids, axis=0) + params["wpe"][:T][None]
    causal = jnp.tril(jnp.ones((T, T), bool))
    for p in params["blocks"]:
        h = _layernorm(x, p["ln1w"][0], p["ln1b"][0])
        qkv = h @ p["wqkv"] + p["bqkv"][0]
        q, k, v = jnp.split(qkv, 3, axis=-1)
        q = q.reshape(B, T, H, D).transpose(0, 2, 1, 3)
        k = k.reshape(B, T, H, D).transpose(0, 2, 1, 3)
        v = v.reshape(B, T, H, D).transpose(0, 2, 1, 3)
        s = jnp.einsum("bhtd,bhsd->bhts", q, k) / math.sqrt(D)
        s = jnp.where(causal[None, None], s, -1e30)
        a = jax.nn.softmax(s, axis=-1)
        o = jnp.einsum("bhts,bhsd->bhtd", a, v).transpose(0, 2, 1, 3).reshape(B, T, C)
        x = x + (o @ p["wo"] + p["bo"][0])
        h2 = _layernorm(x, p["ln2w"][0], p["ln2b"][0])
        x = x + (_new_gelu(h2 @ p["wfc"] + p["bfc"][0]) @ p["wpr"] + p["bpr"][0])
    xl = _layernorm(x[:, -1:, :], params["lnf_w"][0], params["lnf_b"][0])
    return xl @ params["wte"].T + params["head_b"][0]


if __name__ == "__main__":
    key = jax.random.PRNGKey(0)
    pkey, ikey = jax.random.split(key)
    params = init_params(pkey)
    token_ids = jax.random.randint(ikey, (B, T), 0, VOCAB, dtype=jnp.int32)

    logits = gpt_forward(token_ids, params)
    logits = jax.block_until_ready(logits)
    assert logits.shape == (B, 1, VOCAB)

    ref = gpt_reference(token_ids, params)
    assert jnp.allclose(logits, ref, rtol=2e-3, atol=2e-3), "mismatch vs reference"

    print("KERNEL_OK")
</pallas_src>

<mosaic_0001>
module attributes {stable_mosaic.version = 11 : i64} {
  func.func @gpt_kernel(%arg0: memref<16x32xf32, #tpu.memory_space<vmem>>, %arg1: memref<16x16xf32, #tpu.memory_space<vmem>>, %arg2: memref<2x32x96xf32, #tpu.memory_space<vmem>>, %arg3: memref<2x32x32xf32, #tpu.memory_space<vmem>>, %arg4: memref<2x32x128xf32, #tpu.memory_space<vmem>>, %arg5: memref<2x128x32xf32, #tpu.memory_space<vmem>>, %arg6: memref<2x1x96xf32, #tpu.memory_space<vmem>>, %arg7: memref<2x1x128xf32, #tpu.memory_space<vmem>>, %arg8: memref<2x6x32xf32, #tpu.memory_space<vmem>>, %arg9: memref<2x32xf32, #tpu.memory_space<vmem>>, %arg10: memref<32x128xf32, #tpu.memory_space<vmem>>, %arg11: memref<1x128xf32, #tpu.memory_space<vmem>>, %arg12: memref<2x128xf32, #tpu.memory_space<vmem>>) attributes {dimension_semantics = [], scalar_prefetch = 0 : i64, scratch_operands = 0 : i64, tpu.core_type = #tpu.core_type<tc>} {
    %c0 = arith.constant 0 : index
    %c0_0 = arith.constant 0 : index
    %0 = vector.load %arg0[%c0, %c0_0] : memref<16x32xf32, #tpu.memory_space<vmem>>, vector<16x32xf32>
    %c0_1 = arith.constant 0 : index
    %c0_2 = arith.constant 0 : index
    %1 = vector.load %arg1[%c0_1, %c0_2] : memref<16x16xf32, #tpu.memory_space<vmem>>, vector<16x16xf32>
    %c0_3 = arith.constant 0 : index
    %c0_4 = arith.constant 0 : index
    %c0_5 = arith.constant 0 : index
    %2 = vector.load %arg8[%c0_3, %c0_4, %c0_5] : memref<2x6x32xf32, #tpu.memory_space<vmem>>, vector<1x6x32xf32>
    %3 = vector.shape_cast %2 : vector<1x6x32xf32> to vector<6x32xf32>
    %4 = vector.extract_strided_slice %3 {offsets = [0, 0], sizes = [1, 32], strides = [1, 1]} : vector<6x32xf32> to vector<1x32xf32>
    %5 = vector.extract_strided_slice %3 {offsets = [1, 0], sizes = [1, 32], strides = [1, 1]} : vector<6x32xf32> to vector<1x32xf32>
    %6 = vector.extract_strided_slice %3 {offsets = [2, 0], sizes = [1, 32], strides = [1, 1]} : vector<6x32xf32> to vector<1x32xf32>
    %7 = vector.extract_strided_slice %3 {offsets = [3, 0], sizes = [1, 32], strides = [1, 1]} : vector<6x32xf32> to vector<1x32xf32>
    %8 = vector.extract_strided_slice %3 {offsets = [4, 0], sizes = [1, 32], strides = [1, 1]} : vector<6x32xf32> to vector<1x32xf32>
    %9 = vector.extract_strided_slice %3 {offsets = [5, 0], sizes = [1, 32], strides = [1, 1]} : vector<6x32xf32> to vector<1x32xf32>
    %cst = arith.constant dense<0.000000e+00> : vector<16xf32>
    %10 = vector.multi_reduction <add>, %0, %cst [1] : vector<16x32xf32> to vector<16xf32>
    %11 = vector.shape_cast %10 : vector<16xf32> to vector<16x1xf32>
    %cst_6 = arith.constant 3.200000e+01 : f32
    %12 = vector.broadcast %cst_6 : f32 to vector<16x1xf32>
    %13 = arith.divf %11, %12 : vector<16x1xf32>
    %14 = vector.broadcast %13 : vector<16x1xf32> to vector<16x32xf32>
    %15 = arith.subf %0, %14 : vector<16x32xf32>
    %16 = arith.mulf %15, %15 : vector<16x32xf32>
    %cst_7 = arith.constant dense<0.000000e+00> : vector<16xf32>
    %17 = vector.multi_reduction <add>, %16, %cst_7 [1] : vector<16x32xf32> to vector<16xf32>
    %18 = vector.shape_cast %17 : vector<16xf32> to vector<16x1xf32>
    %cst_8 = arith.constant 3.200000e+01 : f32
    %19 = vector.broadcast %cst_8 : f32 to vector<16x1xf32>
    %20 = arith.divf %18, %19 : vector<16x1xf32>
    %21 = vector.broadcast %13 : vector<16x1xf32> to vector<16x32xf32>
    %22 = arith.subf %0, %21 : vector<16x32xf32>
    %cst_9 = arith.constant 9.99999974E-6 : f32
    %23 = vector.broadcast %cst_9 : f32 to vector<16x1xf32>
    %24 = arith.addf %20, %23 : vector<16x1xf32>
    %25 = math.rsqrt %24 : vector<16x1xf32>
    %26 = vector.broadcast %25 : vector<16x1xf32> to vector<16x32xf32>
    %27 = arith.mulf %22, %26 : vector<16x32xf32>
    %28 = vector.broadcast %4 : vector<1x32xf32> to vector<16x32xf32>
    %29 = arith.mulf %27, %28 : vector<16x32xf32>
    %30 = vector.broadcast %5 : vector<1x32xf32> to vector<16x32xf32>
    %31 = arith.addf %29, %30 : vector<16x32xf32>
    %c0_10 = arith.constant 0 : index
    %c0_11 = arith.constant 0 : index
    %c0_12 = arith.constant 0 : index
    %32 = vector.load %arg2[%c0_10, %c0_11, %c0_12] : memref<2x32x96xf32, #tpu.memory_space<vmem>>, vector<1x32x96xf32>
    %33 = vector.shape_cast %32 : vector<1x32x96xf32> to vector<32x96xf32>
    %cst_13 = arith.constant dense<0.000000e+00> : vector<16x96xf32>
    %34 = tpu.matmul %31, %33, %cst_13 {dimension_numbers = #tpu.dot_dimension_numbers<[1], [0], [0], [1], [0, 0, 1, 1], [], []>} : vector<16x32xf32>, vector<32x96xf32>, vector<16x96xf32> -> vector<16x96xf32>
    %c0_14 = arith.constant 0 : index
    %c0_15 = arith.constant 0 : index
    %c0_16 = arith.constant 0 : index
    %35 = vector.load %arg6[%c0_14, %c0_15, %c0_16] : memref<2x1x96xf32, #tpu.memory_space<vmem>>, vector<1x1x96xf32>
    %36 = vector.shape_cast %35 : vector<1x1x96xf32> to vector<1x96xf32>
    %37 = vector.broadcast %36 : vector<1x96xf32> to vector<16x96xf32>
    %38 = arith.addf %34, %37 : vector<16x96xf32>
    %39 = vector.shape_cast %38 : vector<16x96xf32> to vector<16x12x8xf32>
    %40 = tpu.transpose %39, [1, 0, 2] : vector<16x12x8xf32> -> vector<12x16x8xf32>
    %41 = vector.extract_strided_slice %40 {offsets = [0, 0, 0], sizes = [4, 16, 8], strides = [1, 1, 1]} : vector<12x16x8xf32> to vector<4x16x8xf32>
    %42 = vector.extract_strided_slice %40 {offsets = [4, 0, 0], sizes = [4, 16, 8], strides = [1, 1, 1]} : vector<12x16x8xf32> to vector<4x16x8xf32>
    %43 = vector.extract_strided_slice %40 {offsets = [8, 0, 0], sizes = [4, 16, 8], strides = [1, 1, 1]} : vector<12x16x8xf32> to vector<4x16x8xf32>
    "tpu.trace_start"() <{level = 10 : i32, message = "hqd,hkd->hqk"}> : () -> ()
    %cst_17 = arith.constant dense<0.000000e+00> : vector<4x16x16xf32>
    %44 = tpu.matmul %41, %42, %cst_17 {dimension_numbers = #tpu.dot_dimension_numbers<[2], [2], [1], [1], [0, 0, 0, 1, 1, 1], [0], [0]>} : vector<4x16x8xf32>, vector<4x16x8xf32>, vector<4x16x16xf32> -> vector<4x16x16xf32>
    "tpu.trace_stop"() : () -> ()
    %45 = vector.shape_cast %1 : vector<16x16xf32> to vector<1x16x16xf32>
    %46 = vector.broadcast %45 : vector<1x16x16xf32> to vector<4x16x16xf32>
    %47 = arith.addf %44, %46 : vector<4x16x16xf32>
    %cst_18 = arith.constant dense<0xFF800000> : vector<4x16xf32>
    %48 = vector.multi_reduction <maximumf>, %47, %cst_18 [2] : vector<4x16x16xf32> to vector<4x16xf32>
    %49 = vector.shape_cast %48 : vector<4x16xf32> to vector<4x16x1xf32>
    %50 = vector.broadcast %49 : vector<4x16x1xf32> to vector<4x16x16xf32>
    %51 = arith.subf %47, %50 : vector<4x16x16xf32>
    %52 = math.exp %51 : vector<4x16x16xf32>
    %cst_19 = arith.constant dense<0.000000e+00> : vector<4x16xf32>
    %53 = vector.multi_reduction <add>, %52, %cst_19 [2] : vector<4x16x16xf32> to vector<4x16xf32>
    %54 = vector.shape_cast %53 : vector<4x16xf32> to vector<4x16x1xf32>
    %55 = tpu.reciprocal %54 {approx = true} : vector<4x16x1xf32> -> vector<4x16x1xf32>
    %56 = vector.broadcast %55 : vector<4x16x1xf32> to vector<4x16x16xf32>
    %57 = arith.mulf %52, %56 : vector<4x16x16xf32>
    "tpu.trace_start"() <{level = 10 : i32, message = "hqk,hkd->hqd"}> : () -> ()
    %cst_20 = arith.constant dense<0.000000e+00> : vector<4x16x8xf32>
    %58 = tpu.matmul %57, %43, %cst_20 {dimension_numbers = #tpu.dot_dimension_numbers<[2], [1], [1], [2], [0, 0, 0, 1, 1, 2], [0], [0]>} : vector<4x16x16xf32>, vector<4x16x8xf32>, vector<4x16x8xf32> -> vector<4x16x8xf32>
    "tpu.trace_stop"() : () -> ()
    %59 = tpu.transpose %58, [1, 0, 2] : vector<4x16x8xf32> -> vector<16x4x8xf32>
    %60 = vector.shape_cast %59 : vector<16x4x8xf32> to vector<16x32xf32>
    %c0_21 = arith.constant 0 : index
    %c0_22 = arith.constant 0 : index
    %c0_23 = arith.constant 0 : index
    %61 = vector.load %arg3[%c0_21, %c0_22, %c0_23] : memref<2x32x32xf32, #tpu.memory_space<vmem>>, vector<1x32x32xf32>
    %62 = vector.shape_cast %61 : vector<1x32x32xf32> to vector<32x32xf32>
    %cst_24 = arith.constant dense<0.000000e+00> : vector<16x32xf32>
    %63 = tpu.matmul %60, %62, %cst_24 {dimension_numbers = #tpu.dot_dimension_numbers<[1], [0], [0], [1], [0, 0, 1, 1], [], []>} : vector<16x32xf32>, vector<32x32xf32>, vector<16x32xf32> -> vector<16x32xf32>
    %64 = arith.addf %0, %63 : vector<16x32xf32>
    %65 = vector.broadcast %8 : vector<1x32xf32> to vector<16x32xf32>
    %66 = arith.addf %64, %65 : vector<16x32xf32>
    %cst_25 = arith.constant dense<0.000000e+00> : vector<16xf32>
    %67 = vector.multi_reduction <add>, %66, %cst_25 [1] : vector<16x32xf32> to vector<16xf32>
    %68 = vector.shape_cast %67 : vector<16xf32> to vector<16x1xf32>
    %cst_26 = arith.constant 3.200000e+01 : f32
    %69 = vector.broadcast %cst_26 : f32 to vector<16x1xf32>
    %70 = arith.divf %68, %69 : vector<16x1xf32>
    %71 = vector.broadcast %70 : vector<16x1xf32> to vector<16x32xf32>
    %72 = arith.subf %66, %71 : vector<16x32xf32>
    %73 = arith.mulf %72, %72 : vector<16x32xf32>
    %cst_27 = arith.constant dense<0.000000e+00> : vector<16xf32>
    %74 = vector.multi_reduction <add>, %73, %cst_27 [1] : vector<16x32xf32> to vector<16xf32>
    %75 = vector.shape_cast %74 : vector<16xf32> to vector<16x1xf32>
    %cst_28 = arith.constant 3.200000e+01 : f32
    %76 = vector.broadcast %cst_28 : f32 to vector<16x1xf32>
    %77 = arith.divf %75, %76 : vector<16x1xf32>
    %78 = vector.broadcast %70 : vector<16x1xf32> to vector<16x32xf32>
    %79 = arith.subf %66, %78 : vector<16x32xf32>
    %cst_29 = arith.constant 9.99999974E-6 : f32
    %80 = vector.broadcast %cst_29 : f32 to vector<16x1xf32>
    %81 = arith.addf %77, %80 : vector<16x1xf32>
    %82 = math.rsqrt %81 : vector<16x1xf32>
    %83 = vector.broadcast %82 : vector<16x1xf32> to vector<16x32xf32>
    %84 = arith.mulf %79, %83 : vector<16x32xf32>
    %85 = vector.broadcast %6 : vector<1x32xf32> to vector<16x32xf32>
    %86 = arith.mulf %84, %85 : vector<16x32xf32>
    %87 = vector.broadcast %7 : vector<1x32xf32> to vector<16x32xf32>
    %88 = arith.addf %86, %87 : vector<16x32xf32>
    %c0_30 = arith.constant 0 : index
    %c0_31 = arith.constant 0 : index
    %c0_32 = arith.constant 0 : index
    %89 = vector.load %arg4[%c0_30, %c0_31, %c0_32] : memref<2x32x128xf32, #tpu.memory_space<vmem>>, vector<1x32x128xf32>
    %90 = vector.shape_cast %89 : vector<1x32x128xf32> to vector<32x128xf32>
    %cst_33 = arith.constant dense<0.000000e+00> : vector<16x128xf32>
    %91 = tpu.matmul %88, %90, %cst_33 {dimension_numbers = #tpu.dot_dimension_numbers<[1], [0], [0], [1], [0, 0, 1, 1], [], []>} : vector<16x32xf32>, vector<32x128xf32>, vector<16x128xf32> -> vector<16x128xf32>
    %c0_34 = arith.constant 0 : index
    %c0_35 = arith.constant 0 : index
    %c0_36 = arith.constant 0 : index
    %92 = vector.load %arg7[%c0_34, %c0_35, %c0_36] : memref<2x1x128xf32, #tpu.memory_space<vmem>>, vector<1x1x128xf32>
    %93 = vector.shape_cast %92 : vector<1x1x128xf32> to vector<1x128xf32>
    %94 = vector.broadcast %93 : vector<1x128xf32> to vector<16x128xf32>
    %95 = arith.addf %91, %94 : vector<16x128xf32>
    %cst_37 = arith.constant 5.000000e-01 : f32
    %96 = vector.broadcast %cst_37 : f32 to vector<16x128xf32>
    %97 = arith.mulf %96, %95 : vector<16x128xf32>
    %98 = arith.mulf %95, %95 : vector<16x128xf32>
    %99 = arith.mulf %95, %98 : vector<16x128xf32>
    %cst_38 = arith.constant 4.471500e-02 : f32
    %100 = vector.broadcast %cst_38 : f32 to vector<16x128xf32>
    %101 = arith.mulf %100, %99 : vector<16x128xf32>
    %102 = arith.addf %95, %101 : vector<16x128xf32>
    %cst_39 = arith.constant 0.797884583 : f32
    %103 = vector.broadcast %cst_39 : f32 to vector<16x128xf32>
    %104 = arith.mulf %103, %102 : vector<16x128xf32>
    %105 = math.tanh %104 : vector<16x128xf32>
    %cst_40 = arith.constant 1.000000e+00 : f32
    %106 = vector.broadcast %cst_40 : f32 to vector<16x128xf32>
    %107 = arith.addf %106, %105 : vector<16x128xf32>
    %108 = arith.mulf %97, %107 : vector<16x128xf32>
    %c0_41 = arith.constant 0 : index
    %c0_42 = arith.constant 0 : index
    %c0_43 = arith.constant 0 : index
    %109 = vector.load %arg5[%c0_41, %c0_42, %c0_43] : memref<2x128x32xf32, #tpu.memory_space<vmem>>, vector<1x128x32xf32>
    %110 = vector.shape_cast %109 : vector<1x128x32xf32> to vector<128x32xf32>
    %cst_44 = arith.constant dense<0.000000e+00> : vector<16x32xf32>
    %111 = tpu.matmul %108, %110, %cst_44 {dimension_numbers = #tpu.dot_dimension_numbers<[1], [0], [0], [1], [0, 0, 1, 1], [], []>} : vector<16x128xf32>, vector<128x32xf32>, vector<16x32xf32> -> vector<16x32xf32>
    %112 = arith.addf %66, %111 : vector<16x32xf32>
    %113 = vector.broadcast %9 : vector<1x32xf32> to vector<16x32xf32>
    %114 = arith.addf %112, %113 : vector<16x32xf32>
    %c1 = arith.constant 1 : index
    %c0_45 = arith.constant 0 : index
    %c0_46 = arith.constant 0 : index
    %115 = vector.load %arg8[%c1, %c0_45, %c0_46] : memref<2x6x32xf32, #tpu.memory_space<vmem>>, vector<1x6x32xf32>
    %116 = vector.shape_cast %115 : vector<1x6x32xf32> to vector<6x32xf32>
    %117 = vector.extract_strided_slice %116 {offsets = [0, 0], sizes = [1, 32], strides = [1, 1]} : vector<6x32xf32> to vector<1x32xf32>
    %118 = vector.extract_strided_slice %116 {offsets = [1, 0], sizes = [1, 32], strides = [1, 1]} : vector<6x32xf32> to vector<1x32xf32>
    %119 = vector.extract_strided_slice %116 {offsets = [2, 0], sizes = [1, 32], strides = [1, 1]} : vector<6x32xf32> to vector<1x32xf32>
    %120 = vector.extract_strided_slice %116 {offsets = [3, 0], sizes = [1, 32], strides = [1, 1]} : vector<6x32xf32> to vector<1x32xf32>
    %121 = vector.extract_strided_slice %116 {offsets = [4, 0], sizes = [1, 32], strides = [1, 1]} : vector<6x32xf32> to vector<1x32xf32>
    %122 = vector.extract_strided_slice %116 {offsets = [5, 0], sizes = [1, 32], strides = [1, 1]} : vector<6x32xf32> to vector<1x32xf32>
    %cst_47 = arith.constant dense<0.000000e+00> : vector<16xf32>
    %123 = vector.multi_reduction <add>, %114, %cst_47 [1] : vector<16x32xf32> to vector<16xf32>
    %124 = vector.shape_cast %123 : vector<16xf32> to vector<16x1xf32>
    %cst_48 = arith.constant 3.200000e+01 : f32
    %125 = vector.broadcast %cst_48 : f32 to vector<16x1xf32>
    %126 = arith.divf %124, %125 : vector<16x1xf32>
    %127 = vector.broadcast %126 : vector<16x1xf32> to vector<16x32xf32>
    %128 = arith.subf %114, %127 : vector<16x32xf32>
    %129 = arith.mulf %128, %128 : vector<16x32xf32>
    %cst_49 = arith.constant dense<0.000000e+00> : vector<16xf32>
    %130 = vector.multi_reduction <add>, %129, %cst_49 [1] : vector<16x32xf32> to vector<16xf32>
    %131 = vector.shape_cast %130 : vector<16xf32> to vector<16x1xf32>
    %cst_50 = arith.constant 3.200000e+01 : f32
    %132 = vector.broadcast %cst_50 : f32 to vector<16x1xf32>
    %133 = arith.divf %131, %132 : vector<16x1xf32>
    %134 = vector.broadcast %126 : vector<16x1xf32> to vector<16x32xf32>
    %135 = arith.subf %114, %134 : vector<16x32xf32>
    %cst_51 = arith.constant 9.99999974E-6 : f32
    %136 = vector.broadcast %cst_51 : f32 to vector<16x1xf32>
    %137 = arith.addf %133, %136 : vector<16x1xf32>
    %138 = math.rsqrt %137 : vector<16x1xf32>
    %139 = vector.broadcast %138 : vector<16x1xf32> to vector<16x32xf32>
    %140 = arith.mulf %135, %139 : vector<16x32xf32>
    %141 = vector.broadcast %117 : vector<1x32xf32> to vector<16x32xf32>
    %142 = arith.mulf %140, %141 : vector<16x32xf32>
    %143 = vector.broadcast %118 : vector<1x32xf32> to vector<16x32xf32>
    %144 = arith.addf %142, %143 : vector<16x32xf32>
    %c1_52 = arith.constant 1 : index
    %c0_53 = arith.constant 0 : index
    %c0_54 = arith.constant 0 : index
    %145 = vector.load %arg2[%c1_52, %c0_53, %c0_54] : memref<2x32x96xf32, #tpu.memory_space<vmem>>, vector<1x32x96xf32>
    %146 = vector.shape_cast %145 : vector<1x32x96xf32> to vector<32x96xf32>
    %cst_55 = arith.constant dense<0.000000e+00> : vector<16x96xf32>
    %147 = tpu.matmul %144, %146, %cst_55 {dimension_numbers = #tpu.dot_dimension_numbers<[1], [0], [0], [1], [0, 0, 1, 1], [], []>} : vector<16x32xf32>, vector<32x96xf32>, vector<16x96xf32> -> vector<16x96xf32>
    %c1_56 = arith.constant 1 : index
    %c0_57 = arith.constant 0 : index
    %c0_58 = arith.constant 0 : index
    %148 = vector.load %arg6[%c1_56, %c0_57, %c0_58] : memref<2x1x96xf32, #tpu.memory_space<vmem>>, vector<1x1x96xf32>
    %149 = vector.shape_cast %148 : vector<1x1x96xf32> to vector<1x96xf32>
    %150 = vector.broadcast %149 : vector<1x96xf32> to vector<16x96xf32>
    %151 = arith.addf %147, %150 : vector<16x96xf32>
    %152 = vector.shape_cast %151 : vector<16x96xf32> to vector<16x12x8xf32>
    %153 = tpu.transpose %152, [1, 0, 2] : vector<16x12x8xf32> -> vector<12x16x8xf32>
    %154 = vector.extract_strided_slice %153 {offsets = [0, 0, 0], sizes = [4, 16, 8], strides = [1, 1, 1]} : vector<12x16x8xf32> to vector<4x16x8xf32>
    %155 = vector.extract_strided_slice %153 {offsets = [4, 0, 0], sizes = [4, 16, 8], strides = [1, 1, 1]} : vector<12x16x8xf32> to vector<4x16x8xf32>
    %156 = vector.extract_strided_slice %153 {offsets = [8, 0, 0], sizes = [4, 16, 8], strides = [1, 1, 1]} : vector<12x16x8xf32> to vector<4x16x8xf32>
    "tpu.trace_start"() <{level = 10 : i32, message = "hqd,hkd->hqk"}> : () -> ()
    %cst_59 = arith.constant dense<0.000000e+00> : vector<4x16x16xf32>
    %157 = tpu.matmul %154, %155, %cst_59 {dimension_numbers = #tpu.dot_dimension_numbers<[2], [2], [1], [1], [0, 0, 0, 1, 1, 1], [0], [0]>} : vector<4x16x8xf32>, vector<4x16x8xf32>, vector<4x16x16xf32> -> vector<4x16x16xf32>
    "tpu.trace_stop"() : () -> ()
    %158 = vector.shape_cast %1 : vector<16x16xf32> to vector<1x16x16xf32>
    %159 = vector.broadcast %158 : vector<1x16x16xf32> to vector<4x16x16xf32>
    %160 = arith.addf %157, %159 : vector<4x16x16xf32>
    %cst_60 = arith.constant dense<0xFF800000> : vector<4x16xf32>
    %161 = vector.multi_reduction <maximumf>, %160, %cst_60 [2] : vector<4x16x16xf32> to vector<4x16xf32>
    %162 = vector.shape_cast %161 : vector<4x16xf32> to vector<4x16x1xf32>
    %163 = vector.broadcast %162 : vector<4x16x1xf32> to vector<4x16x16xf32>
    %164 = arith.subf %160, %163 : vector<4x16x16xf32>
    %165 = math.exp %164 : vector<4x16x16xf32>
    %cst_61 = arith.constant dense<0.000000e+00> : vector<4x16xf32>
    %166 = vector.multi_reduction <add>, %165, %cst_61 [2] : vector<4x16x16xf32> to vector<4x16xf32>
    %167 = vector.shape_cast %166 : vector<4x16xf32> to vector<4x16x1xf32>
    %168 = tpu.reciprocal %167 {approx = true} : vector<4x16x1xf32> -> vector<4x16x1xf32>
    %169 = vector.broadcast %168 : vector<4x16x1xf32> to vector<4x16x16xf32>
    %170 = arith.mulf %165, %169 : vector<4x16x16xf32>
    "tpu.trace_start"() <{level = 10 : i32, message = "hqk,hkd->hqd"}> : () -> ()
    %cst_62 = arith.constant dense<0.000000e+00> : vector<4x16x8xf32>
    %171 = tpu.matmul %170, %156, %cst_62 {dimension_numbers = #tpu.dot_dimension_numbers<[2], [1], [1], [2], [0, 0, 0, 1, 1, 2], [0], [0]>} : vector<4x16x16xf32>, vector<4x16x8xf32>, vector<4x16x8xf32> -> vector<4x16x8xf32>
    "tpu.trace_stop"() : () -> ()
    %172 = tpu.transpose %171, [1, 0, 2] : vector<4x16x8xf32> -> vector<16x4x8xf32>
    %173 = vector.shape_cast %172 : vector<16x4x8xf32> to vector<16x32xf32>
    %c1_63 = arith.constant 1 : index
    %c0_64 = arith.constant 0 : index
    %c0_65 = arith.constant 0 : index
    %174 = vector.load %arg3[%c1_63, %c0_64, %c0_65] : memref<2x32x32xf32, #tpu.memory_space<vmem>>, vector<1x32x32xf32>
    %175 = vector.shape_cast %174 : vector<1x32x32xf32> to vector<32x32xf32>
    %cst_66 = arith.constant dense<0.000000e+00> : vector<16x32xf32>
    %176 = tpu.matmul %173, %175, %cst_66 {dimension_numbers = #tpu.dot_dimension_numbers<[1], [0], [0], [1], [0, 0, 1, 1], [], []>} : vector<16x32xf32>, vector<32x32xf32>, vector<16x32xf32> -> vector<16x32xf32>
    %177 = arith.addf %114, %176 : vector<16x32xf32>
    %178 = vector.broadcast %121 : vector<1x32xf32> to vector<16x32xf32>
    %179 = arith.addf %177, %178 : vector<16x32xf32>
    %cst_67 = arith.constant dense<0.000000e+00> : vector<16xf32>
    %180 = vector.multi_reduction <add>, %179, %cst_67 [1] : vector<16x32xf32> to vector<16xf32>
    %181 = vector.shape_cast %180 : vector<16xf32> to vector<16x1xf32>
    %cst_68 = arith.constant 3.200000e+01 : f32
    %182 = vector.broadcast %cst_68 : f32 to vector<16x1xf32>
    %183 = arith.divf %181, %182 : vector<16x1xf32>
    %184 = vector.broadcast %183 : vector<16x1xf32> to vector<16x32xf32>
    %185 = arith.subf %179, %184 : vector<16x32xf32>
    %186 = arith.mulf %185, %185 : vector<16x32xf32>
    %cst_69 = arith.constant dense<0.000000e+00> : vector<16xf32>
    %187 = vector.multi_reduction <add>, %186, %cst_69 [1] : vector<16x32xf32> to vector<16xf32>
    %188 = vector.shape_cast %187 : vector<16xf32> to vector<16x1xf32>
    %cst_70 = arith.constant 3.200000e+01 : f32
    %189 = vector.broadcast %cst_70 : f32 to vector<16x1xf32>
    %190 = arith.divf %188, %189 : vector<16x1xf32>
    %191 = vector.broadcast %183 : vector<16x1xf32> to vector<16x32xf32>
    %192 = arith.subf %179, %191 : vector<16x32xf32>
    %cst_71 = arith.constant 9.99999974E-6 : f32
    %193 = vector.broadcast %cst_71 : f32 to vector<16x1xf32>
    %194 = arith.addf %190, %193 : vector<16x1xf32>
    %195 = math.rsqrt %194 : vector<16x1xf32>
    %196 = vector.broadcast %195 : vector<16x1xf32> to vector<16x32xf32>
    %197 = arith.mulf %192, %196 : vector<16x32xf32>
    %198 = vector.broadcast %119 : vector<1x32xf32> to vector<16x32xf32>
    %199 = arith.mulf %197, %198 : vector<16x32xf32>
    %200 = vector.broadcast %120 : vector<1x32xf32> to vector<16x32xf32>
    %201 = arith.addf %199, %200 : vector<16x32xf32>
    %c1_72 = arith.constant 1 : index
    %c0_73 = arith.constant 0 : index
    %c0_74 = arith.constant 0 : index
    %202 = vector.load %arg4[%c1_72, %c0_73, %c0_74] : memref<2x32x128xf32, #tpu.memory_space<vmem>>, vector<1x32x128xf32>
    %203 = vector.shape_cast %202 : vector<1x32x128xf32> to vector<32x128xf32>
    %cst_75 = arith.constant dense<0.000000e+00> : vector<16x128xf32>
    %204 = tpu.matmul %201, %203, %cst_75 {dimension_numbers = #tpu.dot_dimension_numbers<[1], [0], [0], [1], [0, 0, 1, 1], [], []>} : vector<16x32xf32>, vector<32x128xf32>, vector<16x128xf32> -> vector<16x128xf32>
    %c1_76 = arith.constant 1 : index
    %c0_77 = arith.constant 0 : index
    %c0_78 = arith.constant 0 : index
    %205 = vector.load %arg7[%c1_76, %c0_77, %c0_78] : memref<2x1x128xf32, #tpu.memory_space<vmem>>, vector<1x1x128xf32>
    %206 = vector.shape_cast %205 : vector<1x1x128xf32> to vector<1x128xf32>
    %207 = vector.broadcast %206 : vector<1x128xf32> to vector<16x128xf32>
    %208 = arith.addf %204, %207 : vector<16x128xf32>
    %cst_79 = arith.constant 5.000000e-01 : f32
    %209 = vector.broadcast %cst_79 : f32 to vector<16x128xf32>
    %210 = arith.mulf %209, %208 : vector<16x128xf32>
    %211 = arith.mulf %208, %208 : vector<16x128xf32>
    %212 = arith.mulf %208, %211 : vector<16x128xf32>
    %cst_80 = arith.constant 4.471500e-02 : f32
    %213 = vector.broadcast %cst_80 : f32 to vector<16x128xf32>
    %214 = arith.mulf %213, %212 : vector<16x128xf32>
    %215 = arith.addf %208, %214 : vector<16x128xf32>
    %cst_81 = arith.constant 0.797884583 : f32
    %216 = vector.broadcast %cst_81 : f32 to vector<16x128xf32>
    %217 = arith.mulf %216, %215 : vector<16x128xf32>
    %218 = math.tanh %217 : vector<16x128xf32>
    %cst_82 = arith.constant 1.000000e+00 : f32
    %219 = vector.broadcast %cst_82 : f32 to vector<16x128xf32>
    %220 = arith.addf %219, %218 : vector<16x128xf32>
    %221 = arith.mulf %210, %220 : vector<16x128xf32>
    %c1_83 = arith.constant 1 : index
    %c0_84 = arith.constant 0 : index
    %c0_85 = arith.constant 0 : index
    %222 = vector.load %arg5[%c1_83, %c0_84, %c0_85] : memref<2x128x32xf32, #tpu.memory_space<vmem>>, vector<1x128x32xf32>
    %223 = vector.shape_cast %222 : vector<1x128x32xf32> to vector<128x32xf32>
    %cst_86 = arith.constant dense<0.000000e+00> : vector<16x32xf32>
    %224 = tpu.matmul %221, %223, %cst_86 {dimension_numbers = #tpu.dot_dimension_numbers<[1], [0], [0], [1], [0, 0, 1, 1], [], []>} : vector<16x128xf32>, vector<128x32xf32>, vector<16x32xf32> -> vector<16x32xf32>
    %225 = arith.addf %179, %224 : vector<16x32xf32>
    %226 = vector.broadcast %122 : vector<1x32xf32> to vector<16x32xf32>
    %227 = arith.addf %225, %226 : vector<16x32xf32>
    %c0_87 = arith.constant 0 : index
    %c0_88 = arith.constant 0 : index
    %228 = vector.load %arg9[%c0_87, %c0_88] : memref<2x32xf32, #tpu.memory_space<vmem>>, vector<2x32xf32>
    %229 = vector.extract_strided_slice %227 {offsets = [7, 0], sizes = [1, 32], strides = [1, 1]} : vector<16x32xf32> to vector<1x32xf32>
    %230 = vector.extract_strided_slice %227 {offsets = [15, 0], sizes = [1, 32], strides = [1, 1]} : vector<16x32xf32> to vector<1x32xf32>
    %231 = tpu.concatenate %229, %230 in 0 : vector<1x32xf32>, vector<1x32xf32> -> vector<2x32xf32>
    %232 = vector.extract_strided_slice %228 {offsets = [0, 0], sizes = [1, 32], strides = [1, 1]} : vector<2x32xf32> to vector<1x32xf32>
    %233 = vector.extract_strided_slice %228 {offsets = [1, 0], sizes = [1, 32], strides = [1, 1]} : vector<2x32xf32> to vector<1x32xf32>
    %cst_89 = arith.constant dense<0.000000e+00> : vector<2xf32>
    %234 = vector.multi_reduction <add>, %231, %cst_89 [1] : vector<2x32xf32> to vector<2xf32>
    %235 = vector.shape_cast %234 : vector<2xf32> to vector<2x1xf32>
    %cst_90 = arith.constant 3.200000e+01 : f32
    %236 = vector.broadcast %cst_90 : f32 to vector<2x1xf32>
    %237 = arith.divf %235, %236 : vector<2x1xf32>
    %238 = vector.broadcast %237 : vector<2x1xf32> to vector<2x32xf32>
    %239 = arith.subf %231, %238 : vector<2x32xf32>
    %240 = arith.mulf %239, %239 : vector<2x32xf32>
    %cst_91 = arith.constant dense<0.000000e+00> : vector<2xf32>
    %241 = vector.multi_reduction <add>, %240, %cst_91 [1] : vector<2x32xf32> to vector<2xf32>
    %242 = vector.shape_cast %241 : vector<2xf32> to vector<2x1xf32>
    %cst_92 = arith.constant 3.200000e+01 : f32
    %243 = vector.broadcast %cst_92 : f32 to vector<2x1xf32>
    %244 = arith.divf %242, %243 : vector<2x1xf32>
    %245 = vector.broadcast %237 : vector<2x1xf32> to vector<2x32xf32>
    %246 = arith.subf %231, %245 : vector<2x32xf32>
    %cst_93 = arith.constant 9.99999974E-6 : f32
    %247 = vector.broadcast %cst_93 : f32 to vector<2x1xf32>
    %248 = arith.addf %244, %247 : vector<2x1xf32>
    %249 = math.rsqrt %248 : vector<2x1xf32>
    %250 = vector.broadcast %249 : vector<2x1xf32> to vector<2x32xf32>
    %251 = arith.mulf %246, %250 : vector<2x32xf32>
    %252 = vector.broadcast %232 : vector<1x32xf32> to vector<2x32xf32>
    %253 = arith.mulf %251, %252 : vector<2x32xf32>
    %254 = vector.broadcast %233 : vector<1x32xf32> to vector<2x32xf32>
    %255 = arith.addf %253, %254 : vector<2x32xf32>
    %c0_94 = arith.constant 0 : index
    %c0_95 = arith.constant 0 : index
    %256 = vector.load %arg10[%c0_94, %c0_95] : memref<32x128xf32, #tpu.memory_space<vmem>>, vector<32x128xf32>
    %cst_96 = arith.constant dense<0.000000e+00> : vector<2x128xf32>
    %257 = tpu.matmul %255, %256, %cst_96 {dimension_numbers = #tpu.dot_dimension_numbers<[1], [0], [0], [1], [0, 0, 1, 1], [], []>} : vector<2x32xf32>, vector<32x128xf32>, vector<2x128xf32> -> vector<2x128xf32>
    %c0_97 = arith.constant 0 : index
    %c0_98 = arith.constant 0 : index
    %258 = vector.load %arg11[%c0_97, %c0_98] : memref<1x128xf32, #tpu.memory_space<vmem>>, vector<1x128xf32>
    %259 = vector.broadcast %258 : vector<1x128xf32> to vector<2x128xf32>
    %260 = arith.addf %257, %259 : vector<2x128xf32>
    %c0_99 = arith.constant 0 : index
    %c0_100 = arith.constant 0 : index
    %261 = vector.load %arg12[%c0_99, %c0_100] : memref<2x128xf32, #tpu.memory_space<vmem>>, vector<2x128xf32>
    tpu.vector_store %arg12[%c0_99, %c0_100], %260 {strides = array<i32>} : memref<2x128xf32, #tpu.memory_space<vmem>>, vector<2x128xf32>,
    return
  }
}

</mosaic_0001>

<llo_original>
// kernel: tpu_custom_call.1
$region0: #{tpu_custom_call.1}
  #allocation0 [shape = 'u32[]', space=smem, size = 0x4, offset = 0x4, fixed_abs, tag = 'smem constant byte address 0x4 - core index']
  #allocation1 [shape = 'u32[144,128]{1,0:T(1,128)}', space=vmem, size = 0x12000, scoped, tag = 'internal scratch']
  %s0 = inlined_call_operand.vmem [shape: f32[16,32], index: 0, kind: input, shape index: {}]
  %s1 = inlined_call_operand.vmem [shape: f32[16,16], index: 1, kind: input, shape index: {}]
  %s2 = inlined_call_operand.vmem [shape: f32[2,32,96], index: 2, kind: input, shape index: {}]
  %s3 = inlined_call_operand.vmem [shape: f32[2,32,32], index: 3, kind: input, shape index: {}]
  %s4 = inlined_call_operand.vmem [shape: f32[2,32,128], index: 4, kind: input, shape index: {}]
  %s5 = inlined_call_operand.vmem [shape: f32[2,128,32], index: 5, kind: input, shape index: {}]
  %s6 = inlined_call_operand.vmem [shape: f32[2,1,96], index: 6, kind: input, shape index: {}]
  %s7 = inlined_call_operand.vmem [shape: f32[2,1,128], index: 7, kind: input, shape index: {}]
  %s8 = inlined_call_operand.vmem [shape: f32[2,6,32], index: 8, kind: input, shape index: {}]
  %s9 = inlined_call_operand.vmem [shape: f32[2,32], index: 9, kind: input, shape index: {}]
  %s10 = inlined_call_operand.vmem [shape: f32[32,128], index: 10, kind: input, shape index: {}]
  %s11 = inlined_call_operand.vmem [shape: f32[1,128], index: 11, kind: input, shape index: {}]
  %s12 = inlined_call_operand.hbm [shape: f32[2,128], index: 12, kind: output, shape index: {}]
  %s13 = sld [smem:[#allocation0]]
  $region58: #{tpu_custom_call.1} parent=0
    _
  %s15 = ssub.s32 1, %s13
  %s16 = scalar_select 0, %s15, %s13
  $region1: #{tpu_custom_call.1} parent=0
    #allocation2 [shape = 'u8[1024]{0}', space=vmem, size = 0x400, scoped, tag = 'output window, operand 0, single buffered']
    #allocation3 [shape = 's32[1]{0}', space=sflag, size = 0x4, scoped, tag = 'scoped memory for tpu_custom_call.1']
    %17 = vsyncpa [#allocation3], 0
    // Predicated region
    $region2: #{tpu_custom_call.1} parent=1 // pred_check
      _
    $region3: #{tpu_custom_call.1} parent=1 // pred_check_branch
      %19 = sbr.rel (0) target = $region5
    $region4: #{tpu_custom_call.1} parent=1 // pred_region
      _
    $region5: #{tpu_custom_call.1} parent=1 // pred_fallthru
      _
    // Predicated region
    $region6: #{tpu_custom_call.1} parent=1 // pred_check
      _
    $region7: #{tpu_custom_call.1} parent=1 // pred_check_branch
      %21 = sbr.rel (0) target = $region9
    $region8: #{tpu_custom_call.1} parent=1 // pred_region
      _
    $region9: #{tpu_custom_call.1} parent=1 // pred_fallthru
      _
    // Predicated region
    $region10: #{tpu_custom_call.1} parent=1 // pred_check
      _
    $region11: #{tpu_custom_call.1} parent=1 // pred_check_branch
      %23 = sbr.rel (0) target = $region13
    $region12: #{tpu_custom_call.1} parent=1 // pred_region
      _
    $region13: #{tpu_custom_call.1} parent=1 // pred_fallthru
      _
    // Predicated region
    $region14: #{tpu_custom_call.1} parent=1 // pred_check
      _
    $region15: #{tpu_custom_call.1} parent=1 // pred_check_branch
      %25 = sbr.rel (0) target = $region17
    $region16: #{tpu_custom_call.1} parent=1 // pred_region
      _
    $region17: #{tpu_custom_call.1} parent=1 // pred_fallthru
      _
    // Predicated region
    $region18: #{tpu_custom_call.1} parent=1 // pred_check
      _
    $region19: #{tpu_custom_call.1} parent=1 // pred_check_branch
      %27 = sbr.rel (0) target = $region21
    $region20: #{tpu_custom_call.1} parent=1 // pred_region
      _
    $region21: #{tpu_custom_call.1} parent=1 // pred_fallthru
      _
    // Predicated region
    $region22: #{tpu_custom_call.1} parent=1 // pred_check
      _
    $region23: #{tpu_custom_call.1} parent=1 // pred_check_branch
      %29 = sbr.rel (0) target = $region25
    $region24: #{tpu_custom_call.1} parent=1 // pred_region
      _
    $region25: #{tpu_custom_call.1} parent=1 // pred_fallthru
      _
    // Predicated region
    $region26: #{tpu_custom_call.1} parent=1 // pred_check
      _
    $region27: #{tpu_custom_call.1} parent=1 // pred_check_branch
      %31 = sbr.rel (0) target = $region29
    $region28: #{tpu_custom_call.1} parent=1 // pred_region
      _
    $region29: #{tpu_custom_call.1} parent=1 // pred_fallthru
      _
    // Predicated region
    $region30: #{tpu_custom_call.1} parent=1 // pred_check
      _
    $region31: #{tpu_custom_call.1} parent=1 // pred_check_branch
      %33 = sbr.rel (0) target = $region33
    $region32: #{tpu_custom_call.1} parent=1 // pred_region
      _
    $region33: #{tpu_custom_call.1} parent=1 // pred_fallthru
      _
    // Predicated region
    $region34: #{tpu_custom_call.1} parent=1 // pred_check
      _
    $region35: #{tpu_custom_call.1} parent=1 // pred_check_branch
      %35 = sbr.rel (0) target = $region37
    $region36: #{tpu_custom_call.1} parent=1 // pred_region
      _
    $region37: #{tpu_custom_call.1} parent=1 // pred_fallthru
      _
    // Predicated region
    $region38: #{tpu_custom_call.1} parent=1 // pred_check
      _
    $region39: #{tpu_custom_call.1} parent=1 // pred_check_branch
      %37 = sbr.rel (0) target = $region41
    $region40: #{tpu_custom_call.1} parent=1 // pred_region
      _
    $region41: #{tpu_custom_call.1} parent=1 // pred_fallthru
      _
    // Predicated region
    $region42: #{tpu_custom_call.1} parent=1 // pred_check
      _
    $region43: #{tpu_custom_call.1} parent=1 // pred_check_branch
      %39 = sbr.rel (0) target = $region45
    $region44: #{tpu_custom_call.1} parent=1 // pred_region
      _
    $region45: #{tpu_custom_call.1} parent=1 // pred_fallthru
      _
    // Predicated region
    $region46: #{tpu_custom_call.1} parent=1 // pred_check
      _
    $region47: #{tpu_custom_call.1} parent=1 // pred_check_branch
      %41 = sbr.rel (0) target = $region49
    $region48: #{tpu_custom_call.1} parent=1 // pred_region
      _
    $region49: #{tpu_custom_call.1} parent=1 // pred_fallthru
      _
    %v42 = vld [vmem:[%s0] sm:$0xff]
    %v43 = vld [vmem:[%s0 + $0x8] sm:$0xff]
    %v44 = vld [vmem:[%s1] sm:$0xff]
    %v45 = vld [vmem:[%s1 + $0x8] sm:$0xff]
    %v46 = vld [vmem:[%s8] sm:$0x3f]
    %vm47 = vcmask 261120
    %v48 = vsel %vm47, %v42, 0.0
    %49 = vadd.xlane.f32.xlu0 %v48
    %v50 = vpop.xlane.xlu0 %49
    %v51 = vsel %vm47, %v43, 0.0
    %52 = vadd.xlane.f32.xlu0 %v51
    %v53 = vpop.xlane.xlu0 %52
    %v54 = vrcp.pop 32.0
    %v55 = vmul.f32 %v50, %v54
    %v56 = vmul.f32 %v53, %v54
    %v57 = vsub.f32 %v42, %v55
    %v58 = vsub.f32 %v43, %v56
    %v59 = vmul.f32 %v57, %v57
    %v60 = vmul.f32 %v58, %v58
    %v61 = vsel %vm47, %v59, 0.0
    %62 = vadd.xlane.f32.xlu0 %v61
    %v63 = vpop.xlane.xlu0 %62
    %v64 = vsel %vm47, %v60, 0.0
    %65 = vadd.xlane.f32.xlu0 %v64
    %v66 = vpop.xlane.xlu0 %65
    %v67 = vmul.f32 %v63, %v54
    %v68 = vmul.f32 %v66, %v54
    %v69 = vadd.f32 %v67, 1e-05
    %v70 = vadd.f32 %v68, 1e-05
    %v71 = vrsqrt.pop %v69
    %v72 = vrsqrt.pop %v70
    %v73 = vmul.f32 %v57, %v71
    %v74 = vmul.f32 %v58, %v72
    %v75 = vlaneseq
    %v76 = vshrl.u32 %v75, 7
    %v77 = vsub.s32 0, %v76
    %v78 = vrot.slane %v46, %v77
    %v79 = vmul.f32 %v73, %v78
    %v80 = vmul.f32 %v74, %v78
    %v81 = vlaneseq
    %v82 = vshrl.u32 %v81, 7
    %v83 = vsub.s32 1, %v82
    %v84 = vrot.slane %v46, %v83
    %v85 = vadd.f32 %v79, %v84
    %v86 = vadd.f32 %v80, %v84
    %v87 = vld [vmem:[%s2] sm:$0xff]
    %v88 = vld [vmem:[%s2 + $0x8] sm:$0xff]
    %v89 = vld [vmem:[%s2 + $0x10] sm:$0xff]
    %v90 = vld [vmem:[%s2 + $0x18] sm:$0xff]
    %v91 = vld [vmem:[%s6] sm:$0x1]
    %v93 = vlaneseq
    %v94 = vshrl.u32 %v93, 7
    %v95 = vsub.s32 0, %v94
    %v96 = vrot.slane %v91, %v95
    %v99 = vsel %vm47, %v85, 0
    %v102 = vsel %vm47, %v86, 0
    %104 = vmatprep.subr.mxu0 0.0
    %105 = vmatpush1.msra.mxu0 0.0
    %106 = vmatprep.subr.mxu0 0.0
    %107 = vmatpush1.msra.mxu0 0.0
    %108 = vmatprep.subr.mxu0 0.0
    %109 = vmatpush1.msra.mxu0 0.0
    %110 = vmatprep.subr.mxu0 0.0
    %111 = vmatpush1.msra.mxu0 0.0
    %112 = vmatprep.subr.mxu0 0.0
    %113 = vmatpush1.msra.mxu0 0.0
    %114 = vmatprep.subr.mxu0 0.0
    %115 = vmatpush1.msra.mxu0 0.0
    %116 = vmatprep.subr.mxu0 0.0
    %117 = vmatpush1.msra.mxu0 0.0
    %118 = vmatprep.subr.mxu0 0.0
    %119 = vmatpush1.msra.mxu0 0.0
    %120 = vmatprep.subr.mxu0 0.0
    %121 = vmatpush1.msra.mxu0 0.0
    %122 = vmatprep.subr.mxu0 0.0
    %123 = vmatpush1.msra.mxu0 0.0
    %124 = vmatprep.subr.mxu0 0.0
    %125 = vmatpush1.msra.mxu0 0.0
    %126 = vmatprep.subr.mxu0 0.0
    %127 = vmatpush1.msra.mxu0 0.0
    %128 = vmatprep.subr.mxu0 0.0
    %129 = vmatpush1.msra.mxu0 %v90
    %130 = vmatprep.subr.mxu0 0.0
    %131 = vmatpush1.msra.mxu0 %v89
    %132 = vmatprep.subr.mxu0 0.0
    %133 = vmatpush1.msra.mxu0 %v88
    %134 = vmatprep.subr.mxu0 0.0
    %135 = vmatpush1.msra.mxu0 %v87
    %136 = vmatprep.subr.mxu0 0.0
    %137 = vmatpush2.msra.mxu0 0.0
    %138 = vmatprep.subr.mxu0 0.0
    %139 = vmatpush2.msra.mxu0 0.0
    %140 = vmatprep.subr.mxu0 0.0
    %141 = vmatpush2.msra.mxu0 0.0
    %142 = vmatprep.subr.mxu0 0.0
    %143 = vmatpush2.msra.mxu0 0.0
    %144 = vmatprep.subr.mxu0 0.0
    %145 = vmatpush2.msra.mxu0 0.0
    %146 = vmatprep.subr.mxu0 0.0
    %147 = vmatpush2.msra.mxu0 0.0
    %148 = vmatprep.subr.mxu0 0.0
    %149 = vmatpush2.msra.mxu0 0.0
    %150 = vmatprep.subr.mxu0 0.0
    %151 = vmatpush2.msra.mxu0 0.0
    %152 = vmatprep.subr.mxu0 0.0
    %153 = vmatpush2.msra.mxu0 0.0
    %154 = vmatprep.subr.mxu0 0.0
    %155 = vmatpush2.msra.mxu0 0.0
    %156 = vmatprep.subr.mxu0 0.0
    %157 = vmatpush2.msra.mxu0 0.0
    %158 = vmatprep.subr.mxu0 0.0
    %159 = vmatpush2.msra.mxu0 0.0
    %160 = vmatprep.subr.mxu0 0.0
    %161 = vmatpush2.msra.mxu0 0.0
    %162 = vmatprep.subr.mxu0 0.0
    %163 = vmatpush2.msra.mxu0 0.0
    %164 = vmatprep.subr.mxu0 0.0
    %165 = vmatpush2.msra.mxu0 0.0
    %166 = vmatprep.subr.mxu0 0.0
    %167 = vmatpush2.msra.mxu0 0.0
    %168 = vmatprep.mubr.f32.mxu0 0.0
    %169 = vmatmul.mubr.f32.gmra.mxu0 %v99
    %v170 = vpop.f32.mrf.mxu0
    %v171 = vadd.f32 %v96, %v170
    %v172 = vpop.f32.mrf.mxu0
    %173 = vmatprep.mubr.f32.mxu0 0.0
    %174 = vmatmul.mubr.f32.gmra.mxu0 %v102
    %v175 = vpop.f32.mrf.mxu0
    %v176 = vadd.f32 %v96, %v175
    %v177 = vpop.f32.mrf.mxu0
    %178 = vdwg.mxu0
    %181 = vrot.lane.b32.xlu0 %v171, 120
    %v182 = vpop.permute.xlu0 %181
    %183 = vrot.lane.b32.xlu0 %v176, 120
    %v184 = vpop.permute.xlu0 %183
    %187 = vrot.lane.b32.xlu0 %v171, 112
    %v188 = vpop.permute.xlu0 %187
    %189 = vrot.lane.b32.xlu0 %v176, 112
    %v190 = vpop.permute.xlu0 %189
    %193 = vrot.lane.b32.xlu0 %v171, 104
    %v194 = vpop.permute.xlu0 %193
    %195 = vrot.lane.b32.xlu0 %v176, 104
    %v196 = vpop.permute.xlu0 %195
    %199 = vrot.lane.b32.xlu0 %v171, 96
    %v200 = vpop.permute.xlu0 %199
    %201 = vrot.lane.b32.xlu0 %v176, 96
    %v202 = vpop.permute.xlu0 %201
    %205 = vrot.lane.b32.xlu0 %v171, 88
    %v206 = vpop.permute.xlu0 %205
    %207 = vrot.lane.b32.xlu0 %v176, 88
    %v208 = vpop.permute.xlu0 %207
    %211 = vrot.lane.b32.xlu0 %v171, 80
    %v212 = vpop.permute.xlu0 %211
    %213 = vrot.lane.b32.xlu0 %v176, 80
    %v214 = vpop.permute.xlu0 %213
    %217 = vrot.lane.b32.xlu0 %v171, 72
    %v218 = vpop.permute.xlu0 %217
    %219 = vrot.lane.b32.xlu0 %v176, 72
    %v220 = vpop.permute.xlu0 %219
    %223 = vrot.lane.b32.xlu0 %v171, 64
    %v224 = vpop.permute.xlu0 %223
    %225 = vrot.lane.b32.xlu0 %v176, 64
    %v226 = vpop.permute.xlu0 %225
    %229 = vrot.lane.b32.xlu0 %v171, 56
    %v230 = vpop.permute.xlu0 %229
    %231 = vrot.lane.b32.xlu0 %v176, 56
    %v232 = vpop.permute.xlu0 %231
    %235 = vrot.lane.b32.xlu0 %v171, 48
    %v236 = vpop.permute.xlu0 %235
    %237 = vrot.lane.b32.xlu0 %v176, 48
    %v238 = vpop.permute.xlu0 %237
    %241 = vrot.lane.b32.xlu0 %v171, 40
    %v242 = vpop.permute.xlu0 %241
    %243 = vrot.lane.b32.xlu0 %v176, 40
    %v244 = vpop.permute.xlu0 %243
    %v247 = vcombine.low %v171, %v188
    %v248 = vcombine.high %v171, %v188
    %v250 = vunpack.c.l.s4 1983009808
    %v251 = vunpack.c.0.s8 %v250
    %v252 = vlaneseq
    %v253 = vshrl.u32 %v252, 7
    %v254 = vsub.s32 %v251, %v253
    %v255 = vrot.slane %v247, %v254
    %v257 = vunpack.c.l.s4 1983009808
    %v258 = vunpack.c.0.s8 %v257
    %v259 = vlaneseq
    %v260 = vshrl.u32 %v259, 7
    %v261 = vsub.s32 %v258, %v260
    %v262 = vrot.slane %v248, %v261
    %v263 = vcombine.low %v182, %v194
    %v264 = vcombine.high %v182, %v194
    %v266 = vunpack.c.l.s4 1983009808
    %v267 = vunpack.c.0.s8 %v266
    %v268 = vlaneseq
    %v269 = vshrl.u32 %v268, 7
    %v270 = vsub.s32 %v267, %v269
    %v271 = vrot.slane %v263, %v270
    %v273 = vunpack.c.l.s4 1983009808
    %v274 = vunpack.c.0.s8 %v273
    %v275 = vlaneseq
    %v276 = vshrl.u32 %v275, 7
    %v277 = vsub.s32 %v274, %v276
    %v278 = vrot.slane %v264, %v277
    %v279 = vcombine.low %v200, %v212
    %v280 = vcombine.high %v200, %v212
    %v282 = vunpack.c.l.s4 1983009808
    %v283 = vunpack.c.0.s8 %v282
    %v284 = vlaneseq
    %v285 = vshrl.u32 %v284, 7
    %v286 = vsub.s32 %v283, %v285
    %v287 = vrot.slane %v279, %v286
    %v289 = vunpack.c.l.s4 1983009808
    %v290 = vunpack.c.0.s8 %v289
    %v291 = vlaneseq
    %v292 = vshrl.u32 %v291, 7
    %v293 = vsub.s32 %v290, %v292
    %v294 = vrot.slane %v280, %v293
    %v295 = vcombine.low %v206, %v218
    %v296 = vcombine.high %v206, %v218
    %v298 = vunpack.c.l.s4 1983009808
    %v299 = vunpack.c.0.s8 %v298
    %v300 = vlaneseq
    %v301 = vshrl.u32 %v300, 7
    %v302 = vsub.s32 %v299, %v301
    %v303 = vrot.slane %v295, %v302
    %v305 = vunpack.c.l.s4 1983009808
    %v306 = vunpack.c.0.s8 %v305
    %v307 = vlaneseq
    %v308 = vshrl.u32 %v307, 7
    %v309 = vsub.s32 %v306, %v308
    %v310 = vrot.slane %v296, %v309
    %v311 = vcombine.low %v255, %v271
    %v312 = vcombine.high %v255, %v271
    %v314 = vunpack.c.l.s4 1934713408
    %v315 = vunpack.c.0.s8 %v314
    %v316 = vlaneseq
    %v317 = vshrl.u32 %v316, 7
    %v318 = vsub.s32 %v315, %v317
    %v319 = vrot.slane %v311, %v318
    %v321 = vunpack.c.l.s4 1934713408
    %v322 = vunpack.c.0.s8 %v321
    %v323 = vlaneseq
    %v324 = vshrl.u32 %v323, 7
    %v325 = vsub.s32 %v322, %v324
    %v326 = vrot.slane %v312, %v325
    %v327 = vcombine.low %v262, %v278
    %v328 = vcombine.high %v262, %v278
    %v330 = vunpack.c.l.s4 1934713408
    %v331 = vunpack.c.0.s8 %v330
    %v332 = vlaneseq
    %v333 = vshrl.u32 %v332, 7
    %v334 = vsub.s32 %v331, %v333
    %v335 = vrot.slane %v327, %v334
    %v337 = vunpack.c.l.s4 1934713408
    %v338 = vunpack.c.0.s8 %v337
    %v339 = vlaneseq
    %v340 = vshrl.u32 %v339, 7
    %v341 = vsub.s32 %v338, %v340
    %v342 = vrot.slane %v328, %v341
    %v343 = vcombine.low %v287, %v303
    %v344 = vcombine.high %v287, %v303
    %v346 = vunpack.c.l.s4 1934713408
    %v347 = vunpack.c.0.s8 %v346
    %v348 = vlaneseq
    %v349 = vshrl.u32 %v348, 7
    %v350 = vsub.s32 %v347, %v349
    %v351 = vrot.slane %v343, %v350
    %v353 = vunpack.c.l.s4 1934713408
    %v354 = vunpack.c.0.s8 %v353
    %v355 = vlaneseq
    %v356 = vshrl.u32 %v355, 7
    %v357 = vsub.s32 %v354, %v356
    %v358 = vrot.slane %v344, %v357
    %v359 = vcombine.low %v294, %v310
    %v360 = vcombine.high %v294, %v310
    %v362 = vunpack.c.l.s4 1934713408
    %v363 = vunpack.c.0.s8 %v362
    %v364 = vlaneseq
    %v365 = vshrl.u32 %v364, 7
    %v366 = vsub.s32 %v363, %v365
    %v367 = vrot.slane %v359, %v366
    %v369 = vunpack.c.l.s4 1934713408
    %v370 = vunpack.c.0.s8 %v369
    %v371 = vlaneseq
    %v372 = vshrl.u32 %v371, 7
    %v373 = vsub.s32 %v370, %v372
    %v374 = vrot.slane %v360, %v373
    %v375 = vcombine.low %v319, %v351
    %v376 = vcombine.high %v319, %v351
    %v377 = vcombine.low %v326, %v358
    %v378 = vcombine.high %v326, %v358
    %v379 = vcombine.low %v335, %v367
    %v380 = vcombine.high %v335, %v367
    %v381 = vcombine.low %v342, %v374
    %v382 = vcombine.high %v342, %v374
    %v383 = vcombine.low %v224, %v236
    %v384 = vcombine.high %v224, %v236
    %v386 = vunpack.c.l.s4 1983009808
    %v387 = vunpack.c.0.s8 %v386
    %v388 = vlaneseq
    %v389 = vshrl.u32 %v388, 7
    %v390 = vsub.s32 %v387, %v389
    %v391 = vrot.slane %v383, %v390
    %v393 = vunpack.c.l.s4 1983009808
    %v394 = vunpack.c.0.s8 %v393
    %v395 = vlaneseq
    %v396 = vshrl.u32 %v395, 7
    %v397 = vsub.s32 %v394, %v396
    %v398 = vrot.slane %v384, %v397
    %v399 = vcombine.low %v230, %v242
    %v400 = vcombine.high %v230, %v242
    %v402 = vunpack.c.l.s4 1983009808
    %v403 = vunpack.c.0.s8 %v402
    %v404 = vlaneseq
    %v405 = vshrl.u32 %v404, 7
    %v406 = vsub.s32 %v403, %v405
    %v407 = vrot.slane %v399, %v406
    %v409 = vunpack.c.l.s4 1983009808
    %v410 = vunpack.c.0.s8 %v409
    %v411 = vlaneseq
    %v412 = vshrl.u32 %v411, 7
    %v413 = vsub.s32 %v410, %v412
    %v414 = vrot.slane %v400, %v413
    %v415 = vcombine.low %v391, %v407
    %v416 = vcombine.high %v391, %v407
    %v418 = vunpack.c.l.s4 1934713408
    %v419 = vunpack.c.0.s8 %v418
    %v420 = vlaneseq
    %v421 = vshrl.u32 %v420, 7
    %v422 = vsub.s32 %v419, %v421
    %v423 = vrot.slane %v415, %v422
    %v425 = vunpack.c.l.s4 1934713408
    %v426 = vunpack.c.0.s8 %v425
    %v427 = vlaneseq
    %v428 = vshrl.u32 %v427, 7
    %v429 = vsub.s32 %v426, %v428
    %v430 = vrot.slane %v416, %v429
    %v431 = vcombine.low %v398, %v414
    %v432 = vcombine.high %v398, %v414
    %v434 = vunpack.c.l.s4 1934713408
    %v435 = vunpack.c.0.s8 %v434
    %v436 = vlaneseq
    %v437 = vshrl.u32 %v436, 7
    %v438 = vsub.s32 %v435, %v437
    %v439 = vrot.slane %v431, %v438
    %v441 = vunpack.c.l.s4 1934713408
    %v442 = vunpack.c.0.s8 %v441
    %v443 = vlaneseq
    %v444 = vshrl.u32 %v443, 7
    %v445 = vsub.s32 %v442, %v444
    %v446 = vrot.slane %v432, %v445
    %v447 = vcombine.high %v423, 0.0
    %v448 = vcombine.high %v430, 0.0
    %v449 = vcombine.high %v439, 0.0
    %v450 = vcombine.high %v446, 0.0
    %v451 = vcombine.low %v176, %v190
    %v452 = vcombine.high %v176, %v190
    %v454 = vunpack.c.l.s4 1983009808
    %v455 = vunpack.c.0.s8 %v454
    %v456 = vlaneseq
    %v457 = vshrl.u32 %v456, 7
    %v458 = vsub.s32 %v455, %v457
    %v459 = vrot.slane %v451, %v458
    %v461 = vunpack.c.l.s4 1983009808
    %v462 = vunpack.c.0.s8 %v461
    %v463 = vlaneseq
    %v464 = vshrl.u32 %v463, 7
    %v465 = vsub.s32 %v462, %v464
    %v466 = vrot.slane %v452, %v465
    %v467 = vcombine.low %v184, %v196
    %v468 = vcombine.high %v184, %v196
    %v470 = vunpack.c.l.s4 1983009808
    %v471 = vunpack.c.0.s8 %v470
    %v472 = vlaneseq
    %v473 = vshrl.u32 %v472, 7
    %v474 = vsub.s32 %v471, %v473
    %v475 = vrot.slane %v467, %v474
    %v477 = vunpack.c.l.s4 1983009808
    %v478 = vunpack.c.0.s8 %v477
    %v479 = vlaneseq
    %v480 = vshrl.u32 %v479, 7
    %v481 = vsub.s32 %v478, %v480
    %v482 = vrot.slane %v468, %v481
    %v483 = vcombine.low %v202, %v214
    %v484 = vcombine.high %v202, %v214
    %v486 = vunpack.c.l.s4 1983009808
    %v487 = vunpack.c.0.s8 %v486
    %v488 = vlaneseq
    %v489 = vshrl.u32 %v488, 7
    %v490 = vsub.s32 %v487, %v489
    %v491 = vrot.slane %v483, %v490
    %v493 = vunpack.c.l.s4 1983009808
    %v494 = vunpack.c.0.s8 %v493
    %v495 = vlaneseq
    %v496 = vshrl.u32 %v495, 7
    %v497 = vsub.s32 %v494, %v496
    %v498 = vrot.slane %v484, %v497
    %v499 = vcombine.low %v208, %v220
    %v500 = vcombine.high %v208, %v220
    %v502 = vunpack.c.l.s4 1983009808
    %v503 = vunpack.c.0.s8 %v502
    %v504 = vlaneseq
    %v505 = vshrl.u32 %v504, 7
    %v506 = vsub.s32 %v503, %v505
    %v507 = vrot.slane %v499, %v506
    %v509 = vunpack.c.l.s4 1983009808
    %v510 = vunpack.c.0.s8 %v509
    %v511 = vlaneseq
    %v512 = vshrl.u32 %v511, 7
    %v513 = vsub.s32 %v510, %v512
    %v514 = vrot.slane %v500, %v513
    %v515 = vcombine.low %v459, %v475
    %v516 = vcombine.high %v459, %v475
    %v518 = vunpack.c.l.s4 1934713408
    %v519 = vunpack.c.0.s8 %v518
    %v520 = vlaneseq
    %v521 = vshrl.u32 %v520, 7
    %v522 = vsub.s32 %v519, %v521
    %v523 = vrot.slane %v515, %v522
    %v525 = vunpack.c.l.s4 1934713408
    %v526 = vunpack.c.0.s8 %v525
    %v527 = vlaneseq
    %v528 = vshrl.u32 %v527, 7
    %v529 = vsub.s32 %v526, %v528
    %v530 = vrot.slane %v516, %v529
    %v531 = vcombine.low %v466, %v482
    %v532 = vcombine.high %v466, %v482
    %v534 = vunpack.c.l.s4 1934713408
    %v535 = vunpack.c.0.s8 %v534
    %v536 = vlaneseq
    %v537 = vshrl.u32 %v536, 7
    %v538 = vsub.s32 %v535, %v537
    %v539 = vrot.slane %v531, %v538
    %v541 = vunpack.c.l.s4 1934713408
    %v542 = vunpack.c.0.s8 %v541
    %v543 = vlaneseq
    %v544 = vshrl.u32 %v543, 7
    %v545 = vsub.s32 %v542, %v544
    %v546 = vrot.slane %v532, %v545
    %v547 = vcombine.low %v491, %v507
    %v548 = vcombine.high %v491, %v507
    %v550 = vunpack.c.l.s4 1934713408
    %v551 = vunpack.c.0.s8 %v550
    %v552 = vlaneseq
    %v553 = vshrl.u32 %v552, 7
    %v554 = vsub.s32 %v551, %v553
    %v555 = vrot.slane %v547, %v554
    %v557 = vunpack.c.l.s4 1934713408
    %v558 = vunpack.c.0.s8 %v557
    %v559 = vlaneseq
    %v560 = vshrl.u32 %v559, 7
    %v561 = vsub.s32 %v558, %v560
    %v562 = vrot.slane %v548, %v561
    %v563 = vcombine.low %v498, %v514
    %v564 = vcombine.high %v498, %v514
    %v566 = vunpack.c.l.s4 1934713408
    %v567 = vunpack.c.0.s8 %v566
    %v568 = vlaneseq
    %v569 = vshrl.u32 %v568, 7
    %v570 = vsub.s32 %v567, %v569
    %v571 = vrot.slane %v563, %v570
    %v573 = vunpack.c.l.s4 1934713408
    %v574 = vunpack.c.0.s8 %v573
    %v575 = vlaneseq
    %v576 = vshrl.u32 %v575, 7
    %v577 = vsub.s32 %v574, %v576
    %v578 = vrot.slane %v564, %v577
    %v579 = vcombine.low %v523, %v555
    %v580 = vcombine.high %v523, %v555
    %v581 = vcombine.low %v530, %v562
    %v582 = vcombine.high %v530, %v562
    %v583 = vcombine.low %v539, %v571
    %v584 = vcombine.high %v539, %v571
    %v585 = vcombine.low %v546, %v578
    %v586 = vcombine.high %v546, %v578
    %v587 = vcombine.low %v226, %v238
    %v588 = vcombine.high %v226, %v238
    %v590 = vunpack.c.l.s4 1983009808
    %v591 = vunpack.c.0.s8 %v590
    %v592 = vlaneseq
    %v593 = vshrl.u32 %v592, 7
    %v594 = vsub.s32 %v591, %v593
    %v595 = vrot.slane %v587, %v594
    %v597 = vunpack.c.l.s4 1983009808
    %v598 = vunpack.c.0.s8 %v597
    %v599 = vlaneseq
    %v600 = vshrl.u32 %v599, 7
    %v601 = vsub.s32 %v598, %v600
    %v602 = vrot.slane %v588, %v601
    %v603 = vcombine.low %v232, %v244
    %v604 = vcombine.high %v232, %v244
    %v606 = vunpack.c.l.s4 1983009808
    %v607 = vunpack.c.0.s8 %v606
    %v608 = vlaneseq
    %v609 = vshrl.u32 %v608, 7
    %v610 = vsub.s32 %v607, %v609
    %v611 = vrot.slane %v603, %v610
    %v613 = vunpack.c.l.s4 1983009808
    %v614 = vunpack.c.0.s8 %v613
    %v615 = vlaneseq
    %v616 = vshrl.u32 %v615, 7
    %v617 = vsub.s32 %v614, %v616
    %v618 = vrot.slane %v604, %v617
    %v619 = vcombine.low %v595, %v611
    %v620 = vcombine.high %v595, %v611
    %v622 = vunpack.c.l.s4 1934713408
    %v623 = vunpack.c.0.s8 %v622
    %v624 = vlaneseq
    %v625 = vshrl.u32 %v624, 7
    %v626 = vsub.s32 %v623, %v625
    %v627 = vrot.slane %v619, %v626
    %v629 = vunpack.c.l.s4 1934713408
    %v630 = vunpack.c.0.s8 %v629
    %v631 = vlaneseq
    %v632 = vshrl.u32 %v631, 7
    %v633 = vsub.s32 %v630, %v632
    %v634 = vrot.slane %v620, %v633
    %v635 = vcombine.low %v602, %v618
    %v636 = vcombine.high %v602, %v618
    %v638 = vunpack.c.l.s4 1934713408
    %v639 = vunpack.c.0.s8 %v638
    %v640 = vlaneseq
    %v641 = vshrl.u32 %v640, 7
    %v642 = vsub.s32 %v639, %v641
    %v643 = vrot.slane %v635, %v642
    %v645 = vunpack.c.l.s4 1934713408
    %v646 = vunpack.c.0.s8 %v645
    %v647 = vlaneseq
    %v648 = vshrl.u32 %v647, 7
    %v649 = vsub.s32 %v646, %v648
    %v650 = vrot.slane %v636, %v649
    %v651 = vcombine.high %v627, 0.0
    %v652 = vcombine.high %v634, 0.0
    %v653 = vcombine.high %v643, 0.0
    %v654 = vcombine.high %v650, 0.0
    %v655 = vcombine.low %v375, %v377
    %v656 = vcombine.high %v375, %v377
    %v658 = vunpack.c.l.s4 1983009808
    %v659 = vunpack.c.0.s8 %v658
    %v660 = vlaneseq
    %v661 = vshrl.u32 %v660, 7
    %v662 = vsub.s32 %v659, %v661
    %v663 = vrot.slane %v655, %v662
    %v665 = vunpack.c.l.s4 1983009808
    %v666 = vunpack.c.0.s8 %v665
    %v667 = vlaneseq
    %v668 = vshrl.u32 %v667, 7
    %v669 = vsub.s32 %v666, %v668
    %v670 = vrot.slane %v656, %v669
    %v671 = vcombine.low %v376, %v378
    %v672 = vcombine.high %v376, %v378
    %v674 = vunpack.c.l.s4 1983009808
    %v675 = vunpack.c.0.s8 %v674
    %v676 = vlaneseq
    %v677 = vshrl.u32 %v676, 7
    %v678 = vsub.s32 %v675, %v677
    %v679 = vrot.slane %v671, %v678
    %v681 = vunpack.c.l.s4 1983009808
    %v682 = vunpack.c.0.s8 %v681
    %v683 = vlaneseq
    %v684 = vshrl.u32 %v683, 7
    %v685 = vsub.s32 %v682, %v684
    %v686 = vrot.slane %v672, %v685
    %v687 = vcombine.low %v379, %v381
    %v688 = vcombine.high %v379, %v381
    %v690 = vunpack.c.l.s4 1983009808
    %v691 = vunpack.c.0.s8 %v690
    %v692 = vlaneseq
    %v693 = vshrl.u32 %v692, 7
    %v694 = vsub.s32 %v691, %v693
    %v695 = vrot.slane %v687, %v694
    %v697 = vunpack.c.l.s4 1983009808
    %v698 = vunpack.c.0.s8 %v697
    %v699 = vlaneseq
    %v700 = vshrl.u32 %v699, 7
    %v701 = vsub.s32 %v698, %v700
    %v702 = vrot.slane %v688, %v701
    %v703 = vcombine.low %v380, %v382
    %v704 = vcombine.high %v380, %v382
    %v706 = vunpack.c.l.s4 1983009808
    %v707 = vunpack.c.0.s8 %v706
    %v708 = vlaneseq
    %v709 = vshrl.u32 %v708, 7
    %v710 = vsub.s32 %v707, %v709
    %v711 = vrot.slane %v703, %v710
    %v713 = vunpack.c.l.s4 1983009808
    %v714 = vunpack.c.0.s8 %v713
    %v715 = vlaneseq
    %v716 = vshrl.u32 %v715, 7
    %v717 = vsub.s32 %v714, %v716
    %v718 = vrot.slane %v704, %v717
    %v719 = vcombine.low %v663, %v679
    %v720 = vcombine.high %v663, %v679
    %v722 = vunpack.c.l.s4 1934713408
    %v723 = vunpack.c.0.s8 %v722
    %v724 = vlaneseq
    %v725 = vshrl.u32 %v724, 7
    %v726 = vsub.s32 %v723, %v725
    %v727 = vrot.slane %v719, %v726
    %v729 = vunpack.c.l.s4 1934713408
    %v730 = vunpack.c.0.s8 %v729
    %v731 = vlaneseq
    %v732 = vshrl.u32 %v731, 7
    %v733 = vsub.s32 %v730, %v732
    %v734 = vrot.slane %v720, %v733
    %v735 = vcombine.low %v670, %v686
    %v736 = vcombine.high %v670, %v686
    %v738 = vunpack.c.l.s4 1934713408
    %v739 = vunpack.c.0.s8 %v738
    %v740 = vlaneseq
    %v741 = vshrl.u32 %v740, 7
    %v742 = vsub.s32 %v739, %v741
    %v743 = vrot.slane %v735, %v742
    %v745 = vunpack.c.l.s4 1934713408
    %v746 = vunpack.c.0.s8 %v745
    %v747 = vlaneseq
    %v748 = vshrl.u32 %v747, 7
    %v749 = vsub.s32 %v746, %v748
    %v750 = vrot.slane %v736, %v749
    %v751 = vcombine.low %v695, %v711
    %v752 = vcombine.high %v695, %v711
    %v754 = vunpack.c.l.s4 1934713408
    %v755 = vunpack.c.0.s8 %v754
    %v756 = vlaneseq
    %v757 = vshrl.u32 %v756, 7
    %v758 = vsub.s32 %v755, %v757
    %v759 = vrot.slane %v751, %v758
    %v761 = vunpack.c.l.s4 1934713408
    %v762 = vunpack.c.0.s8 %v761
    %v763 = vlaneseq
    %v764 = vshrl.u32 %v763, 7
    %v765 = vsub.s32 %v762, %v764
    %v766 = vrot.slane %v752, %v765
    %v767 = vcombine.low %v702, %v718
    %v768 = vcombine.high %v702, %v718
    %v770 = vunpack.c.l.s4 1934713408
    %v771 = vunpack.c.0.s8 %v770
    %v772 = vlaneseq
    %v773 = vshrl.u32 %v772, 7
    %v774 = vsub.s32 %v771, %v773
    %v775 = vrot.slane %v767, %v774
    %v777 = vunpack.c.l.s4 1934713408
    %v778 = vunpack.c.0.s8 %v777
    %v779 = vlaneseq
    %v780 = vshrl.u32 %v779, 7
    %v781 = vsub.s32 %v778, %v780
    %v782 = vrot.slane %v768, %v781
    %v783 = vcombine.low %v727, %v759
    %v784 = vcombine.high %v727, %v759
    %v785 = vcombine.low %v734, %v766
    %v786 = vcombine.high %v734, %v766
    %v787 = vcombine.low %v743, %v775
    %v788 = vcombine.high %v743, %v775
    %v789 = vcombine.low %v750, %v782
    %v790 = vcombine.high %v750, %v782
    %v791 = vcombine.low %v579, %v581
    %v792 = vcombine.high %v579, %v581
    %v794 = vunpack.c.l.s4 1983009808
    %v795 = vunpack.c.0.s8 %v794
    %v796 = vlaneseq
    %v797 = vshrl.u32 %v796, 7
    %v798 = vsub.s32 %v795, %v797
    %v799 = vrot.slane %v791, %v798
    %v801 = vunpack.c.l.s4 1983009808
    %v802 = vunpack.c.0.s8 %v801
    %v803 = vlaneseq
    %v804 = vshrl.u32 %v803, 7
    %v805 = vsub.s32 %v802, %v804
    %v806 = vrot.slane %v792, %v805
    %v807 = vcombine.low %v580, %v582
    %v808 = vcombine.high %v580, %v582
    %v810 = vunpack.c.l.s4 1983009808
    %v811 = vunpack.c.0.s8 %v810
    %v812 = vlaneseq
    %v813 = vshrl.u32 %v812, 7
    %v814 = vsub.s32 %v811, %v813
    %v815 = vrot.slane %v807, %v814
    %v817 = vunpack.c.l.s4 1983009808
    %v818 = vunpack.c.0.s8 %v817
    %v819 = vlaneseq
    %v820 = vshrl.u32 %v819, 7
    %v821 = vsub.s32 %v818, %v820
    %v822 = vrot.slane %v808, %v821
    %v823 = vcombine.low %v583, %v585
    %v824 = vcombine.high %v583, %v585
    %v826 = vunpack.c.l.s4 1983009808
    %v827 = vunpack.c.0.s8 %v826
    %v828 = vlaneseq
    %v829 = vshrl.u32 %v828, 7
    %v830 = vsub.s32 %v827, %v829
    %v831 = vrot.slane %v823, %v830
    %v833 = vunpack.c.l.s4 1983009808
    %v834 = vunpack.c.0.s8 %v833
    %v835 = vlaneseq
    %v836 = vshrl.u32 %v835, 7
    %v837 = vsub.s32 %v834, %v836
    %v838 = vrot.slane %v824, %v837
    %v839 = vcombine.low %v584, %v586
    %v840 = vcombine.high %v584, %v586
    %v842 = vunpack.c.l.s4 1983009808
    %v843 = vunpack.c.0.s8 %v842
    %v844 = vlaneseq
    %v845 = vshrl.u32 %v844, 7
    %v846 = vsub.s32 %v843, %v845
    %v847 = vrot.slane %v839, %v846
    %v849 = vunpack.c.l.s4 1983009808
    %v850 = vunpack.c.0.s8 %v849
    %v851 = vlaneseq
    %v852 = vshrl.u32 %v851, 7
    %v853 = vsub.s32 %v850, %v852
    %v854 = vrot.slane %v840, %v853
    %v855 = vcombine.low %v799, %v815
    %v856 = vcombine.high %v799, %v815
    %v858 = vunpack.c.l.s4 1934713408
    %v859 = vunpack.c.0.s8 %v858
    %v860 = vlaneseq
    %v861 = vshrl.u32 %v860, 7
    %v862 = vsub.s32 %v859, %v861
    %v863 = vrot.slane %v855, %v862
    %v865 = vunpack.c.l.s4 1934713408
    %v866 = vunpack.c.0.s8 %v865
    %v867 = vlaneseq
    %v868 = vshrl.u32 %v867, 7
    %v869 = vsub.s32 %v866, %v868
    %v870 = vrot.slane %v856, %v869
    %v871 = vcombine.low %v806, %v822
    %v872 = vcombine.high %v806, %v822
    %v874 = vunpack.c.l.s4 1934713408
    %v875 = vunpack.c.0.s8 %v874
    %v876 = vlaneseq
    %v877 = vshrl.u32 %v876, 7
    %v878 = vsub.s32 %v875, %v877
    %v879 = vrot.slane %v871, %v878
    %v881 = vunpack.c.l.s4 1934713408
    %v882 = vunpack.c.0.s8 %v881
    %v883 = vlaneseq
    %v884 = vshrl.u32 %v883, 7
    %v885 = vsub.s32 %v882, %v884
    %v886 = vrot.slane %v872, %v885
    %v887 = vcombine.low %v831, %v847
    %v888 = vcombine.high %v831, %v847
    %v890 = vunpack.c.l.s4 1934713408
    %v891 = vunpack.c.0.s8 %v890
    %v892 = vlaneseq
    %v893 = vshrl.u32 %v892, 7
    %v894 = vsub.s32 %v891, %v893
    %v895 = vrot.slane %v887, %v894
    %v897 = vunpack.c.l.s4 1934713408
    %v898 = vunpack.c.0.s8 %v897
    %v899 = vlaneseq
    %v900 = vshrl.u32 %v899, 7
    %v901 = vsub.s32 %v898, %v900
    %v902 = vrot.slane %v888, %v901
    %v903 = vcombine.low %v838, %v854
    %v904 = vcombine.high %v838, %v854
    %v906 = vunpack.c.l.s4 1934713408
    %v907 = vunpack.c.0.s8 %v906
    %v908 = vlaneseq
    %v909 = vshrl.u32 %v908, 7
    %v910 = vsub.s32 %v907, %v909
    %v911 = vrot.slane %v903, %v910
    %v913 = vunpack.c.l.s4 1934713408
    %v914 = vunpack.c.0.s8 %v913
    %v915 = vlaneseq
    %v916 = vshrl.u32 %v915, 7
    %v917 = vsub.s32 %v914, %v916
    %v918 = vrot.slane %v904, %v917
    %v919 = vcombine.low %v863, %v895
    %v920 = vcombine.high %v863, %v895
    %v921 = vcombine.low %v870, %v902
    %v922 = vcombine.high %v870, %v902
    %v923 = vcombine.low %v879, %v911
    %v924 = vcombine.high %v879, %v911
    %v925 = vcombine.low %v886, %v918
    %v926 = vcombine.high %v886, %v918
    %v927 = vcombine.low %v423, %v430
    %v929 = vunpack.c.l.s4 1983009808
    %v930 = vunpack.c.0.s8 %v929
    %v931 = vlaneseq
    %v932 = vshrl.u32 %v931, 7
    %v933 = vsub.s32 %v930, %v932
    %v934 = vrot.slane %v927, %v933
    %v935 = vcombine.low %v447, %v448
    %v937 = vunpack.c.l.s4 1983009808
    %v938 = vunpack.c.0.s8 %v937
    %v939 = vlaneseq
    %v940 = vshrl.u32 %v939, 7
    %v941 = vsub.s32 %v938, %v940
    %v942 = vrot.slane %v935, %v941
    %v943 = vcombine.low %v439, %v446
    %v945 = vunpack.c.l.s4 1983009808
    %v946 = vunpack.c.0.s8 %v945
    %v947 = vlaneseq
    %v948 = vshrl.u32 %v947, 7
    %v949 = vsub.s32 %v946, %v948
    %v950 = vrot.slane %v943, %v949
    %v951 = vcombine.low %v449, %v450
    %v953 = vunpack.c.l.s4 1983009808
    %v954 = vunpack.c.0.s8 %v953
    %v955 = vlaneseq
    %v956 = vshrl.u32 %v955, 7
    %v957 = vsub.s32 %v954, %v956
    %v958 = vrot.slane %v951, %v957
    %v959 = vcombine.low %v934, %v942
    %v960 = vcombine.high %v934, %v942
    %v962 = vunpack.c.l.s4 1934713408
    %v963 = vunpack.c.0.s8 %v962
    %v964 = vlaneseq
    %v965 = vshrl.u32 %v964, 7
    %v966 = vsub.s32 %v963, %v965
    %v967 = vrot.slane %v959, %v966
    %v969 = vunpack.c.l.s4 1934713408
    %v970 = vunpack.c.0.s8 %v969
    %v971 = vlaneseq
    %v972 = vshrl.u32 %v971, 7
    %v973 = vsub.s32 %v970, %v972
    %v974 = vrot.slane %v960, %v973
    %v975 = vcombine.low %v950, %v958
    %v976 = vcombine.high %v950, %v958
    %v978 = vunpack.c.l.s4 1934713408
    %v979 = vunpack.c.0.s8 %v978
    %v980 = vlaneseq
    %v981 = vshrl.u32 %v980, 7
    %v982 = vsub.s32 %v979, %v981
    %v983 = vrot.slane %v975, %v982
    %v985 = vunpack.c.l.s4 1934713408
    %v986 = vunpack.c.0.s8 %v985
    %v987 = vlaneseq
    %v988 = vshrl.u32 %v987, 7
    %v989 = vsub.s32 %v986, %v988
    %v990 = vrot.slane %v976, %v989
    %v991 = vcombine.low %v967, %v983
    %v992 = vcombine.high %v967, %v983
    %v993 = vcombine.low %v974, %v990
    %v994 = vcombine.high %v974, %v990
    %v995 = vcombine.low %v627, %v634
    %v997 = vunpack.c.l.s4 1983009808
    %v998 = vunpack.c.0.s8 %v997
    %v999 = vlaneseq
    %v1000 = vshrl.u32 %v999, 7
    %v1001 = vsub.s32 %v998, %v1000
    %v1002 = vrot.slane %v995, %v1001
    %v1003 = vcombine.low %v651, %v652
    %v1005 = vunpack.c.l.s4 1983009808
    %v1006 = vunpack.c.0.s8 %v1005
    %v1007 = vlaneseq
    %v1008 = vshrl.u32 %v1007, 7
    %v1009 = vsub.s32 %v1006, %v1008
    %v1010 = vrot.slane %v1003, %v1009
    %v1011 = vcombine.low %v643, %v650
    %v1013 = vunpack.c.l.s4 1983009808
    %v1014 = vunpack.c.0.s8 %v1013
    %v1015 = vlaneseq
    %v1016 = vshrl.u32 %v1015, 7
    %v1017 = vsub.s32 %v1014, %v1016
    %v1018 = vrot.slane %v1011, %v1017
    %v1019 = vcombine.low %v653, %v654
    %v1021 = vunpack.c.l.s4 1983009808
    %v1022 = vunpack.c.0.s8 %v1021
    %v1023 = vlaneseq
    %v1024 = vshrl.u32 %v1023, 7
    %v1025 = vsub.s32 %v1022, %v1024
    %v1026 = vrot.slane %v1019, %v1025
    %v1027 = vcombine.low %v1002, %v1010
    %v1028 = vcombine.high %v1002, %v1010
    %v1030 = vunpack.c.l.s4 1934713408
    %v1031 = vunpack.c.0.s8 %v1030
    %v1032 = vlaneseq
    %v1033 = vshrl.u32 %v1032, 7
    %v1034 = vsub.s32 %v1031, %v1033
    %v1035 = vrot.slane %v1027, %v1034
    %v1037 = vunpack.c.l.s4 1934713408
    %v1038 = vunpack.c.0.s8 %v1037
    %v1039 = vlaneseq
    %v1040 = vshrl.u32 %v1039, 7
    %v1041 = vsub.s32 %v1038, %v1040
    %v1042 = vrot.slane %v1028, %v1041
    %v1043 = vcombine.low %v1018, %v1026
    %v1044 = vcombine.high %v1018, %v1026
    %v1046 = vunpack.c.l.s4 1934713408
    %v1047 = vunpack.c.0.s8 %v1046
    %v1048 = vlaneseq
    %v1049 = vshrl.u32 %v1048, 7
    %v1050 = vsub.s32 %v1047, %v1049
    %v1051 = vrot.slane %v1043, %v1050
    %v1053 = vunpack.c.l.s4 1934713408
    %v1054 = vunpack.c.0.s8 %v1053
    %v1055 = vlaneseq
    %v1056 = vshrl.u32 %v1055, 7
    %v1057 = vsub.s32 %v1054, %v1056
    %v1058 = vrot.slane %v1044, %v1057
    %v1059 = vcombine.low %v1035, %v1051
    %v1060 = vcombine.high %v1035, %v1051
    %v1061 = vcombine.low %v1042, %v1058
    %v1062 = vcombine.high %v1042, %v1058
    %vm1063 = vcmask 64512
    %v1065 = vsel %vm1063, %v783, 0
    %v1068 = vsel %vm1063, %v919, 0
    %v1071 = vsel %vm1063, %v787, 0
    %v1074 = vsel %vm1063, %v923, 0
    %1076 = vmatprep.subr.mxu0 0.0
    %1077 = vmatpush1.xpose.msra.mxu0 0.0
    %1078 = vmatprep.subr.mxu0 0.0
    %1079 = vmatpush1.xpose.msra.mxu0 0.0
    %1080 = vmatprep.subr.mxu0 0.0
    %1081 = vmatpush1.xpose.msra.mxu0 0.0
    %1082 = vmatprep.subr.mxu0 0.0
    %1083 = vmatpush1.xpose.msra.mxu0 0.0
    %1084 = vmatprep.subr.mxu0 0.0
    %1085 = vmatpush1.xpose.msra.mxu0 0.0
    %1086 = vmatprep.subr.mxu0 0.0
    %1087 = vmatpush1.xpose.msra.mxu0 0.0
    %1088 = vmatprep.subr.mxu0 0.0
    %1089 = vmatpush1.xpose.msra.mxu0 0.0
    %1090 = vmatprep.subr.mxu0 0.0
    %1091 = vmatpush1.xpose.msra.mxu0 0.0
    %1092 = vmatprep.subr.mxu0 0.0
    %1093 = vmatpush1.xpose.msra.mxu0 0.0
    %1094 = vmatprep.subr.mxu0 0.0
    %1095 = vmatpush1.xpose.msra.mxu0 0.0
    %1096 = vmatprep.subr.mxu0 0.0
    %1097 = vmatpush1.xpose.msra.mxu0 0.0
    %1098 = vmatprep.subr.mxu0 0.0
    %1099 = vmatpush1.xpose.msra.mxu0 0.0
    %1100 = vmatprep.subr.mxu0 0.0
    %1101 = vmatpush1.xpose.msra.mxu0 0.0
    %1102 = vmatprep.subr.mxu0 0.0
    %1103 = vmatpush1.xpose.msra.mxu0 0.0
    %1104 = vmatprep.subr.mxu0 0.0
    %1105 = vmatpush1.xpose.msra.mxu0 %v1074
    %1106 = vmatprep.subr.mxu0 0.0
    %1107 = vmatpush1.xpose.msra.mxu0 %v1071
    %1108 = vmatprep.subr.mxu0 0.0
    %1109 = vmatpush2.xpose.msra.mxu0 0.0
    %1110 = vmatprep.subr.mxu0 0.0
    %1111 = vmatpush2.xpose.msra.mxu0 0.0
    %1112 = vmatprep.subr.mxu0 0.0
    %1113 = vmatpush2.xpose.msra.mxu0 0.0
    %1114 = vmatprep.subr.mxu0 0.0
    %1115 = vmatpush2.xpose.msra.mxu0 0.0
    %1116 = vmatprep.subr.mxu0 0.0
    %1117 = vmatpush2.xpose.msra.mxu0 0.0
    %1118 = vmatprep.subr.mxu0 0.0
    %1119 = vmatpush2.xpose.msra.mxu0 0.0
    %1120 = vmatprep.subr.mxu0 0.0
    %1121 = vmatpush2.xpose.msra.mxu0 0.0
    %1122 = vmatprep.subr.mxu0 0.0
    %1123 = vmatpush2.xpose.msra.mxu0 0.0
    %1124 = vmatprep.subr.mxu0 0.0
    %1125 = vmatpush2.xpose.msra.mxu0 0.0
    %1126 = vmatprep.subr.mxu0 0.0
    %1127 = vmatpush2.xpose.msra.mxu0 0.0
    %1128 = vmatprep.subr.mxu0 0.0
    %1129 = vmatpush2.xpose.msra.mxu0 0.0
    %1130 = vmatprep.subr.mxu0 0.0
    %1131 = vmatpush2.xpose.msra.mxu0 0.0
    %1132 = vmatprep.subr.mxu0 0.0
    %1133 = vmatpush2.xpose.msra.mxu0 0.0
    %1134 = vmatprep.subr.mxu0 0.0
    %1135 = vmatpush2.xpose.msra.mxu0 0.0
    %1136 = vmatprep.subr.mxu0 0.0
    %1137 = vmatpush2.xpose.msra.mxu0 0.0
    %1138 = vmatprep.subr.mxu0 0.0
    %1139 = vmatpush2.xpose.msra.mxu0 0.0
    %1140 = vmatprep.mubr.f32.mxu0 0.0
    %1141 = vmatmul.mubr.f32.gmra.mxu0 %v1065
    %v1142 = vpop.f32.mrf.mxu0
    %v1143 = vadd.f32 %v44, %v1142
    %v1144 = vpop.f32.mrf.mxu0
    %1145 = vmatprep.mubr.f32.mxu0 0.0
    %1146 = vmatmul.mubr.f32.gmra.mxu0 %v1068
    %v1147 = vpop.f32.mrf.mxu0
    %v1148 = vadd.f32 %v45, %v1147
    %v1149 = vpop.f32.mrf.mxu0
    %1150 = vdwg.mxu0
    %v1152 = vsel %vm1063, %v784, 0
    %v1155 = vsel %vm1063, %v920, 0
    %v1158 = vsel %vm1063, %v788, 0
    %v1161 = vsel %vm1063, %v924, 0
    %1163 = vmatprep.subr.mxu0 0.0
    %1164 = vmatpush1.xpose.msra.mxu0 0.0
    %1165 = vmatprep.subr.mxu0 0.0
    %1166 = vmatpush1.xpose.msra.mxu0 0.0
    %1167 = vmatprep.subr.mxu0 0.0
    %1168 = vmatpush1.xpose.msra.mxu0 0.0
    %1169 = vmatprep.subr.mxu0 0.0
    %1170 = vmatpush1.xpose.msra.mxu0 0.0
    %1171 = vmatprep.subr.mxu0 0.0
    %1172 = vmatpush1.xpose.msra.mxu0 0.0
    %1173 = vmatprep.subr.mxu0 0.0
    %1174 = vmatpush1.xpose.msra.mxu0 0.0
    %1175 = vmatprep.subr.mxu0 0.0
    %1176 = vmatpush1.xpose.msra.mxu0 0.0
    %1177 = vmatprep.subr.mxu0 0.0
    %1178 = vmatpush1.xpose.msra.mxu0 0.0
    %1179 = vmatprep.subr.mxu0 0.0
    %1180 = vmatpush1.xpose.msra.mxu0 0.0
    %1181 = vmatprep.subr.mxu0 0.0
    %1182 = vmatpush1.xpose.msra.mxu0 0.0
    %1183 = vmatprep.subr.mxu0 0.0
    %1184 = vmatpush1.xpose.msra.mxu0 0.0
    %1185 = vmatprep.subr.mxu0 0.0
    %1186 = vmatpush1.xpose.msra.mxu0 0.0
    %1187 = vmatprep.subr.mxu0 0.0
    %1188 = vmatpush1.xpose.msra.mxu0 0.0
    %1189 = vmatprep.subr.mxu0 0.0
    %1190 = vmatpush1.xpose.msra.mxu0 0.0
    %1191 = vmatprep.subr.mxu0 0.0
    %1192 = vmatpush1.xpose.msra.mxu0 %v1161
    %1193 = vmatprep.subr.mxu0 0.0
    %1194 = vmatpush1.xpose.msra.mxu0 %v1158
    %1195 = vmatprep.subr.mxu0 0.0
    %1196 = vmatpush2.xpose.msra.mxu0 0.0
    %1197 = vmatprep.subr.mxu0 0.0
    %1198 = vmatpush2.xpose.msra.mxu0 0.0
    %1199 = vmatprep.subr.mxu0 0.0
    %1200 = vmatpush2.xpose.msra.mxu0 0.0
    %1201 = vmatprep.subr.mxu0 0.0
    %1202 = vmatpush2.xpose.msra.mxu0 0.0
    %1203 = vmatprep.subr.mxu0 0.0
    %1204 = vmatpush2.xpose.msra.mxu0 0.0
    %1205 = vmatprep.subr.mxu0 0.0
    %1206 = vmatpush2.xpose.msra.mxu0 0.0
    %1207 = vmatprep.subr.mxu0 0.0
    %1208 = vmatpush2.xpose.msra.mxu0 0.0
    %1209 = vmatprep.subr.mxu0 0.0
    %1210 = vmatpush2.xpose.msra.mxu0 0.0
    %1211 = vmatprep.subr.mxu0 0.0
    %1212 = vmatpush2.xpose.msra.mxu0 0.0
    %1213 = vmatprep.subr.mxu0 0.0
    %1214 = vmatpush2.xpose.msra.mxu0 0.0
    %1215 = vmatprep.subr.mxu0 0.0
    %1216 = vmatpush2.xpose.msra.mxu0 0.0
    %1217 = vmatprep.subr.mxu0 0.0
    %1218 = vmatpush2.xpose.msra.mxu0 0.0
    %1219 = vmatprep.subr.mxu0 0.0
    %1220 = vmatpush2.xpose.msra.mxu0 0.0
    %1221 = vmatprep.subr.mxu0 0.0
    %1222 = vmatpush2.xpose.msra.mxu0 0.0
    %1223 = vmatprep.subr.mxu0 0.0
    %1224 = vmatpush2.xpose.msra.mxu0 0.0
    %1225 = vmatprep.subr.mxu0 0.0
    %1226 = vmatpush2.xpose.msra.mxu0 0.0
    %1227 = vmatprep.mubr.f32.mxu0 0.0
    %1228 = vmatmul.mubr.f32.gmra.mxu0 %v1152
    %v1229 = vpop.f32.mrf.mxu0
    %v1230 = vadd.f32 %v44, %v1229
    %v1231 = vpop.f32.mrf.mxu0
    %1232 = vmatprep.mubr.f32.mxu0 0.0
    %1233 = vmatmul.mubr.f32.gmra.mxu0 %v1155
    %v1234 = vpop.f32.mrf.mxu0
    %v1235 = vadd.f32 %v45, %v1234
    %v1236 = vpop.f32.mrf.mxu0
    %1237 = vdwg.mxu0
    %v1239 = vsel %vm1063, %v785, 0
    %v1242 = vsel %vm1063, %v921, 0
    %v1245 = vsel %vm1063, %v789, 0
    %v1248 = vsel %vm1063, %v925, 0
    %1250 = vmatprep.subr.mxu0 0.0
    %1251 = vmatpush1.xpose.msra.mxu0 0.0
    %1252 = vmatprep.subr.mxu0 0.0
    %1253 = vmatpush1.xpose.msra.mxu0 0.0
    %1254 = vmatprep.subr.mxu0 0.0
    %1255 = vmatpush1.xpose.msra.mxu0 0.0
    %1256 = vmatprep.subr.mxu0 0.0
    %1257 = vmatpush1.xpose.msra.mxu0 0.0
    %1258 = vmatprep.subr.mxu0 0.0
    %1259 = vmatpush1.xpose.msra.mxu0 0.0
    %1260 = vmatprep.subr.mxu0 0.0
    %1261 = vmatpush1.xpose.msra.mxu0 0.0
    %1262 = vmatprep.subr.mxu0 0.0
    %1263 = vmatpush1.xpose.msra.mxu0 0.0
    %1264 = vmatprep.subr.mxu0 0.0
    %1265 = vmatpush1.xpose.msra.mxu0 0.0
    %1266 = vmatprep.subr.mxu0 0.0
    %1267 = vmatpush1.xpose.msra.mxu0 0.0
    %1268 = vmatprep.subr.mxu0 0.0
    %1269 = vmatpush1.xpose.msra.mxu0 0.0
    %1270 = vmatprep.subr.mxu0 0.0
    %1271 = vmatpush1.xpose.msra.mxu0 0.0
    %1272 = vmatprep.subr.mxu0 0.0
    %1273 = vmatpush1.xpose.msra.mxu0 0.0
    %1274 = vmatprep.subr.mxu0 0.0
    %1275 = vmatpush1.xpose.msra.mxu0 0.0
    %1276 = vmatprep.subr.mxu0 0.0
    %1277 = vmatpush1.xpose.msra.mxu0 0.0
    %1278 = vmatprep.subr.mxu0 0.0
    %1279 = vmatpush1.xpose.msra.mxu0 %v1248
    %1280 = vmatprep.subr.mxu0 0.0
    %1281 = vmatpush1.xpose.msra.mxu0 %v1245
    %1282 = vmatprep.subr.mxu0 0.0
    %1283 = vmatpush2.xpose.msra.mxu0 0.0
    %1284 = vmatprep.subr.mxu0 0.0
    %1285 = vmatpush2.xpose.msra.mxu0 0.0
    %1286 = vmatprep.subr.mxu0 0.0
    %1287 = vmatpush2.xpose.msra.mxu0 0.0
    %1288 = vmatprep.subr.mxu0 0.0
    %1289 = vmatpush2.xpose.msra.mxu0 0.0
    %1290 = vmatprep.subr.mxu0 0.0
    %1291 = vmatpush2.xpose.msra.mxu0 0.0
    %1292 = vmatprep.subr.mxu0 0.0
    %1293 = vmatpush2.xpose.msra.mxu0 0.0
    %1294 = vmatprep.subr.mxu0 0.0
    %1295 = vmatpush2.xpose.msra.mxu0 0.0
    %1296 = vmatprep.subr.mxu0 0.0
    %1297 = vmatpush2.xpose.msra.mxu0 0.0
    %1298 = vmatprep.subr.mxu0 0.0
    %1299 = vmatpush2.xpose.msra.mxu0 0.0
    %1300 = vmatprep.subr.mxu0 0.0
    %1301 = vmatpush2.xpose.msra.mxu0 0.0
    %1302 = vmatprep.subr.mxu0 0.0
    %1303 = vmatpush2.xpose.msra.mxu0 0.0
    %1304 = vmatprep.subr.mxu0 0.0
    %1305 = vmatpush2.xpose.msra.mxu0 0.0
    %1306 = vmatprep.subr.mxu0 0.0
    %1307 = vmatpush2.xpose.msra.mxu0 0.0
    %1308 = vmatprep.subr.mxu0 0.0
    %1309 = vmatpush2.xpose.msra.mxu0 0.0
    %1310 = vmatprep.subr.mxu0 0.0
    %1311 = vmatpush2.xpose.msra.mxu0 0.0
    %1312 = vmatprep.subr.mxu0 0.0
    %1313 = vmatpush2.xpose.msra.mxu0 0.0
    %1314 = vmatprep.mubr.f32.mxu0 0.0
    %1315 = vmatmul.mubr.f32.gmra.mxu0 %v1239
    %v1316 = vpop.f32.mrf.mxu0
    %v1317 = vadd.f32 %v44, %v1316
    %v1318 = vpop.f32.mrf.mxu0
    %1319 = vmatprep.mubr.f32.mxu0 0.0
    %1320 = vmatmul.mubr.f32.gmra.mxu0 %v1242
    %v1321 = vpop.f32.mrf.mxu0
    %v1322 = vadd.f32 %v45, %v1321
    %v1323 = vpop.f32.mrf.mxu0
    %1324 = vdwg.mxu0
    %v1326 = vsel %vm1063, %v786, 0
    %v1329 = vsel %vm1063, %v922, 0
    %v1332 = vsel %vm1063, %v790, 0
    %v1335 = vsel %vm1063, %v926, 0
    %1337 = vmatprep.subr.mxu0 0.0
    %1338 = vmatpush1.xpose.msra.mxu0 0.0
    %1339 = vmatprep.subr.mxu0 0.0
    %1340 = vmatpush1.xpose.msra.mxu0 0.0
    %1341 = vmatprep.subr.mxu0 0.0
    %1342 = vmatpush1.xpose.msra.mxu0 0.0
    %1343 = vmatprep.subr.mxu0 0.0
    %1344 = vmatpush1.xpose.msra.mxu0 0.0
    %1345 = vmatprep.subr.mxu0 0.0
    %1346 = vmatpush1.xpose.msra.mxu0 0.0
    %1347 = vmatprep.subr.mxu0 0.0
    %1348 = vmatpush1.xpose.msra.mxu0 0.0
    %1349 = vmatprep.subr.mxu0 0.0
    %1350 = vmatpush1.xpose.msra.mxu0 0.0
    %1351 = vmatprep.subr.mxu0 0.0
    %1352 = vmatpush1.xpose.msra.mxu0 0.0
    %1353 = vmatprep.subr.mxu0 0.0
    %1354 = vmatpush1.xpose.msra.mxu0 0.0
    %1355 = vmatprep.subr.mxu0 0.0
    %1356 = vmatpush1.xpose.msra.mxu0 0.0
    %1357 = vmatprep.subr.mxu0 0.0
    %1358 = vmatpush1.xpose.msra.mxu0 0.0
    %1359 = vmatprep.subr.mxu0 0.0
    %1360 = vmatpush1.xpose.msra.mxu0 0.0
    %1361 = vmatprep.subr.mxu0 0.0
    %1362 = vmatpush1.xpose.msra.mxu0 0.0
    %1363 = vmatprep.subr.mxu0 0.0
    %1364 = vmatpush1.xpose.msra.mxu0 0.0
    %1365 = vmatprep.subr.mxu0 0.0
    %1366 = vmatpush1.xpose.msra.mxu0 %v1335
    %1367 = vmatprep.subr.mxu0 0.0
    %1368 = vmatpush1.xpose.msra.mxu0 %v1332
    %1369 = vmatprep.subr.mxu0 0.0
    %1370 = vmatpush2.xpose.msra.mxu0 0.0
    %1371 = vmatprep.subr.mxu0 0.0
    %1372 = vmatpush2.xpose.msra.mxu0 0.0
    %1373 = vmatprep.subr.mxu0 0.0
    %1374 = vmatpush2.xpose.msra.mxu0 0.0
    %1375 = vmatprep.subr.mxu0 0.0
    %1376 = vmatpush2.xpose.msra.mxu0 0.0
    %1377 = vmatprep.subr.mxu0 0.0
    %1378 = vmatpush2.xpose.msra.mxu0 0.0
    %1379 = vmatprep.subr.mxu0 0.0
    %1380 = vmatpush2.xpose.msra.mxu0 0.0
    %1381 = vmatprep.subr.mxu0 0.0
    %1382 = vmatpush2.xpose.msra.mxu0 0.0
    %1383 = vmatprep.subr.mxu0 0.0
    %1384 = vmatpush2.xpose.msra.mxu0 0.0
    %1385 = vmatprep.subr.mxu0 0.0
    %1386 = vmatpush2.xpose.msra.mxu0 0.0
    %1387 = vmatprep.subr.mxu0 0.0
    %1388 = vmatpush2.xpose.msra.mxu0 0.0
    %1389 = vmatprep.subr.mxu0 0.0
    %1390 = vmatpush2.xpose.msra.mxu0 0.0
    %1391 = vmatprep.subr.mxu0 0.0
    %1392 = vmatpush2.xpose.msra.mxu0 0.0
    %1393 = vmatprep.subr.mxu0 0.0
    %1394 = vmatpush2.xpose.msra.mxu0 0.0
    %1395 = vmatprep.subr.mxu0 0.0
    %1396 = vmatpush2.xpose.msra.mxu0 0.0
    %1397 = vmatprep.subr.mxu0 0.0
    %1398 = vmatpush2.xpose.msra.mxu0 0.0
    %1399 = vmatprep.subr.mxu0 0.0
    %1400 = vmatpush2.xpose.msra.mxu0 0.0
    %1401 = vmatprep.mubr.f32.mxu0 0.0
    %1402 = vmatmul.mubr.f32.gmra.mxu0 %v1326
    %v1403 = vpop.f32.mrf.mxu0
    %v1404 = vadd.f32 %v44, %v1403
    %v1405 = vpop.f32.mrf.mxu0
    %1406 = vmatprep.mubr.f32.mxu0 0.0
    %1407 = vmatmul.mubr.f32.gmra.mxu0 %v1329
    %v1408 = vpop.f32.mrf.mxu0
    %v1409 = vadd.f32 %v45, %v1408
    %v1410 = vpop.f32.mrf.mxu0
    %1411 = vdwg.mxu0
    %vm1412 = vcmask 130048
    %v1413 = vsel %vm1412, %v1143, -inf
    %1414 = vmax.xlane.f32.xlu0 %v1413
    %v1415 = vpop.xlane.xlu0 %1414
    %v1416 = vsel %vm1412, %v1148, -inf
    %1417 = vmax.xlane.f32.xlu0 %v1416
    %v1418 = vpop.xlane.xlu0 %1417
    %v1419 = vsel %vm1412, %v1230, -inf
    %1420 = vmax.xlane.f32.xlu0 %v1419
    %v1421 = vpop.xlane.xlu0 %1420
    %v1422 = vsel %vm1412, %v1235, -inf
    %1423 = vmax.xlane.f32.xlu0 %v1422
    %v1424 = vpop.xlane.xlu0 %1423
    %v1425 = vsel %vm1412, %v1317, -inf
    %1426 = vmax.xlane.f32.xlu0 %v1425
    %v1427 = vpop.xlane.xlu0 %1426
    %v1428 = vsel %vm1412, %v1322, -inf
    %1429 = vmax.xlane.f32.xlu0 %v1428
    %v1430 = vpop.xlane.xlu0 %1429
    %v1431 = vsel %vm1412, %v1404, -inf
    %1432 = vmax.xlane.f32.xlu0 %v1431
    %v1433 = vpop.xlane.xlu0 %1432
    %v1434 = vsel %vm1412, %v1409, -inf
    %1435 = vmax.xlane.f32.xlu0 %v1434
    %v1436 = vpop.xlane.xlu0 %1435
    %v1437 = vsub.f32 %v1143, %v1415
    %v1438 = vsub.f32 %v1148, %v1418
    %v1439 = vsub.f32 %v1230, %v1421
    %v1440 = vsub.f32 %v1235, %v1424
    %v1441 = vsub.f32 %v1317, %v1427
    %v1442 = vsub.f32 %v1322, %v1430
    %v1443 = vsub.f32 %v1404, %v1433
    %v1444 = vsub.f32 %v1409, %v1436
    %v1445 = vmul.f32 %v1437, 1.442695
    %v1446 = vpow.pop %v1445
    %v1447 = vmul.f32 %v1438, 1.442695
    %v1448 = vpow.pop %v1447
    %v1449 = vmul.f32 %v1439, 1.442695
    %v1450 = vpow.pop %v1449
    %v1451 = vmul.f32 %v1440, 1.442695
    %v1452 = vpow.pop %v1451
    %v1453 = vmul.f32 %v1441, 1.442695
    %v1454 = vpow.pop %v1453
    %v1455 = vmul.f32 %v1442, 1.442695
    %v1456 = vpow.pop %v1455
    %v1457 = vmul.f32 %v1443, 1.442695
    %v1458 = vpow.pop %v1457
    %v1459 = vmul.f32 %v1444, 1.442695
    %v1460 = vpow.pop %v1459
    %v1461 = vsel %vm1412, %v1446, 0.0
    %1462 = vadd.xlane.f32.xlu0 %v1461
    %v1463 = vpop.xlane.xlu0 %1462
    %v1464 = vsel %vm1412, %v1448, 0.0
    %1465 = vadd.xlane.f32.xlu0 %v1464
    %v1466 = vpop.xlane.xlu0 %1465
    %v1467 = vsel %vm1412, %v1450, 0.0
    %1468 = vadd.xlane.f32.xlu0 %v1467
    %v1469 = vpop.xlane.xlu0 %1468
    %v1470 = vsel %vm1412, %v1452, 0.0
    %1471 = vadd.xlane.f32.xlu0 %v1470
    %v1472 = vpop.xlane.xlu0 %1471
    %v1473 = vsel %vm1412, %v1454, 0.0
    %1474 = vadd.xlane.f32.xlu0 %v1473
    %v1475 = vpop.xlane.xlu0 %1474
    %v1476 = vsel %vm1412, %v1456, 0.0
    %1477 = vadd.xlane.f32.xlu0 %v1476
    %v1478 = vpop.xlane.xlu0 %1477
    %v1479 = vsel %vm1412, %v1458, 0.0
    %1480 = vadd.xlane.f32.xlu0 %v1479
    %v1481 = vpop.xlane.xlu0 %1480
    %v1482 = vsel %vm1412, %v1460, 0.0
    %1483 = vadd.xlane.f32.xlu0 %v1482
    %v1484 = vpop.xlane.xlu0 %1483
    %v1485 = vrcp.pop %v1463
    %v1486 = vrcp.pop %v1466
    %v1487 = vrcp.pop %v1469
    %v1488 = vrcp.pop %v1472
    %v1489 = vrcp.pop %v1475
    %v1490 = vrcp.pop %v1478
    %v1491 = vrcp.pop %v1481
    %v1492 = vrcp.pop %v1484
    %v1493 = vmul.f32 %v1446, %v1485
    %v1494 = vmul.f32 %v1448, %v1486
    %v1495 = vmul.f32 %v1450, %v1487
    %v1496 = vmul.f32 %v1452, %v1488
    %v1497 = vmul.f32 %v1454, %v1489
    %v1498 = vmul.f32 %v1456, %v1490
    %v1499 = vmul.f32 %v1458, %v1491
    %v1500 = vmul.f32 %v1460, %v1492
    %v1502 = vsel %vm1412, %v1493, 0
    %v1505 = vsel %vm1412, %v1494, 0
    %1507 = vmatprep.subr.mxu0 0.0
    %1508 = vmatpush1.msra.mxu0 0.0
    %1509 = vmatprep.subr.mxu0 0.0
    %1510 = vmatpush1.msra.mxu0 0.0
    %1511 = vmatprep.subr.mxu0 0.0
    %1512 = vmatpush1.msra.mxu0 0.0
    %1513 = vmatprep.subr.mxu0 0.0
    %1514 = vmatpush1.msra.mxu0 0.0
    %1515 = vmatprep.subr.mxu0 0.0
    %1516 = vmatpush1.msra.mxu0 0.0
    %1517 = vmatprep.subr.mxu0 0.0
    %1518 = vmatpush1.msra.mxu0 0.0
    %1519 = vmatprep.subr.mxu0 0.0
    %1520 = vmatpush1.msra.mxu0 0.0
    %1521 = vmatprep.subr.mxu0 0.0
    %1522 = vmatpush1.msra.mxu0 0.0
    %1523 = vmatprep.subr.mxu0 0.0
    %1524 = vmatpush1.msra.mxu0 0.0
    %1525 = vmatprep.subr.mxu0 0.0
    %1526 = vmatpush1.msra.mxu0 0.0
    %1527 = vmatprep.subr.mxu0 0.0
    %1528 = vmatpush1.msra.mxu0 0.0
    %1529 = vmatprep.subr.mxu0 0.0
    %1530 = vmatpush1.msra.mxu0 0.0
    %1531 = vmatprep.subr.mxu0 0.0
    %1532 = vmatpush1.msra.mxu0 0.0
    %1533 = vmatprep.subr.mxu0 0.0
    %1534 = vmatpush1.msra.mxu0 0.0
    %1535 = vmatprep.subr.mxu0 0.0
    %1536 = vmatpush1.msra.mxu0 %v1059
    %1537 = vmatprep.subr.mxu0 0.0
    %1538 = vmatpush1.msra.mxu0 %v991
    %1539 = vmatprep.subr.mxu0 0.0
    %1540 = vmatpush2.msra.mxu0 0.0
    %1541 = vmatprep.subr.mxu0 0.0
    %1542 = vmatpush2.msra.mxu0 0.0
    %1543 = vmatprep.subr.mxu0 0.0
    %1544 = vmatpush2.msra.mxu0 0.0
    %1545 = vmatprep.subr.mxu0 0.0
    %1546 = vmatpush2.msra.mxu0 0.0
    %1547 = vmatprep.subr.mxu0 0.0
    %1548 = vmatpush2.msra.mxu0 0.0
    %1549 = vmatprep.subr.mxu0 0.0
    %1550 = vmatpush2.msra.mxu0 0.0
    %1551 = vmatprep.subr.mxu0 0.0
    %1552 = vmatpush2.msra.mxu0 0.0
    %1553 = vmatprep.subr.mxu0 0.0
    %1554 = vmatpush2.msra.mxu0 0.0
    %1555 = vmatprep.subr.mxu0 0.0
    %1556 = vmatpush2.msra.mxu0 0.0
    %1557 = vmatprep.subr.mxu0 0.0
    %1558 = vmatpush2.msra.mxu0 0.0
    %1559 = vmatprep.subr.mxu0 0.0
    %1560 = vmatpush2.msra.mxu0 0.0
    %1561 = vmatprep.subr.mxu0 0.0
    %1562 = vmatpush2.msra.mxu0 0.0
    %1563 = vmatprep.subr.mxu0 0.0
    %1564 = vmatpush2.msra.mxu0 0.0
    %1565 = vmatprep.subr.mxu0 0.0
    %1566 = vmatpush2.msra.mxu0 0.0
    %1567 = vmatprep.subr.mxu0 0.0
    %1568 = vmatpush2.msra.mxu0 0.0
    %1569 = vmatprep.subr.mxu0 0.0
    %1570 = vmatpush2.msra.mxu0 0.0
    %1571 = vmatprep.mubr.f32.mxu0 0.0
    %1572 = vmatmul.mubr.f32.gmra.mxu0 %v1502
    %v1573 = vpop.f32.mrf.mxu0
    %v1574 = vadd.f32 0.0, %v1573
    %v1575 = vpop.f32.mrf.mxu0
    %1576 = vmatprep.mubr.f32.mxu0 0.0
    %1577 = vmatmul.mubr.f32.gmra.mxu0 %v1505
    %v1578 = vpop.f32.mrf.mxu0
    %v1579 = vadd.f32 0.0, %v1578
    %v1580 = vpop.f32.mrf.mxu0
    %1581 = vdwg.mxu0
    %v1583 = vsel %vm1412, %v1495, 0
    %v1586 = vsel %vm1412, %v1496, 0
    %1588 = vmatprep.subr.mxu0 0.0
    %1589 = vmatpush1.msra.mxu0 0.0
    %1590 = vmatprep.subr.mxu0 0.0
    %1591 = vmatpush1.msra.mxu0 0.0
    %1592 = vmatprep.subr.mxu0 0.0
    %1593 = vmatpush1.msra.mxu0 0.0
    %1594 = vmatprep.subr.mxu0 0.0
    %1595 = vmatpush1.msra.mxu0 0.0
    %1596 = vmatprep.subr.mxu0 0.0
    %1597 = vmatpush1.msra.mxu0 0.0
    %1598 = vmatprep.subr.mxu0 0.0
    %1599 = vmatpush1.msra.mxu0 0.0
    %1600 = vmatprep.subr.mxu0 0.0
    %1601 = vmatpush1.msra.mxu0 0.0
    %1602 = vmatprep.subr.mxu0 0.0
    %1603 = vmatpush1.msra.mxu0 0.0
    %1604 = vmatprep.subr.mxu0 0.0
    %1605 = vmatpush1.msra.mxu0 0.0
    %1606 = vmatprep.subr.mxu0 0.0
    %1607 = vmatpush1.msra.mxu0 0.0
    %1608 = vmatprep.subr.mxu0 0.0
    %1609 = vmatpush1.msra.mxu0 0.0
    %1610 = vmatprep.subr.mxu0 0.0
    %1611 = vmatpush1.msra.mxu0 0.0
    %1612 = vmatprep.subr.mxu0 0.0
    %1613 = vmatpush1.msra.mxu0 0.0
    %1614 = vmatprep.subr.mxu0 0.0
    %1615 = vmatpush1.msra.mxu0 0.0
    %1616 = vmatprep.subr.mxu0 0.0
    %1617 = vmatpush1.msra.mxu0 %v1060
    %1618 = vmatprep.subr.mxu0 0.0
    %1619 = vmatpush1.msra.mxu0 %v992
    %1620 = vmatprep.subr.mxu0 0.0
    %1621 = vmatpush2.msra.mxu0 0.0
    %1622 = vmatprep.subr.mxu0 0.0
    %1623 = vmatpush2.msra.mxu0 0.0
    %1624 = vmatprep.subr.mxu0 0.0
    %1625 = vmatpush2.msra.mxu0 0.0
    %1626 = vmatprep.subr.mxu0 0.0
    %1627 = vmatpush2.msra.mxu0 0.0
    %1628 = vmatprep.subr.mxu0 0.0
    %1629 = vmatpush2.msra.mxu0 0.0
    %1630 = vmatprep.subr.mxu0 0.0
    %1631 = vmatpush2.msra.mxu0 0.0
    %1632 = vmatprep.subr.mxu0 0.0
    %1633 = vmatpush2.msra.mxu0 0.0
    %1634 = vmatprep.subr.mxu0 0.0
    %1635 = vmatpush2.msra.mxu0 0.0
    %1636 = vmatprep.subr.mxu0 0.0
    %1637 = vmatpush2.msra.mxu0 0.0
    %1638 = vmatprep.subr.mxu0 0.0
    %1639 = vmatpush2.msra.mxu0 0.0
    %1640 = vmatprep.subr.mxu0 0.0
    %1641 = vmatpush2.msra.mxu0 0.0
    %1642 = vmatprep.subr.mxu0 0.0
    %1643 = vmatpush2.msra.mxu0 0.0
    %1644 = vmatprep.subr.mxu0 0.0
    %1645 = vmatpush2.msra.mxu0 0.0
    %1646 = vmatprep.subr.mxu0 0.0
    %1647 = vmatpush2.msra.mxu0 0.0
    %1648 = vmatprep.subr.mxu0 0.0
    %1649 = vmatpush2.msra.mxu0 0.0
    %1650 = vmatprep.subr.mxu0 0.0
    %1651 = vmatpush2.msra.mxu0 0.0
    %1652 = vmatprep.mubr.f32.mxu0 0.0
    %1653 = vmatmul.mubr.f32.gmra.mxu0 %v1583
    %v1654 = vpop.f32.mrf.mxu0
    %v1655 = vadd.f32 0.0, %v1654
    %v1656 = vpop.f32.mrf.mxu0
    %1657 = vmatprep.mubr.f32.mxu0 0.0
    %1658 = vmatmul.mubr.f32.gmra.mxu0 %v1586
    %v1659 = vpop.f32.mrf.mxu0
    %v1660 = vadd.f32 0.0, %v1659
    %v1661 = vpop.f32.mrf.mxu0
    %1662 = vdwg.mxu0
    %v1664 = vsel %vm1412, %v1497, 0
    %v1667 = vsel %vm1412, %v1498, 0
    %1669 = vmatprep.subr.mxu0 0.0
    %1670 = vmatpush1.msra.mxu0 0.0
    %1671 = vmatprep.subr.mxu0 0.0
    %1672 = vmatpush1.msra.mxu0 0.0
    %1673 = vmatprep.subr.mxu0 0.0
    %1674 = vmatpush1.msra.mxu0 0.0
    %1675 = vmatprep.subr.mxu0 0.0
    %1676 = vmatpush1.msra.mxu0 0.0
    %1677 = vmatprep.subr.mxu0 0.0
    %1678 = vmatpush1.msra.mxu0 0.0
    %1679 = vmatprep.subr.mxu0 0.0
    %1680 = vmatpush1.msra.mxu0 0.0
    %1681 = vmatprep.subr.mxu0 0.0
    %1682 = vmatpush1.msra.mxu0 0.0
    %1683 = vmatprep.subr.mxu0 0.0
    %1684 = vmatpush1.msra.mxu0 0.0
    %1685 = vmatprep.subr.mxu0 0.0
    %1686 = vmatpush1.msra.mxu0 0.0
    %1687 = vmatprep.subr.mxu0 0.0
    %1688 = vmatpush1.msra.mxu0 0.0
    %1689 = vmatprep.subr.mxu0 0.0
    %1690 = vmatpush1.msra.mxu0 0.0
    %1691 = vmatprep.subr.mxu0 0.0
    %1692 = vmatpush1.msra.mxu0 0.0
    %1693 = vmatprep.subr.mxu0 0.0
    %1694 = vmatpush1.msra.mxu0 0.0
    %1695 = vmatprep.subr.mxu0 0.0
    %1696 = vmatpush1.msra.mxu0 0.0
    %1697 = vmatprep.subr.mxu0 0.0
    %1698 = vmatpush1.msra.mxu0 %v1061
    %1699 = vmatprep.subr.mxu0 0.0
    %1700 = vmatpush1.msra.mxu0 %v993
    %1701 = vmatprep.subr.mxu0 0.0
    %1702 = vmatpush2.msra.mxu0 0.0
    %1703 = vmatprep.subr.mxu0 0.0
    %1704 = vmatpush2.msra.mxu0 0.0
    %1705 = vmatprep.subr.mxu0 0.0
    %1706 = vmatpush2.msra.mxu0 0.0
    %1707 = vmatprep.subr.mxu0 0.0
    %1708 = vmatpush2.msra.mxu0 0.0
    %1709 = vmatprep.subr.mxu0 0.0
    %1710 = vmatpush2.msra.mxu0 0.0
    %1711 = vmatprep.subr.mxu0 0.0
    %1712 = vmatpush2.msra.mxu0 0.0
    %1713 = vmatprep.subr.mxu0 0.0
    %1714 = vmatpush2.msra.mxu0 0.0
    %1715 = vmatprep.subr.mxu0 0.0
    %1716 = vmatpush2.msra.mxu0 0.0
    %1717 = vmatprep.subr.mxu0 0.0
    %1718 = vmatpush2.msra.mxu0 0.0
    %1719 = vmatprep.subr.mxu0 0.0
    %1720 = vmatpush2.msra.mxu0 0.0
    %1721 = vmatprep.subr.mxu0 0.0
    %1722 = vmatpush2.msra.mxu0 0.0
    %1723 = vmatprep.subr.mxu0 0.0
    %1724 = vmatpush2.msra.mxu0 0.0
    %1725 = vmatprep.subr.mxu0 0.0
    %1726 = vmatpush2.msra.mxu0 0.0
    %1727 = vmatprep.subr.mxu0 0.0
    %1728 = vmatpush2.msra.mxu0 0.0
    %1729 = vmatprep.subr.mxu0 0.0
    %1730 = vmatpush2.msra.mxu0 0.0
    %1731 = vmatprep.subr.mxu0 0.0
    %1732 = vmatpush2.msra.mxu0 0.0
    %1733 = vmatprep.mubr.f32.mxu0 0.0
    %1734 = vmatmul.mubr.f32.gmra.mxu0 %v1664
    %v1735 = vpop.f32.mrf.mxu0
    %v1736 = vadd.f32 0.0, %v1735
    %v1737 = vpop.f32.mrf.mxu0
    %1738 = vmatprep.mubr.f32.mxu0 0.0
    %1739 = vmatmul.mubr.f32.gmra.mxu0 %v1667
    %v1740 = vpop.f32.mrf.mxu0
    %v1741 = vadd.f32 0.0, %v1740
    %v1742 = vpop.f32.mrf.mxu0
    %1743 = vdwg.mxu0
    %v1745 = vsel %vm1412, %v1499, 0
    %v1748 = vsel %vm1412, %v1500, 0
    %1750 = vmatprep.subr.mxu0 0.0
    %1751 = vmatpush1.msra.mxu0 0.0
    %1752 = vmatprep.subr.mxu0 0.0
    %1753 = vmatpush1.msra.mxu0 0.0
    %1754 = vmatprep.subr.mxu0 0.0
    %1755 = vmatpush1.msra.mxu0 0.0
    %1756 = vmatprep.subr.mxu0 0.0
    %1757 = vmatpush1.msra.mxu0 0.0
    %1758 = vmatprep.subr.mxu0 0.0
    %1759 = vmatpush1.msra.mxu0 0.0
    %1760 = vmatprep.subr.mxu0 0.0
    %1761 = vmatpush1.msra.mxu0 0.0
    %1762 = vmatprep.subr.mxu0 0.0
    %1763 = vmatpush1.msra.mxu0 0.0
    %1764 = vmatprep.subr.mxu0 0.0
    %1765 = vmatpush1.msra.mxu0 0.0
    %1766 = vmatprep.subr.mxu0 0.0
    %1767 = vmatpush1.msra.mxu0 0.0
    %1768 = vmatprep.subr.mxu0 0.0
    %1769 = vmatpush1.msra.mxu0 0.0
    %1770 = vmatprep.subr.mxu0 0.0
    %1771 = vmatpush1.msra.mxu0 0.0
    %1772 = vmatprep.subr.mxu0 0.0
    %1773 = vmatpush1.msra.mxu0 0.0
    %1774 = vmatprep.subr.mxu0 0.0
    %1775 = vmatpush1.msra.mxu0 0.0
    %1776 = vmatprep.subr.mxu0 0.0
    %1777 = vmatpush1.msra.mxu0 0.0
    %1778 = vmatprep.subr.mxu0 0.0
    %1779 = vmatpush1.msra.mxu0 %v1062
    %1780 = vmatprep.subr.mxu0 0.0
    %1781 = vmatpush1.msra.mxu0 %v994
    %1782 = vmatprep.subr.mxu0 0.0
    %1783 = vmatpush2.msra.mxu0 0.0
    %1784 = vmatprep.subr.mxu0 0.0
    %1785 = vmatpush2.msra.mxu0 0.0
    %1786 = vmatprep.subr.mxu0 0.0
    %1787 = vmatpush2.msra.mxu0 0.0
    %1788 = vmatprep.subr.mxu0 0.0
    %1789 = vmatpush2.msra.mxu0 0.0
    %1790 = vmatprep.subr.mxu0 0.0
    %1791 = vmatpush2.msra.mxu0 0.0
    %1792 = vmatprep.subr.mxu0 0.0
    %1793 = vmatpush2.msra.mxu0 0.0
    %1794 = vmatprep.subr.mxu0 0.0
    %1795 = vmatpush2.msra.mxu0 0.0
    %1796 = vmatprep.subr.mxu0 0.0
    %1797 = vmatpush2.msra.mxu0 0.0
    %1798 = vmatprep.subr.mxu0 0.0
    %1799 = vmatpush2.msra.mxu0 0.0
    %1800 = vmatprep.subr.mxu0 0.0
    %1801 = vmatpush2.msra.mxu0 0.0
    %1802 = vmatprep.subr.mxu0 0.0
    %1803 = vmatpush2.msra.mxu0 0.0
    %1804 = vmatprep.subr.mxu0 0.0
    %1805 = vmatpush2.msra.mxu0 0.0
    %1806 = vmatprep.subr.mxu0 0.0
    %1807 = vmatpush2.msra.mxu0 0.0
    %1808 = vmatprep.subr.mxu0 0.0
    %1809 = vmatpush2.msra.mxu0 0.0
    %1810 = vmatprep.subr.mxu0 0.0
    %1811 = vmatpush2.msra.mxu0 0.0
    %1812 = vmatprep.subr.mxu0 0.0
    %1813 = vmatpush2.msra.mxu0 0.0
    %1814 = vmatprep.mubr.f32.mxu0 0.0
    %1815 = vmatmul.mubr.f32.gmra.mxu0 %v1745
    %v1816 = vpop.f32.mrf.mxu0
    %v1817 = vadd.f32 0.0, %v1816
    %v1818 = vpop.f32.mrf.mxu0
    %1819 = vmatprep.mubr.f32.mxu0 0.0
    %1820 = vmatmul.mubr.f32.gmra.mxu0 %v1748
    %v1821 = vpop.f32.mrf.mxu0
    %v1822 = vadd.f32 0.0, %v1821
    %v1823 = vpop.f32.mrf.mxu0
    %1824 = vdwg.mxu0
    %v1825 = vcombine.low %v1574, %v1736
    %v1826 = vcombine.high %v1574, %v1736
    %v1828 = vunpack.c.l.s4 1983009808
    %v1829 = vunpack.c.0.s8 %v1828
    %v1830 = vlaneseq
    %v1831 = vshrl.u32 %v1830, 7
    %v1832 = vsub.s32 %v1829, %v1831
    %v1833 = vrot.slane %v1825, %v1832
    %v1835 = vunpack.c.l.s4 1983009808
    %v1836 = vunpack.c.0.s8 %v1835
    %v1837 = vlaneseq
    %v1838 = vshrl.u32 %v1837, 7
    %v1839 = vsub.s32 %v1836, %v1838
    %v1840 = vrot.slane %v1826, %v1839
    %v1841 = vcombine.low %v1655, %v1817
    %v1842 = vcombine.high %v1655, %v1817
    %v1844 = vunpack.c.l.s4 1983009808
    %v1845 = vunpack.c.0.s8 %v1844
    %v1846 = vlaneseq
    %v1847 = vshrl.u32 %v1846, 7
    %v1848 = vsub.s32 %v1845, %v1847
    %v1849 = vrot.slane %v1841, %v1848
    %v1851 = vunpack.c.l.s4 1983009808
    %v1852 = vunpack.c.0.s8 %v1851
    %v1853 = vlaneseq
    %v1854 = vshrl.u32 %v1853, 7
    %v1855 = vsub.s32 %v1852, %v1854
    %v1856 = vrot.slane %v1842, %v1855
    %v1857 = vcombine.low %v1833, %v1849
    %v1858 = vcombine.high %v1833, %v1849
    %v1860 = vunpack.c.l.s4 1934713408
    %v1861 = vunpack.c.0.s8 %v1860
    %v1862 = vlaneseq
    %v1863 = vshrl.u32 %v1862, 7
    %v1864 = vsub.s32 %v1861, %v1863
    %v1865 = vrot.slane %v1857, %v1864
    %v1867 = vunpack.c.l.s4 1934713408
    %v1868 = vunpack.c.0.s8 %v1867
    %v1869 = vlaneseq
    %v1870 = vshrl.u32 %v1869, 7
    %v1871 = vsub.s32 %v1868, %v1870
    %v1872 = vrot.slane %v1858, %v1871
    %v1873 = vcombine.low %v1840, %v1856
    %v1874 = vcombine.high %v1840, %v1856
    %v1876 = vunpack.c.l.s4 1934713408
    %v1877 = vunpack.c.0.s8 %v1876
    %v1878 = vlaneseq
    %v1879 = vshrl.u32 %v1878, 7
    %v1880 = vsub.s32 %v1877, %v1879
    %v1881 = vrot.slane %v1873, %v1880
    %v1883 = vunpack.c.l.s4 1934713408
    %v1884 = vunpack.c.0.s8 %v1883
    %v1885 = vlaneseq
    %v1886 = vshrl.u32 %v1885, 7
    %v1887 = vsub.s32 %v1884, %v1886
    %v1888 = vrot.slane %v1874, %v1887
    %v1889 = vcombine.high %v1865, 0.0
    %v1890 = vcombine.high %v1872, 0.0
    %v1891 = vcombine.high %v1881, 0.0
    %v1892 = vcombine.high %v1888, 0.0
    %v1893 = vcombine.low %v1579, %v1741
    %v1894 = vcombine.high %v1579, %v1741
    %v1896 = vunpack.c.l.s4 1983009808
    %v1897 = vunpack.c.0.s8 %v1896
    %v1898 = vlaneseq
    %v1899 = vshrl.u32 %v1898, 7
    %v1900 = vsub.s32 %v1897, %v1899
    %v1901 = vrot.slane %v1893, %v1900
    %v1903 = vunpack.c.l.s4 1983009808
    %v1904 = vunpack.c.0.s8 %v1903
    %v1905 = vlaneseq
    %v1906 = vshrl.u32 %v1905, 7
    %v1907 = vsub.s32 %v1904, %v1906
    %v1908 = vrot.slane %v1894, %v1907
    %v1909 = vcombine.low %v1660, %v1822
    %v1910 = vcombine.high %v1660, %v1822
    %v1912 = vunpack.c.l.s4 1983009808
    %v1913 = vunpack.c.0.s8 %v1912
    %v1914 = vlaneseq
    %v1915 = vshrl.u32 %v1914, 7
    %v1916 = vsub.s32 %v1913, %v1915
    %v1917 = vrot.slane %v1909, %v1916
    %v1919 = vunpack.c.l.s4 1983009808
    %v1920 = vunpack.c.0.s8 %v1919
    %v1921 = vlaneseq
    %v1922 = vshrl.u32 %v1921, 7
    %v1923 = vsub.s32 %v1920, %v1922
    %v1924 = vrot.slane %v1910, %v1923
    %v1925 = vcombine.low %v1901, %v1917
    %v1926 = vcombine.high %v1901, %v1917
    %v1928 = vunpack.c.l.s4 1934713408
    %v1929 = vunpack.c.0.s8 %v1928
    %v1930 = vlaneseq
    %v1931 = vshrl.u32 %v1930, 7
    %v1932 = vsub.s32 %v1929, %v1931
    %v1933 = vrot.slane %v1925, %v1932
    %v1935 = vunpack.c.l.s4 1934713408
    %v1936 = vunpack.c.0.s8 %v1935
    %v1937 = vlaneseq
    %v1938 = vshrl.u32 %v1937, 7
    %v1939 = vsub.s32 %v1936, %v1938
    %v1940 = vrot.slane %v1926, %v1939
    %v1941 = vcombine.low %v1908, %v1924
    %v1942 = vcombine.high %v1908, %v1924
    %v1944 = vunpack.c.l.s4 1934713408
    %v1945 = vunpack.c.0.s8 %v1944
    %v1946 = vlaneseq
    %v1947 = vshrl.u32 %v1946, 7
    %v1948 = vsub.s32 %v1945, %v1947
    %v1949 = vrot.slane %v1941, %v1948
    %v1951 = vunpack.c.l.s4 1934713408
    %v1952 = vunpack.c.0.s8 %v1951
    %v1953 = vlaneseq
    %v1954 = vshrl.u32 %v1953, 7
    %v1955 = vsub.s32 %v1952, %v1954
    %v1956 = vrot.slane %v1942, %v1955
    %v1957 = vcombine.high %v1933, 0.0
    %v1958 = vcombine.high %v1940, 0.0
    %v1959 = vcombine.high %v1949, 0.0
    %v1960 = vcombine.high %v1956, 0.0
    %v1961 = vcombine.low %v1865, %v1872
    %v1963 = vunpack.c.l.s4 1983009808
    %v1964 = vunpack.c.0.s8 %v1963
    %v1965 = vlaneseq
    %v1966 = vshrl.u32 %v1965, 7
    %v1967 = vsub.s32 %v1964, %v1966
    %v1968 = vrot.slane %v1961, %v1967
    %v1969 = vcombine.low %v1889, %v1890
    %v1971 = vunpack.c.l.s4 1983009808
    %v1972 = vunpack.c.0.s8 %v1971
    %v1973 = vlaneseq
    %v1974 = vshrl.u32 %v1973, 7
    %v1975 = vsub.s32 %v1972, %v1974
    %v1976 = vrot.slane %v1969, %v1975
    %v1977 = vcombine.low %v1881, %v1888
    %v1979 = vunpack.c.l.s4 1983009808
    %v1980 = vunpack.c.0.s8 %v1979
    %v1981 = vlaneseq
    %v1982 = vshrl.u32 %v1981, 7
    %v1983 = vsub.s32 %v1980, %v1982
    %v1984 = vrot.slane %v1977, %v1983
    %v1985 = vcombine.low %v1891, %v1892
    %v1987 = vunpack.c.l.s4 1983009808
    %v1988 = vunpack.c.0.s8 %v1987
    %v1989 = vlaneseq
    %v1990 = vshrl.u32 %v1989, 7
    %v1991 = vsub.s32 %v1988, %v1990
    %v1992 = vrot.slane %v1985, %v1991
    %v1993 = vcombine.low %v1968, %v1976
    %v1994 = vcombine.high %v1968, %v1976
    %v1996 = vunpack.c.l.s4 1934713408
    %v1997 = vunpack.c.0.s8 %v1996
    %v1998 = vlaneseq
    %v1999 = vshrl.u32 %v1998, 7
    %v2000 = vsub.s32 %v1997, %v1999
    %v2001 = vrot.slane %v1993, %v2000
    %v2003 = vunpack.c.l.s4 1934713408
    %v2004 = vunpack.c.0.s8 %v2003
    %v2005 = vlaneseq
    %v2006 = vshrl.u32 %v2005, 7
    %v2007 = vsub.s32 %v2004, %v2006
    %v2008 = vrot.slane %v1994, %v2007
    %v2009 = vcombine.low %v1984, %v1992
    %v2010 = vcombine.high %v1984, %v1992
    %v2012 = vunpack.c.l.s4 1934713408
    %v2013 = vunpack.c.0.s8 %v2012
    %v2014 = vlaneseq
    %v2015 = vshrl.u32 %v2014, 7
    %v2016 = vsub.s32 %v2013, %v2015
    %v2017 = vrot.slane %v2009, %v2016
    %v2019 = vunpack.c.l.s4 1934713408
    %v2020 = vunpack.c.0.s8 %v2019
    %v2021 = vlaneseq
    %v2022 = vshrl.u32 %v2021, 7
    %v2023 = vsub.s32 %v2020, %v2022
    %v2024 = vrot.slane %v2010, %v2023
    %v2025 = vcombine.low %v2001, %v2017
    %v2026 = vcombine.high %v2001, %v2017
    %v2027 = vcombine.low %v2008, %v2024
    %v2028 = vcombine.high %v2008, %v2024
    %v2029 = vcombine.low %v1933, %v1940
    %v2031 = vunpack.c.l.s4 1983009808
    %v2032 = vunpack.c.0.s8 %v2031
    %v2033 = vlaneseq
    %v2034 = vshrl.u32 %v2033, 7
    %v2035 = vsub.s32 %v2032, %v2034
    %v2036 = vrot.slane %v2029, %v2035
    %v2037 = vcombine.low %v1957, %v1958
    %v2039 = vunpack.c.l.s4 1983009808
    %v2040 = vunpack.c.0.s8 %v2039
    %v2041 = vlaneseq
    %v2042 = vshrl.u32 %v2041, 7
    %v2043 = vsub.s32 %v2040, %v2042
    %v2044 = vrot.slane %v2037, %v2043
    %v2045 = vcombine.low %v1949, %v1956
    %v2047 = vunpack.c.l.s4 1983009808
    %v2048 = vunpack.c.0.s8 %v2047
    %v2049 = vlaneseq
    %v2050 = vshrl.u32 %v2049, 7
    %v2051 = vsub.s32 %v2048, %v2050
    %v2052 = vrot.slane %v2045, %v2051
    %v2053 = vcombine.low %v1959, %v1960
    %v2055 = vunpack.c.l.s4 1983009808
    %v2056 = vunpack.c.0.s8 %v2055
    %v2057 = vlaneseq
    %v2058 = vshrl.u32 %v2057, 7
    %v2059 = vsub.s32 %v2056, %v2058
    %v2060 = vrot.slane %v2053, %v2059
    %v2061 = vcombine.low %v2036, %v2044
    %v2062 = vcombine.high %v2036, %v2044
    %v2064 = vunpack.c.l.s4 1934713408
    %v2065 = vunpack.c.0.s8 %v2064
    %v2066 = vlaneseq
    %v2067 = vshrl.u32 %v2066, 7
    %v2068 = vsub.s32 %v2065, %v2067
    %v2069 = vrot.slane %v2061, %v2068
    %v2071 = vunpack.c.l.s4 1934713408
    %v2072 = vunpack.c.0.s8 %v2071
    %v2073 = vlaneseq
    %v2074 = vshrl.u32 %v2073, 7
    %v2075 = vsub.s32 %v2072, %v2074
    %v2076 = vrot.slane %v2062, %v2075
    %v2077 = vcombine.low %v2052, %v2060
    %v2078 = vcombine.high %v2052, %v2060
    %v2080 = vunpack.c.l.s4 1934713408
    %v2081 = vunpack.c.0.s8 %v2080
    %v2082 = vlaneseq
    %v2083 = vshrl.u32 %v2082, 7
    %v2084 = vsub.s32 %v2081, %v2083
    %v2085 = vrot.slane %v2077, %v2084
    %v2087 = vunpack.c.l.s4 1934713408
    %v2088 = vunpack.c.0.s8 %v2087
    %v2089 = vlaneseq
    %v2090 = vshrl.u32 %v2089, 7
    %v2091 = vsub.s32 %v2088, %v2090
    %v2092 = vrot.slane %v2078, %v2091
    %v2093 = vcombine.low %v2069, %v2085
    %v2094 = vcombine.high %v2069, %v2085
    %v2095 = vcombine.low %v2076, %v2092
    %v2096 = vcombine.high %v2076, %v2092
    %2099 = vrot.lane.b32.xlu0 %v2026, 8
    %v2100 = vpop.permute.xlu0 %2099
    %2101 = vrot.lane.b32.xlu0 %v2094, 8
    %v2102 = vpop.permute.xlu0 %2101
    %2107 = vrot.lane.b32.xlu0 %v2027, 16
    %v2108 = vpop.permute.xlu0 %2107
    %2109 = vrot.lane.b32.xlu0 %v2095, 16
    %v2110 = vpop.permute.xlu0 %2109
    %2115 = vrot.lane.b32.xlu0 %v2028, 24
    %v2116 = vpop.permute.xlu0 %2115
    %2117 = vrot.lane.b32.xlu0 %v2096, 24
    %v2118 = vpop.permute.xlu0 %2117
    %v2121 = vsel %vm1063, %v2025, %v2100
    %v2122 = vsel %vm1063, %v2093, %v2102
    %v2123 = vsel %vm1412, %v2121, %v2108
    %v2124 = vsel %vm1412, %v2122, %v2110
    %vm2125 = vcmask 195584
    %v2126 = vsel %vm2125, %v2123, %v2116
    %v2127 = vsel %vm2125, %v2124, %v2118
    %v2128 = vld [vmem:[%s3] sm:$0xff]
    %v2129 = vld [vmem:[%s3 + $0x8] sm:$0xff]
    %v2130 = vld [vmem:[%s3 + $0x10] sm:$0xff]
    %v2131 = vld [vmem:[%s3 + $0x18] sm:$0xff]
    %v2133 = vsel %vm47, %v2126, 0
    %v2136 = vsel %vm47, %v2127, 0
    %2138 = vmatprep.subr.mxu0 0.0
    %2139 = vmatpush1.msra.mxu0 0.0
    %2140 = vmatprep.subr.mxu0 0.0
    %2141 = vmatpush1.msra.mxu0 0.0
    %2142 = vmatprep.subr.mxu0 0.0
    %2143 = vmatpush1.msra.mxu0 0.0
    %2144 = vmatprep.subr.mxu0 0.0
    %2145 = vmatpush1.msra.mxu0 0.0
    %2146 = vmatprep.subr.mxu0 0.0
    %2147 = vmatpush1.msra.mxu0 0.0
    %2148 = vmatprep.subr.mxu0 0.0
    %2149 = vmatpush1.msra.mxu0 0.0
    %2150 = vmatprep.subr.mxu0 0.0
    %2151 = vmatpush1.msra.mxu0 0.0
    %2152 = vmatprep.subr.mxu0 0.0
    %2153 = vmatpush1.msra.mxu0 0.0
    %2154 = vmatprep.subr.mxu0 0.0
    %2155 = vmatpush1.msra.mxu0 0.0
    %2156 = vmatprep.subr.mxu0 0.0
    %2157 = vmatpush1.msra.mxu0 0.0
    %2158 = vmatprep.subr.mxu0 0.0
    %2159 = vmatpush1.msra.mxu0 0.0
    %2160 = vmatprep.subr.mxu0 0.0
    %2161 = vmatpush1.msra.mxu0 0.0
    %2162 = vmatprep.subr.mxu0 0.0
    %2163 = vmatpush1.msra.mxu0 %v2131
    %2164 = vmatprep.subr.mxu0 0.0
    %2165 = vmatpush1.msra.mxu0 %v2130
    %2166 = vmatprep.subr.mxu0 0.0
    %2167 = vmatpush1.msra.mxu0 %v2129
    %2168 = vmatprep.subr.mxu0 0.0
    %2169 = vmatpush1.msra.mxu0 %v2128
    %2170 = vmatprep.subr.mxu0 0.0
    %2171 = vmatpush2.msra.mxu0 0.0
    %2172 = vmatprep.subr.mxu0 0.0
    %2173 = vmatpush2.msra.mxu0 0.0
    %2174 = vmatprep.subr.mxu0 0.0
    %2175 = vmatpush2.msra.mxu0 0.0
    %2176 = vmatprep.subr.mxu0 0.0
    %2177 = vmatpush2.msra.mxu0 0.0
    %2178 = vmatprep.subr.mxu0 0.0
    %2179 = vmatpush2.msra.mxu0 0.0
    %2180 = vmatprep.subr.mxu0 0.0
    %2181 = vmatpush2.msra.mxu0 0.0
    %2182 = vmatprep.subr.mxu0 0.0
    %2183 = vmatpush2.msra.mxu0 0.0
    %2184 = vmatprep.subr.mxu0 0.0
    %2185 = vmatpush2.msra.mxu0 0.0
    %2186 = vmatprep.subr.mxu0 0.0
    %2187 = vmatpush2.msra.mxu0 0.0
    %2188 = vmatprep.subr.mxu0 0.0
    %2189 = vmatpush2.msra.mxu0 0.0
    %2190 = vmatprep.subr.mxu0 0.0
    %2191 = vmatpush2.msra.mxu0 0.0
    %2192 = vmatprep.subr.mxu0 0.0
    %2193 = vmatpush2.msra.mxu0 0.0
    %2194 = vmatprep.subr.mxu0 0.0
    %2195 = vmatpush2.msra.mxu0 0.0
    %2196 = vmatprep.subr.mxu0 0.0
    %2197 = vmatpush2.msra.mxu0 0.0
    %2198 = vmatprep.subr.mxu0 0.0
    %2199 = vmatpush2.msra.mxu0 0.0
    %2200 = vmatprep.subr.mxu0 0.0
    %2201 = vmatpush2.msra.mxu0 0.0
    %2202 = vmatprep.mubr.f32.mxu0 0.0
    %2203 = vmatmul.mubr.f32.gmra.mxu0 %v2133
    %v2204 = vpop.f32.mrf.mxu0
    %v2205 = vadd.f32 0.0, %v2204
    %v2206 = vpop.f32.mrf.mxu0
    %2207 = vmatprep.mubr.f32.mxu0 0.0
    %2208 = vmatmul.mubr.f32.gmra.mxu0 %v2136
    %v2209 = vpop.f32.mrf.mxu0
    %v2210 = vadd.f32 0.0, %v2209
    %v2211 = vpop.f32.mrf.mxu0
    %2212 = vdwg.mxu0
    %v2213 = vadd.f32 %v42, %v2205
    %v2214 = vadd.f32 %v43, %v2210
    %v2215 = vlaneseq
    %v2216 = vshrl.u32 %v2215, 7
    %v2217 = vsub.s32 4, %v2216
    %v2218 = vrot.slane %v46, %v2217
    %v2219 = vadd.f32 %v2213, %v2218
    %v2220 = vadd.f32 %v2214, %v2218
    %v2221 = vsel %vm47, %v2219, 0.0
    %2222 = vadd.xlane.f32.xlu0 %v2221
    %v2223 = vpop.xlane.xlu0 %2222
    %v2224 = vsel %vm47, %v2220, 0.0
    %2225 = vadd.xlane.f32.xlu0 %v2224
    %v2226 = vpop.xlane.xlu0 %2225
    %v2227 = vmul.f32 %v2223, %v54
    %v2228 = vmul.f32 %v2226, %v54
    %v2229 = vsub.f32 %v2219, %v2227
    %v2230 = vsub.f32 %v2220, %v2228
    %v2231 = vmul.f32 %v2229, %v2229
    %v2232 = vmul.f32 %v2230, %v2230
    %v2233 = vsel %vm47, %v2231, 0.0
    %2234 = vadd.xlane.f32.xlu0 %v2233
    %v2235 = vpop.xlane.xlu0 %2234
    %v2236 = vsel %vm47, %v2232, 0.0
    %2237 = vadd.xlane.f32.xlu0 %v2236
    %v2238 = vpop.xlane.xlu0 %2237
    %v2239 = vmul.f32 %v2235, %v54
    %v2240 = vmul.f32 %v2238, %v54
    %v2241 = vadd.f32 %v2239, 1e-05
    %v2242 = vadd.f32 %v2240, 1e-05
    %v2243 = vrsqrt.pop %v2241
    %v2244 = vrsqrt.pop %v2242
    %v2245 = vmul.f32 %v2229, %v2243
    %v2246 = vmul.f32 %v2230, %v2244
    %v2247 = vlaneseq
    %v2248 = vshrl.u32 %v2247, 7
    %v2249 = vsub.s32 2, %v2248
    %v2250 = vrot.slane %v46, %v2249
    %v2251 = vmul.f32 %v2245, %v2250
    %v2252 = vmul.f32 %v2246, %v2250
    %v2253 = vlaneseq
    %v2254 = vshrl.u32 %v2253, 7
    %v2255 = vsub.s32 3, %v2254
    %v2256 = vrot.slane %v46, %v2255
    %v2257 = vadd.f32 %v2251, %v2256
    %v2258 = vadd.f32 %v2252, %v2256
    %v2259 = vld [vmem:[%s4] sm:$0xff]
    %v2260 = vld [vmem:[%s4 + $0x8] sm:$0xff]
    %v2261 = vld [vmem:[%s4 + $0x10] sm:$0xff]
    %v2262 = vld [vmem:[%s4 + $0x18] sm:$0xff]
    %v2263 = vld [vmem:[%s7] sm:$0x1]
    %v2265 = vlaneseq
    %v2266 = vshrl.u32 %v2265, 7
    %v2267 = vsub.s32 0, %v2266
    %v2268 = vrot.slane %v2263, %v2267
    %v2271 = vsel %vm47, %v2257, 0
    %v2274 = vsel %vm47, %v2258, 0
    %2276 = vmatprep.subr.mxu0 0.0
    %2277 = vmatpush1.msra.mxu0 0.0
    %2278 = vmatprep.subr.mxu0 0.0
    %2279 = vmatpush1.msra.mxu0 0.0
    %2280 = vmatprep.subr.mxu0 0.0
    %2281 = vmatpush1.msra.mxu0 0.0
    %2282 = vmatprep.subr.mxu0 0.0
    %2283 = vmatpush1.msra.mxu0 0.0
    %2284 = vmatprep.subr.mxu0 0.0
    %2285 = vmatpush1.msra.mxu0 0.0
    %2286 = vmatprep.subr.mxu0 0.0
    %2287 = vmatpush1.msra.mxu0 0.0
    %2288 = vmatprep.subr.mxu0 0.0
    %2289 = vmatpush1.msra.mxu0 0.0
    %2290 = vmatprep.subr.mxu0 0.0
    %2291 = vmatpush1.msra.mxu0 0.0
    %2292 = vmatprep.subr.mxu0 0.0
    %2293 = vmatpush1.msra.mxu0 0.0
    %2294 = vmatprep.subr.mxu0 0.0
    %2295 = vmatpush1.msra.mxu0 0.0
    %2296 = vmatprep.subr.mxu0 0.0
    %2297 = vmatpush1.msra.mxu0 0.0
    %2298 = vmatprep.subr.mxu0 0.0
    %2299 = vmatpush1.msra.mxu0 0.0
    %2300 = vmatprep.subr.mxu0 0.0
    %2301 = vmatpush1.msra.mxu0 %v2262
    %2302 = vmatprep.subr.mxu0 0.0
    %2303 = vmatpush1.msra.mxu0 %v2261
    %2304 = vmatprep.subr.mxu0 0.0
    %2305 = vmatpush1.msra.mxu0 %v2260
    %2306 = vmatprep.subr.mxu0 0.0
    %2307 = vmatpush1.msra.mxu0 %v2259
    %2308 = vmatprep.subr.mxu0 0.0
    %2309 = vmatpush2.msra.mxu0 0.0
    %2310 = vmatprep.subr.mxu0 0.0
    %2311 = vmatpush2.msra.mxu0 0.0
    %2312 = vmatprep.subr.mxu0 0.0
    %2313 = vmatpush2.msra.mxu0 0.0
    %2314 = vmatprep.subr.mxu0 0.0
    %2315 = vmatpush2.msra.mxu0 0.0
    %2316 = vmatprep.subr.mxu0 0.0
    %2317 = vmatpush2.msra.mxu0 0.0
    %2318 = vmatprep.subr.mxu0 0.0
    %2319 = vmatpush2.msra.mxu0 0.0
    %2320 = vmatprep.subr.mxu0 0.0
    %2321 = vmatpush2.msra.mxu0 0.0
    %2322 = vmatprep.subr.mxu0 0.0
    %2323 = vmatpush2.msra.mxu0 0.0
    %2324 = vmatprep.subr.mxu0 0.0
    %2325 = vmatpush2.msra.mxu0 0.0
    %2326 = vmatprep.subr.mxu0 0.0
    %2327 = vmatpush2.msra.mxu0 0.0
    %2328 = vmatprep.subr.mxu0 0.0
    %2329 = vmatpush2.msra.mxu0 0.0
    %2330 = vmatprep.subr.mxu0 0.0
    %2331 = vmatpush2.msra.mxu0 0.0
    %2332 = vmatprep.subr.mxu0 0.0
    %2333 = vmatpush2.msra.mxu0 0.0
    %2334 = vmatprep.subr.mxu0 0.0
    %2335 = vmatpush2.msra.mxu0 0.0
    %2336 = vmatprep.subr.mxu0 0.0
    %2337 = vmatpush2.msra.mxu0 0.0
    %2338 = vmatprep.subr.mxu0 0.0
    %2339 = vmatpush2.msra.mxu0 0.0
    %2340 = vmatprep.mubr.f32.mxu0 0.0
    %2341 = vmatmul.mubr.f32.gmra.mxu0 %v2271
    %v2342 = vpop.f32.mrf.mxu0
    %v2343 = vadd.f32 %v2268, %v2342
    %v2344 = vpop.f32.mrf.mxu0
    %2345 = vmatprep.mubr.f32.mxu0 0.0
    %2346 = vmatmul.mubr.f32.gmra.mxu0 %v2274
    %v2347 = vpop.f32.mrf.mxu0
    %v2348 = vadd.f32 %v2268, %v2347
    %v2349 = vpop.f32.mrf.mxu0
    %2350 = vdwg.mxu0
    %v2351 = vmul.f32 %v2343, 0.5
    %v2352 = vmul.f32 %v2348, 0.5
    %v2353 = vmul.f32 %v2343, %v2343
    %v2354 = vmul.f32 %v2348, %v2348
    %v2355 = vmul.f32 %v2343, %v2353
    %v2356 = vmul.f32 %v2348, %v2354
    %v2357 = vmul.f32 %v2355, 0.044715
    %v2358 = vmul.f32 %v2356, 0.044715
    %v2359 = vadd.f32 %v2343, %v2357
    %v2360 = vadd.f32 %v2348, %v2358
    %v2361 = vmul.f32 %v2359, 0.7978846
    %v2362 = vmul.f32 %v2360, 0.7978846
    %v2363 = vtanh.pop %v2361
    %v2364 = vtanh.pop %v2362
    %v2365 = vadd.f32 %v2363, 1.0
    %v2366 = vadd.f32 %v2364, 1.0
    %v2367 = vmul.f32 %v2351, %v2365
    %v2368 = vmul.f32 %v2352, %v2366
    %v2369 = vld [vmem:[%s5] sm:$0xff]
    %v2370 = vld [vmem:[%s5 + $0x8] sm:$0xff]
    %v2371 = vld [vmem:[%s5 + $0x10] sm:$0xff]
    %v2372 = vld [vmem:[%s5 + $0x18] sm:$0xff]
    %v2373 = vld [vmem:[%s5 + $0x20] sm:$0xff]
    %v2374 = vld [vmem:[%s5 + $0x28] sm:$0xff]
    %v2375 = vld [vmem:[%s5 + $0x30] sm:$0xff]
    %v2376 = vld [vmem:[%s5 + $0x38] sm:$0xff]
    %v2377 = vld [vmem:[%s5 + $0x40] sm:$0xff]
    %v2378 = vld [vmem:[%s5 + $0x48] sm:$0xff]
    %v2379 = vld [vmem:[%s5 + $0x50] sm:$0xff]
    %v2380 = vld [vmem:[%s5 + $0x58] sm:$0xff]
    %v2381 = vld [vmem:[%s5 + $0x60] sm:$0xff]
    %v2382 = vld [vmem:[%s5 + $0x68] sm:$0xff]
    %v2383 = vld [vmem:[%s5 + $0x70] sm:$0xff]
    %v2384 = vld [vmem:[%s5 + $0x78] sm:$0xff]
    %2385 = vmatprep.subr.mxu0 0.0
    %2386 = vmatpush1.msra.mxu0 %v2384
    %2387 = vmatprep.subr.mxu0 0.0
    %2388 = vmatpush1.msra.mxu0 %v2383
    %2389 = vmatprep.subr.mxu0 0.0
    %2390 = vmatpush1.msra.mxu0 %v2382
    %2391 = vmatprep.subr.mxu0 0.0
    %2392 = vmatpush1.msra.mxu0 %v2381
    %2393 = vmatprep.subr.mxu0 0.0
    %2394 = vmatpush1.msra.mxu0 %v2380
    %2395 = vmatprep.subr.mxu0 0.0
    %2396 = vmatpush1.msra.mxu0 %v2379
    %2397 = vmatprep.subr.mxu0 0.0
    %2398 = vmatpush1.msra.mxu0 %v2378
    %2399 = vmatprep.subr.mxu0 0.0
    %2400 = vmatpush1.msra.mxu0 %v2377
    %2401 = vmatprep.subr.mxu0 0.0
    %2402 = vmatpush1.msra.mxu0 %v2376
    %2403 = vmatprep.subr.mxu0 0.0
    %2404 = vmatpush1.msra.mxu0 %v2375
    %2405 = vmatprep.subr.mxu0 0.0
    %2406 = vmatpush1.msra.mxu0 %v2374
    %2407 = vmatprep.subr.mxu0 0.0
    %2408 = vmatpush1.msra.mxu0 %v2373
    %2409 = vmatprep.subr.mxu0 0.0
    %2410 = vmatpush1.msra.mxu0 %v2372
    %2411 = vmatprep.subr.mxu0 0.0
    %2412 = vmatpush1.msra.mxu0 %v2371
    %2413 = vmatprep.subr.mxu0 0.0
    %2414 = vmatpush1.msra.mxu0 %v2370
    %2415 = vmatprep.subr.mxu0 0.0
    %2416 = vmatpush1.msra.mxu0 %v2369
    %2417 = vmatprep.subr.mxu0 0.0
    %2418 = vmatpush2.msra.mxu0 0.0
    %2419 = vmatprep.subr.mxu0 0.0
    %2420 = vmatpush2.msra.mxu0 0.0
    %2421 = vmatprep.subr.mxu0 0.0
    %2422 = vmatpush2.msra.mxu0 0.0
    %2423 = vmatprep.subr.mxu0 0.0
    %2424 = vmatpush2.msra.mxu0 0.0
    %2425 = vmatprep.subr.mxu0 0.0
    %2426 = vmatpush2.msra.mxu0 0.0
    %2427 = vmatprep.subr.mxu0 0.0
    %2428 = vmatpush2.msra.mxu0 0.0
    %2429 = vmatprep.subr.mxu0 0.0
    %2430 = vmatpush2.msra.mxu0 0.0
    %2431 = vmatprep.subr.mxu0 0.0
    %2432 = vmatpush2.msra.mxu0 0.0
    %2433 = vmatprep.subr.mxu0 0.0
    %2434 = vmatpush2.msra.mxu0 0.0
    %2435 = vmatprep.subr.mxu0 0.0
    %2436 = vmatpush2.msra.mxu0 0.0
    %2437 = vmatprep.subr.mxu0 0.0
    %2438 = vmatpush2.msra.mxu0 0.0
    %2439 = vmatprep.subr.mxu0 0.0
    %2440 = vmatpush2.msra.mxu0 0.0
    %2441 = vmatprep.subr.mxu0 0.0
    %2442 = vmatpush2.msra.mxu0 0.0
    %2443 = vmatprep.subr.mxu0 0.0
    %2444 = vmatpush2.msra.mxu0 0.0
    %2445 = vmatprep.subr.mxu0 0.0
    %2446 = vmatpush2.msra.mxu0 0.0
    %2447 = vmatprep.subr.mxu0 0.0
    %2448 = vmatpush2.msra.mxu0 0.0
    %2449 = vmatprep.mubr.f32.mxu0 0.0
    %2450 = vmatmul.mubr.f32.gmra.mxu0 %v2367
    %v2451 = vpop.f32.mrf.mxu0
    %v2452 = vadd.f32 0.0, %v2451
    %v2453 = vpop.f32.mrf.mxu0
    %2454 = vmatprep.mubr.f32.mxu0 0.0
    %2455 = vmatmul.mubr.f32.gmra.mxu0 %v2368
    %v2456 = vpop.f32.mrf.mxu0
    %v2457 = vadd.f32 0.0, %v2456
    %v2458 = vpop.f32.mrf.mxu0
    %2459 = vdwg.mxu0
    %v2460 = vadd.f32 %v2219, %v2452
    %v2461 = vadd.f32 %v2220, %v2457
    %v2462 = vlaneseq
    %v2463 = vshrl.u32 %v2462, 7
    %v2464 = vsub.s32 5, %v2463
    %v2465 = vrot.slane %v46, %v2464
    %v2466 = vadd.f32 %v2460, %v2465
    %v2467 = vadd.f32 %v2461, %v2465
    %s2468 = scalar_lea.vmem %s8, 8
    %v2469 = vld [vmem:[%s2468] sm:$0x3f]
    %v2470 = vsel %vm47, %v2466, 0.0
    %2471 = vadd.xlane.f32.xlu0 %v2470
    %v2472 = vpop.xlane.xlu0 %2471
    %v2473 = vsel %vm47, %v2467, 0.0
    %2474 = vadd.xlane.f32.xlu0 %v2473
    %v2475 = vpop.xlane.xlu0 %2474
    %v2476 = vmul.f32 %v2472, %v54
    %v2477 = vmul.f32 %v2475, %v54
    %v2478 = vsub.f32 %v2466, %v2476
    %v2479 = vsub.f32 %v2467, %v2477
    %v2480 = vmul.f32 %v2478, %v2478
    %v2481 = vmul.f32 %v2479, %v2479
    %v2482 = vsel %vm47, %v2480, 0.0
    %2483 = vadd.xlane.f32.xlu0 %v2482
    %v2484 = vpop.xlane.xlu0 %2483
    %v2485 = vsel %vm47, %v2481, 0.0
    %2486 = vadd.xlane.f32.xlu0 %v2485
    %v2487 = vpop.xlane.xlu0 %2486
    %v2488 = vmul.f32 %v2484, %v54
    %v2489 = vmul.f32 %v2487, %v54
    %v2490 = vadd.f32 %v2488, 1e-05
    %v2491 = vadd.f32 %v2489, 1e-05
    %v2492 = vrsqrt.pop %v2490
    %v2493 = vrsqrt.pop %v2491
    %v2494 = vmul.f32 %v2478, %v2492
    %v2495 = vmul.f32 %v2479, %v2493
    %v2496 = vlaneseq
    %v2497 = vshrl.u32 %v2496, 7
    %v2498 = vsub.s32 0, %v2497
    %v2499 = vrot.slane %v2469, %v2498
    %v2500 = vmul.f32 %v2494, %v2499
    %v2501 = vmul.f32 %v2495, %v2499
    %v2502 = vlaneseq
    %v2503 = vshrl.u32 %v2502, 7
    %v2504 = vsub.s32 1, %v2503
    %v2505 = vrot.slane %v2469, %v2504
    %v2506 = vadd.f32 %v2500, %v2505
    %v2507 = vadd.f32 %v2501, %v2505
    %s2508 = scalar_lea.vmem %s2, 32
    %v2509 = vld [vmem:[%s2508] sm:$0xff]
    %v2510 = vld [vmem:[%s2508 + $0x8] sm:$0xff]
    %v2511 = vld [vmem:[%s2508 + $0x10] sm:$0xff]
    %v2512 = vld [vmem:[%s2508 + $0x18] sm:$0xff]
    %s2513 = scalar_lea.vmem %s6, 1
    %v2514 = vld [vmem:[%s2513] sm:$0x1]
    %v2516 = vlaneseq
    %v2517 = vshrl.u32 %v2516, 7
    %v2518 = vsub.s32 0, %v2517
    %v2519 = vrot.slane %v2514, %v2518
    %v2522 = vsel %vm47, %v2506, 0
    %v2525 = vsel %vm47, %v2507, 0
    %2527 = vmatprep.subr.mxu0 0.0
    %2528 = vmatpush1.msra.mxu0 0.0
    %2529 = vmatprep.subr.mxu0 0.0
    %2530 = vmatpush1.msra.mxu0 0.0
    %2531 = vmatprep.subr.mxu0 0.0
    %2532 = vmatpush1.msra.mxu0 0.0
    %2533 = vmatprep.subr.mxu0 0.0
    %2534 = vmatpush1.msra.mxu0 0.0
    %2535 = vmatprep.subr.mxu0 0.0
    %2536 = vmatpush1.msra.mxu0 0.0
    %2537 = vmatprep.subr.mxu0 0.0
    %2538 = vmatpush1.msra.mxu0 0.0
    %2539 = vmatprep.subr.mxu0 0.0
    %2540 = vmatpush1.msra.mxu0 0.0
    %2541 = vmatprep.subr.mxu0 0.0
    %2542 = vmatpush1.msra.mxu0 0.0
    %2543 = vmatprep.subr.mxu0 0.0
    %2544 = vmatpush1.msra.mxu0 0.0
    %2545 = vmatprep.subr.mxu0 0.0
    %2546 = vmatpush1.msra.mxu0 0.0
    %2547 = vmatprep.subr.mxu0 0.0
    %2548 = vmatpush1.msra.mxu0 0.0
    %2549 = vmatprep.subr.mxu0 0.0
    %2550 = vmatpush1.msra.mxu0 0.0
    %2551 = vmatprep.subr.mxu0 0.0
    %2552 = vmatpush1.msra.mxu0 %v2512
    %2553 = vmatprep.subr.mxu0 0.0
    %2554 = vmatpush1.msra.mxu0 %v2511
    %2555 = vmatprep.subr.mxu0 0.0
    %2556 = vmatpush1.msra.mxu0 %v2510
    %2557 = vmatprep.subr.mxu0 0.0
    %2558 = vmatpush1.msra.mxu0 %v2509
    %2559 = vmatprep.subr.mxu0 0.0
    %2560 = vmatpush2.msra.mxu0 0.0
    %2561 = vmatprep.subr.mxu0 0.0
    %2562 = vmatpush2.msra.mxu0 0.0
    %2563 = vmatprep.subr.mxu0 0.0
    %2564 = vmatpush2.msra.mxu0 0.0
    %2565 = vmatprep.subr.mxu0 0.0
    %2566 = vmatpush2.msra.mxu0 0.0
    %2567 = vmatprep.subr.mxu0 0.0
    %2568 = vmatpush2.msra.mxu0 0.0
    %2569 = vmatprep.subr.mxu0 0.0
    %2570 = vmatpush2.msra.mxu0 0.0
    %2571 = vmatprep.subr.mxu0 0.0
    %2572 = vmatpush2.msra.mxu0 0.0
    %2573 = vmatprep.subr.mxu0 0.0
    %2574 = vmatpush2.msra.mxu0 0.0
    %2575 = vmatprep.subr.mxu0 0.0
    %2576 = vmatpush2.msra.mxu0 0.0
    %2577 = vmatprep.subr.mxu0 0.0
    %2578 = vmatpush2.msra.mxu0 0.0
    %2579 = vmatprep.subr.mxu0 0.0
    %2580 = vmatpush2.msra.mxu0 0.0
    %2581 = vmatprep.subr.mxu0 0.0
    %2582 = vmatpush2.msra.mxu0 0.0
    %2583 = vmatprep.subr.mxu0 0.0
    %2584 = vmatpush2.msra.mxu0 0.0
    %2585 = vmatprep.subr.mxu0 0.0
    %2586 = vmatpush2.msra.mxu0 0.0
    %2587 = vmatprep.subr.mxu0 0.0
    %2588 = vmatpush2.msra.mxu0 0.0
    %2589 = vmatprep.subr.mxu0 0.0
    %2590 = vmatpush2.msra.mxu0 0.0
    %2591 = vmatprep.mubr.f32.mxu0 0.0
    %2592 = vmatmul.mubr.f32.gmra.mxu0 %v2522
    %v2593 = vpop.f32.mrf.mxu0
    %v2594 = vadd.f32 %v2519, %v2593
    %v2595 = vpop.f32.mrf.mxu0
    %2596 = vmatprep.mubr.f32.mxu0 0.0
    %2597 = vmatmul.mubr.f32.gmra.mxu0 %v2525
    %v2598 = vpop.f32.mrf.mxu0
    %v2599 = vadd.f32 %v2519, %v2598
    %v2600 = vpop.f32.mrf.mxu0
    %2601 = vdwg.mxu0
    %2604 = vrot.lane.b32.xlu0 %v2594, 120
    %v2605 = vpop.permute.xlu0 %2604
    %2606 = vrot.lane.b32.xlu0 %v2599, 120
    %v2607 = vpop.permute.xlu0 %2606
    %2610 = vrot.lane.b32.xlu0 %v2594, 112
    %v2611 = vpop.permute.xlu0 %2610
    %2612 = vrot.lane.b32.xlu0 %v2599, 112
    %v2613 = vpop.permute.xlu0 %2612
    %2616 = vrot.lane.b32.xlu0 %v2594, 104
    %v2617 = vpop.permute.xlu0 %2616
    %2618 = vrot.lane.b32.xlu0 %v2599, 104
    %v2619 = vpop.permute.xlu0 %2618
    %2622 = vrot.lane.b32.xlu0 %v2594, 96
    %v2623 = vpop.permute.xlu0 %2622
    %2624 = vrot.lane.b32.xlu0 %v2599, 96
    %v2625 = vpop.permute.xlu0 %2624
    %2628 = vrot.lane.b32.xlu0 %v2594, 88
    %v2629 = vpop.permute.xlu0 %2628
    %2630 = vrot.lane.b32.xlu0 %v2599, 88
    %v2631 = vpop.permute.xlu0 %2630
    %2634 = vrot.lane.b32.xlu0 %v2594, 80
    %v2635 = vpop.permute.xlu0 %2634
    %2636 = vrot.lane.b32.xlu0 %v2599, 80
    %v2637 = vpop.permute.xlu0 %2636
    %2640 = vrot.lane.b32.xlu0 %v2594, 72
    %v2641 = vpop.permute.xlu0 %2640
    %2642 = vrot.lane.b32.xlu0 %v2599, 72
    %v2643 = vpop.permute.xlu0 %2642
    %2646 = vrot.lane.b32.xlu0 %v2594, 64
    %v2647 = vpop.permute.xlu0 %2646
    %2648 = vrot.lane.b32.xlu0 %v2599, 64
    %v2649 = vpop.permute.xlu0 %2648
    %2652 = vrot.lane.b32.xlu0 %v2594, 56
    %v2653 = vpop.permute.xlu0 %2652
    %2654 = vrot.lane.b32.xlu0 %v2599, 56
    %v2655 = vpop.permute.xlu0 %2654
    %2658 = vrot.lane.b32.xlu0 %v2594, 48
    %v2659 = vpop.permute.xlu0 %2658
    %2660 = vrot.lane.b32.xlu0 %v2599, 48
    %v2661 = vpop.permute.xlu0 %2660
    %2664 = vrot.lane.b32.xlu0 %v2594, 40
    %v2665 = vpop.permute.xlu0 %2664
    %2666 = vrot.lane.b32.xlu0 %v2599, 40
    %v2667 = vpop.permute.xlu0 %2666
    %v2670 = vcombine.low %v2594, %v2611
    %v2671 = vcombine.high %v2594, %v2611
    %v2673 = vunpack.c.l.s4 1983009808
    %v2674 = vunpack.c.0.s8 %v2673
    %v2675 = vlaneseq
    %v2676 = vshrl.u32 %v2675, 7
    %v2677 = vsub.s32 %v2674, %v2676
    %v2678 = vrot.slane %v2670, %v2677
    %v2680 = vunpack.c.l.s4 1983009808
    %v2681 = vunpack.c.0.s8 %v2680
    %v2682 = vlaneseq
    %v2683 = vshrl.u32 %v2682, 7
    %v2684 = vsub.s32 %v2681, %v2683
    %v2685 = vrot.slane %v2671, %v2684
    %v2686 = vcombine.low %v2605, %v2617
    %v2687 = vcombine.high %v2605, %v2617
    %v2689 = vunpack.c.l.s4 1983009808
    %v2690 = vunpack.c.0.s8 %v2689
    %v2691 = vlaneseq
    %v2692 = vshrl.u32 %v2691, 7
    %v2693 = vsub.s32 %v2690, %v2692
    %v2694 = vrot.slane %v2686, %v2693
    %v2696 = vunpack.c.l.s4 1983009808
    %v2697 = vunpack.c.0.s8 %v2696
    %v2698 = vlaneseq
    %v2699 = vshrl.u32 %v2698, 7
    %v2700 = vsub.s32 %v2697, %v2699
    %v2701 = vrot.slane %v2687, %v2700
    %v2702 = vcombine.low %v2623, %v2635
    %v2703 = vcombine.high %v2623, %v2635
    %v2705 = vunpack.c.l.s4 1983009808
    %v2706 = vunpack.c.0.s8 %v2705
    %v2707 = vlaneseq
    %v2708 = vshrl.u32 %v2707, 7
    %v2709 = vsub.s32 %v2706, %v2708
    %v2710 = vrot.slane %v2702, %v2709
    %v2712 = vunpack.c.l.s4 1983009808
    %v2713 = vunpack.c.0.s8 %v2712
    %v2714 = vlaneseq
    %v2715 = vshrl.u32 %v2714, 7
    %v2716 = vsub.s32 %v2713, %v2715
    %v2717 = vrot.slane %v2703, %v2716
    %v2718 = vcombine.low %v2629, %v2641
    %v2719 = vcombine.high %v2629, %v2641
    %v2721 = vunpack.c.l.s4 1983009808
    %v2722 = vunpack.c.0.s8 %v2721
    %v2723 = vlaneseq
    %v2724 = vshrl.u32 %v2723, 7
    %v2725 = vsub.s32 %v2722, %v2724
    %v2726 = vrot.slane %v2718, %v2725
    %v2728 = vunpack.c.l.s4 1983009808
    %v2729 = vunpack.c.0.s8 %v2728
    %v2730 = vlaneseq
    %v2731 = vshrl.u32 %v2730, 7
    %v2732 = vsub.s32 %v2729, %v2731
    %v2733 = vrot.slane %v2719, %v2732
    %v2734 = vcombine.low %v2678, %v2694
    %v2735 = vcombine.high %v2678, %v2694
    %v2737 = vunpack.c.l.s4 1934713408
    %v2738 = vunpack.c.0.s8 %v2737
    %v2739 = vlaneseq
    %v2740 = vshrl.u32 %v2739, 7
    %v2741 = vsub.s32 %v2738, %v2740
    %v2742 = vrot.slane %v2734, %v2741
    %v2744 = vunpack.c.l.s4 1934713408
    %v2745 = vunpack.c.0.s8 %v2744
    %v2746 = vlaneseq
    %v2747 = vshrl.u32 %v2746, 7
    %v2748 = vsub.s32 %v2745, %v2747
    %v2749 = vrot.slane %v2735, %v2748
    %v2750 = vcombine.low %v2685, %v2701
    %v2751 = vcombine.high %v2685, %v2701
    %v2753 = vunpack.c.l.s4 1934713408
    %v2754 = vunpack.c.0.s8 %v2753
    %v2755 = vlaneseq
    %v2756 = vshrl.u32 %v2755, 7
    %v2757 = vsub.s32 %v2754, %v2756
    %v2758 = vrot.slane %v2750, %v2757
    %v2760 = vunpack.c.l.s4 1934713408
    %v2761 = vunpack.c.0.s8 %v2760
    %v2762 = vlaneseq
    %v2763 = vshrl.u32 %v2762, 7
    %v2764 = vsub.s32 %v2761, %v2763
    %v2765 = vrot.slane %v2751, %v2764
    %v2766 = vcombine.low %v2710, %v2726
    %v2767 = vcombine.high %v2710, %v2726
    %v2769 = vunpack.c.l.s4 1934713408
    %v2770 = vunpack.c.0.s8 %v2769
    %v2771 = vlaneseq
    %v2772 = vshrl.u32 %v2771, 7
    %v2773 = vsub.s32 %v2770, %v2772
    %v2774 = vrot.slane %v2766, %v2773
    %v2776 = vunpack.c.l.s4 1934713408
    %v2777 = vunpack.c.0.s8 %v2776
    %v2778 = vlaneseq
    %v2779 = vshrl.u32 %v2778, 7
    %v2780 = vsub.s32 %v2777, %v2779
    %v2781 = vrot.slane %v2767, %v2780
    %v2782 = vcombine.low %v2717, %v2733
    %v2783 = vcombine.high %v2717, %v2733
    %v2785 = vunpack.c.l.s4 1934713408
    %v2786 = vunpack.c.0.s8 %v2785
    %v2787 = vlaneseq
    %v2788 = vshrl.u32 %v2787, 7
    %v2789 = vsub.s32 %v2786, %v2788
    %v2790 = vrot.slane %v2782, %v2789
    %v2792 = vunpack.c.l.s4 1934713408
    %v2793 = vunpack.c.0.s8 %v2792
    %v2794 = vlaneseq
    %v2795 = vshrl.u32 %v2794, 7
    %v2796 = vsub.s32 %v2793, %v2795
    %v2797 = vrot.slane %v2783, %v2796
    %v2798 = vcombine.low %v2742, %v2774
    %v2799 = vcombine.high %v2742, %v2774
    %v2800 = vcombine.low %v2749, %v2781
    %v2801 = vcombine.high %v2749, %v2781
    %v2802 = vcombine.low %v2758, %v2790
    %v2803 = vcombine.high %v2758, %v2790
    %v2804 = vcombine.low %v2765, %v2797
    %v2805 = vcombine.high %v2765, %v2797
    %v2806 = vcombine.low %v2647, %v2659
    %v2807 = vcombine.high %v2647, %v2659
    %v2809 = vunpack.c.l.s4 1983009808
    %v2810 = vunpack.c.0.s8 %v2809
    %v2811 = vlaneseq
    %v2812 = vshrl.u32 %v2811, 7
    %v2813 = vsub.s32 %v2810, %v2812
    %v2814 = vrot.slane %v2806, %v2813
    %v2816 = vunpack.c.l.s4 1983009808
    %v2817 = vunpack.c.0.s8 %v2816
    %v2818 = vlaneseq
    %v2819 = vshrl.u32 %v2818, 7
    %v2820 = vsub.s32 %v2817, %v2819
    %v2821 = vrot.slane %v2807, %v2820
    %v2822 = vcombine.low %v2653, %v2665
    %v2823 = vcombine.high %v2653, %v2665
    %v2825 = vunpack.c.l.s4 1983009808
    %v2826 = vunpack.c.0.s8 %v2825
    %v2827 = vlaneseq
    %v2828 = vshrl.u32 %v2827, 7
    %v2829 = vsub.s32 %v2826, %v2828
    %v2830 = vrot.slane %v2822, %v2829
    %v2832 = vunpack.c.l.s4 1983009808
    %v2833 = vunpack.c.0.s8 %v2832
    %v2834 = vlaneseq
    %v2835 = vshrl.u32 %v2834, 7
    %v2836 = vsub.s32 %v2833, %v2835
    %v2837 = vrot.slane %v2823, %v2836
    %v2838 = vcombine.low %v2814, %v2830
    %v2839 = vcombine.high %v2814, %v2830
    %v2841 = vunpack.c.l.s4 1934713408
    %v2842 = vunpack.c.0.s8 %v2841
    %v2843 = vlaneseq
    %v2844 = vshrl.u32 %v2843, 7
    %v2845 = vsub.s32 %v2842, %v2844
    %v2846 = vrot.slane %v2838, %v2845
    %v2848 = vunpack.c.l.s4 1934713408
    %v2849 = vunpack.c.0.s8 %v2848
    %v2850 = vlaneseq
    %v2851 = vshrl.u32 %v2850, 7
    %v2852 = vsub.s32 %v2849, %v2851
    %v2853 = vrot.slane %v2839, %v2852
    %v2854 = vcombine.low %v2821, %v2837
    %v2855 = vcombine.high %v2821, %v2837
    %v2857 = vunpack.c.l.s4 1934713408
    %v2858 = vunpack.c.0.s8 %v2857
    %v2859 = vlaneseq
    %v2860 = vshrl.u32 %v2859, 7
    %v2861 = vsub.s32 %v2858, %v2860
    %v2862 = vrot.slane %v2854, %v2861
    %v2864 = vunpack.c.l.s4 1934713408
    %v2865 = vunpack.c.0.s8 %v2864
    %v2866 = vlaneseq
    %v2867 = vshrl.u32 %v2866, 7
    %v2868 = vsub.s32 %v2865, %v2867
    %v2869 = vrot.slane %v2855, %v2868
    %v2870 = vcombine.high %v2846, 0.0
    %v2871 = vcombine.high %v2853, 0.0
    %v2872 = vcombine.high %v2862, 0.0
    %v2873 = vcombine.high %v2869, 0.0
    %v2874 = vcombine.low %v2599, %v2613
    %v2875 = vcombine.high %v2599, %v2613
    %v2877 = vunpack.c.l.s4 1983009808
    %v2878 = vunpack.c.0.s8 %v2877
    %v2879 = vlaneseq
    %v2880 = vshrl.u32 %v2879, 7
    %v2881 = vsub.s32 %v2878, %v2880
    %v2882 = vrot.slane %v2874, %v2881
    %v2884 = vunpack.c.l.s4 1983009808
    %v2885 = vunpack.c.0.s8 %v2884
    %v2886 = vlaneseq
    %v2887 = vshrl.u32 %v2886, 7
    %v2888 = vsub.s32 %v2885, %v2887
    %v2889 = vrot.slane %v2875, %v2888
    %v2890 = vcombine.low %v2607, %v2619
    %v2891 = vcombine.high %v2607, %v2619
    %v2893 = vunpack.c.l.s4 1983009808
    %v2894 = vunpack.c.0.s8 %v2893
    %v2895 = vlaneseq
    %v2896 = vshrl.u32 %v2895, 7
    %v2897 = vsub.s32 %v2894, %v2896
    %v2898 = vrot.slane %v2890, %v2897
    %v2900 = vunpack.c.l.s4 1983009808
    %v2901 = vunpack.c.0.s8 %v2900
    %v2902 = vlaneseq
    %v2903 = vshrl.u32 %v2902, 7
    %v2904 = vsub.s32 %v2901, %v2903
    %v2905 = vrot.slane %v2891, %v2904
    %v2906 = vcombine.low %v2625, %v2637
    %v2907 = vcombine.high %v2625, %v2637
    %v2909 = vunpack.c.l.s4 1983009808
    %v2910 = vunpack.c.0.s8 %v2909
    %v2911 = vlaneseq
    %v2912 = vshrl.u32 %v2911, 7
    %v2913 = vsub.s32 %v2910, %v2912
    %v2914 = vrot.slane %v2906, %v2913
    %v2916 = vunpack.c.l.s4 1983009808
    %v2917 = vunpack.c.0.s8 %v2916
    %v2918 = vlaneseq
    %v2919 = vshrl.u32 %v2918, 7
    %v2920 = vsub.s32 %v2917, %v2919
    %v2921 = vrot.slane %v2907, %v2920
    %v2922 = vcombine.low %v2631, %v2643
    %v2923 = vcombine.high %v2631, %v2643
    %v2925 = vunpack.c.l.s4 1983009808
    %v2926 = vunpack.c.0.s8 %v2925
    %v2927 = vlaneseq
    %v2928 = vshrl.u32 %v2927, 7
    %v2929 = vsub.s32 %v2926, %v2928
    %v2930 = vrot.slane %v2922, %v2929
    %v2932 = vunpack.c.l.s4 1983009808
    %v2933 = vunpack.c.0.s8 %v2932
    %v2934 = vlaneseq
    %v2935 = vshrl.u32 %v2934, 7
    %v2936 = vsub.s32 %v2933, %v2935
    %v2937 = vrot.slane %v2923, %v2936
    %v2938 = vcombine.low %v2882, %v2898
    %v2939 = vcombine.high %v2882, %v2898
    %v2941 = vunpack.c.l.s4 1934713408
    %v2942 = vunpack.c.0.s8 %v2941
    %v2943 = vlaneseq
    %v2944 = vshrl.u32 %v2943, 7
    %v2945 = vsub.s32 %v2942, %v2944
    %v2946 = vrot.slane %v2938, %v2945
    %v2948 = vunpack.c.l.s4 1934713408
    %v2949 = vunpack.c.0.s8 %v2948
    %v2950 = vlaneseq
    %v2951 = vshrl.u32 %v2950, 7
    %v2952 = vsub.s32 %v2949, %v2951
    %v2953 = vrot.slane %v2939, %v2952
    %v2954 = vcombine.low %v2889, %v2905
    %v2955 = vcombine.high %v2889, %v2905
    %v2957 = vunpack.c.l.s4 1934713408
    %v2958 = vunpack.c.0.s8 %v2957
    %v2959 = vlaneseq
    %v2960 = vshrl.u32 %v2959, 7
    %v2961 = vsub.s32 %v2958, %v2960
    %v2962 = vrot.slane %v2954, %v2961
    %v2964 = vunpack.c.l.s4 1934713408
    %v2965 = vunpack.c.0.s8 %v2964
    %v2966 = vlaneseq
    %v2967 = vshrl.u32 %v2966, 7
    %v2968 = vsub.s32 %v2965, %v2967
    %v2969 = vrot.slane %v2955, %v2968
    %v2970 = vcombine.low %v2914, %v2930
    %v2971 = vcombine.high %v2914, %v2930
    %v2973 = vunpack.c.l.s4 1934713408
    %v2974 = vunpack.c.0.s8 %v2973
    %v2975 = vlaneseq
    %v2976 = vshrl.u32 %v2975, 7
    %v2977 = vsub.s32 %v2974, %v2976
    %v2978 = vrot.slane %v2970, %v2977
    %v2980 = vunpack.c.l.s4 1934713408
    %v2981 = vunpack.c.0.s8 %v2980
    %v2982 = vlaneseq
    %v2983 = vshrl.u32 %v2982, 7
    %v2984 = vsub.s32 %v2981, %v2983
    %v2985 = vrot.slane %v2971, %v2984
    %v2986 = vcombine.low %v2921, %v2937
    %v2987 = vcombine.high %v2921, %v2937
    %v2989 = vunpack.c.l.s4 1934713408
    %v2990 = vunpack.c.0.s8 %v2989
    %v2991 = vlaneseq
    %v2992 = vshrl.u32 %v2991, 7
    %v2993 = vsub.s32 %v2990, %v2992
    %v2994 = vrot.slane %v2986, %v2993
    %v2996 = vunpack.c.l.s4 1934713408
    %v2997 = vunpack.c.0.s8 %v2996
    %v2998 = vlaneseq
    %v2999 = vshrl.u32 %v2998, 7
    %v3000 = vsub.s32 %v2997, %v2999
    %v3001 = vrot.slane %v2987, %v3000
    %v3002 = vcombine.low %v2946, %v2978
    %v3003 = vcombine.high %v2946, %v2978
    %v3004 = vcombine.low %v2953, %v2985
    %v3005 = vcombine.high %v2953, %v2985
    %v3006 = vcombine.low %v2962, %v2994
    %v3007 = vcombine.high %v2962, %v2994
    %v3008 = vcombine.low %v2969, %v3001
    %v3009 = vcombine.high %v2969, %v3001
    %v3010 = vcombine.low %v2649, %v2661
    %v3011 = vcombine.high %v2649, %v2661
    %v3013 = vunpack.c.l.s4 1983009808
    %v3014 = vunpack.c.0.s8 %v3013
    %v3015 = vlaneseq
    %v3016 = vshrl.u32 %v3015, 7
    %v3017 = vsub.s32 %v3014, %v3016
    %v3018 = vrot.slane %v3010, %v3017
    %v3020 = vunpack.c.l.s4 1983009808
    %v3021 = vunpack.c.0.s8 %v3020
    %v3022 = vlaneseq
    %v3023 = vshrl.u32 %v3022, 7
    %v3024 = vsub.s32 %v3021, %v3023
    %v3025 = vrot.slane %v3011, %v3024
    %v3026 = vcombine.low %v2655, %v2667
    %v3027 = vcombine.high %v2655, %v2667
    %v3029 = vunpack.c.l.s4 1983009808
    %v3030 = vunpack.c.0.s8 %v3029
    %v3031 = vlaneseq
    %v3032 = vshrl.u32 %v3031, 7
    %v3033 = vsub.s32 %v3030, %v3032
    %v3034 = vrot.slane %v3026, %v3033
    %v3036 = vunpack.c.l.s4 1983009808
    %v3037 = vunpack.c.0.s8 %v3036
    %v3038 = vlaneseq
    %v3039 = vshrl.u32 %v3038, 7
    %v3040 = vsub.s32 %v3037, %v3039
    %v3041 = vrot.slane %v3027, %v3040
    %v3042 = vcombine.low %v3018, %v3034
    %v3043 = vcombine.high %v3018, %v3034
    %v3045 = vunpack.c.l.s4 1934713408
    %v3046 = vunpack.c.0.s8 %v3045
    %v3047 = vlaneseq
    %v3048 = vshrl.u32 %v3047, 7
    %v3049 = vsub.s32 %v3046, %v3048
    %v3050 = vrot.slane %v3042, %v3049
    %v3052 = vunpack.c.l.s4 1934713408
    %v3053 = vunpack.c.0.s8 %v3052
    %v3054 = vlaneseq
    %v3055 = vshrl.u32 %v3054, 7
    %v3056 = vsub.s32 %v3053, %v3055
    %v3057 = vrot.slane %v3043, %v3056
    %v3058 = vcombine.low %v3025, %v3041
    %v3059 = vcombine.high %v3025, %v3041
    %v3061 = vunpack.c.l.s4 1934713408
    %v3062 = vunpack.c.0.s8 %v3061
    %v3063 = vlaneseq
    %v3064 = vshrl.u32 %v3063, 7
    %v3065 = vsub.s32 %v3062, %v3064
    %v3066 = vrot.slane %v3058, %v3065
    %v3068 = vunpack.c.l.s4 1934713408
    %v3069 = vunpack.c.0.s8 %v3068
    %v3070 = vlaneseq
    %v3071 = vshrl.u32 %v3070, 7
    %v3072 = vsub.s32 %v3069, %v3071
    %v3073 = vrot.slane %v3059, %v3072
    %v3074 = vcombine.high %v3050, 0.0
    %v3075 = vcombine.high %v3057, 0.0
    %v3076 = vcombine.high %v3066, 0.0
    %v3077 = vcombine.high %v3073, 0.0
    %v3078 = vcombine.low %v2798, %v2800
    %v3079 = vcombine.high %v2798, %v2800
    %v3081 = vunpack.c.l.s4 1983009808
    %v3082 = vunpack.c.0.s8 %v3081
    %v3083 = vlaneseq
    %v3084 = vshrl.u32 %v3083, 7
    %v3085 = vsub.s32 %v3082, %v3084
    %v3086 = vrot.slane %v3078, %v3085
    %v3088 = vunpack.c.l.s4 1983009808
    %v3089 = vunpack.c.0.s8 %v3088
    %v3090 = vlaneseq
    %v3091 = vshrl.u32 %v3090, 7
    %v3092 = vsub.s32 %v3089, %v3091
    %v3093 = vrot.slane %v3079, %v3092
    %v3094 = vcombine.low %v2799, %v2801
    %v3095 = vcombine.high %v2799, %v2801
    %v3097 = vunpack.c.l.s4 1983009808
    %v3098 = vunpack.c.0.s8 %v3097
    %v3099 = vlaneseq
    %v3100 = vshrl.u32 %v3099, 7
    %v3101 = vsub.s32 %v3098, %v3100
    %v3102 = vrot.slane %v3094, %v3101
    %v3104 = vunpack.c.l.s4 1983009808
    %v3105 = vunpack.c.0.s8 %v3104
    %v3106 = vlaneseq
    %v3107 = vshrl.u32 %v3106, 7
    %v3108 = vsub.s32 %v3105, %v3107
    %v3109 = vrot.slane %v3095, %v3108
    %v3110 = vcombine.low %v2802, %v2804
    %v3111 = vcombine.high %v2802, %v2804
    %v3113 = vunpack.c.l.s4 1983009808
    %v3114 = vunpack.c.0.s8 %v3113
    %v3115 = vlaneseq
    %v3116 = vshrl.u32 %v3115, 7
    %v3117 = vsub.s32 %v3114, %v3116
    %v3118 = vrot.slane %v3110, %v3117
    %v3120 = vunpack.c.l.s4 1983009808
    %v3121 = vunpack.c.0.s8 %v3120
    %v3122 = vlaneseq
    %v3123 = vshrl.u32 %v3122, 7
    %v3124 = vsub.s32 %v3121, %v3123
    %v3125 = vrot.slane %v3111, %v3124
    %v3126 = vcombine.low %v2803, %v2805
    %v3127 = vcombine.high %v2803, %v2805
    %v3129 = vunpack.c.l.s4 1983009808
    %v3130 = vunpack.c.0.s8 %v3129
    %v3131 = vlaneseq
    %v3132 = vshrl.u32 %v3131, 7
    %v3133 = vsub.s32 %v3130, %v3132
    %v3134 = vrot.slane %v3126, %v3133
    %v3136 = vunpack.c.l.s4 1983009808
    %v3137 = vunpack.c.0.s8 %v3136
    %v3138 = vlaneseq
    %v3139 = vshrl.u32 %v3138, 7
    %v3140 = vsub.s32 %v3137, %v3139
    %v3141 = vrot.slane %v3127, %v3140
    %v3142 = vcombine.low %v3086, %v3102
    %v3143 = vcombine.high %v3086, %v3102
    %v3145 = vunpack.c.l.s4 1934713408
    %v3146 = vunpack.c.0.s8 %v3145
    %v3147 = vlaneseq
    %v3148 = vshrl.u32 %v3147, 7
    %v3149 = vsub.s32 %v3146, %v3148
    %v3150 = vrot.slane %v3142, %v3149
    %v3152 = vunpack.c.l.s4 1934713408
    %v3153 = vunpack.c.0.s8 %v3152
    %v3154 = vlaneseq
    %v3155 = vshrl.u32 %v3154, 7
    %v3156 = vsub.s32 %v3153, %v3155
    %v3157 = vrot.slane %v3143, %v3156
    %v3158 = vcombine.low %v3093, %v3109
    %v3159 = vcombine.high %v3093, %v3109
    %v3161 = vunpack.c.l.s4 1934713408
    %v3162 = vunpack.c.0.s8 %v3161
    %v3163 = vlaneseq
    %v3164 = vshrl.u32 %v3163, 7
    %v3165 = vsub.s32 %v3162, %v3164
    %v3166 = vrot.slane %v3158, %v3165
    %v3168 = vunpack.c.l.s4 1934713408
    %v3169 = vunpack.c.0.s8 %v3168
    %v3170 = vlaneseq
    %v3171 = vshrl.u32 %v3170, 7
    %v3172 = vsub.s32 %v3169, %v3171
    %v3173 = vrot.slane %v3159, %v3172
    %v3174 = vcombine.low %v3118, %v3134
    %v3175 = vcombine.high %v3118, %v3134
    %v3177 = vunpack.c.l.s4 1934713408
    %v3178 = vunpack.c.0.s8 %v3177
    %v3179 = vlaneseq
    %v3180 = vshrl.u32 %v3179, 7
    %v3181 = vsub.s32 %v3178, %v3180
    %v3182 = vrot.slane %v3174, %v3181
    %v3184 = vunpack.c.l.s4 1934713408
    %v3185 = vunpack.c.0.s8 %v3184
    %v3186 = vlaneseq
    %v3187 = vshrl.u32 %v3186, 7
    %v3188 = vsub.s32 %v3185, %v3187
    %v3189 = vrot.slane %v3175, %v3188
    %v3190 = vcombine.low %v3125, %v3141
    %v3191 = vcombine.high %v3125, %v3141
    %v3193 = vunpack.c.l.s4 1934713408
    %v3194 = vunpack.c.0.s8 %v3193
    %v3195 = vlaneseq
    %v3196 = vshrl.u32 %v3195, 7
    %v3197 = vsub.s32 %v3194, %v3196
    %v3198 = vrot.slane %v3190, %v3197
    %v3200 = vunpack.c.l.s4 1934713408
    %v3201 = vunpack.c.0.s8 %v3200
    %v3202 = vlaneseq
    %v3203 = vshrl.u32 %v3202, 7
    %v3204 = vsub.s32 %v3201, %v3203
    %v3205 = vrot.slane %v3191, %v3204
    %v3206 = vcombine.low %v3150, %v3182
    %v3207 = vcombine.high %v3150, %v3182
    %v3208 = vcombine.low %v3157, %v3189
    %v3209 = vcombine.high %v3157, %v3189
    %v3210 = vcombine.low %v3166, %v3198
    %v3211 = vcombine.high %v3166, %v3198
    %v3212 = vcombine.low %v3173, %v3205
    %v3213 = vcombine.high %v3173, %v3205
    %v3214 = vcombine.low %v3002, %v3004
    %v3215 = vcombine.high %v3002, %v3004
    %v3217 = vunpack.c.l.s4 1983009808
    %v3218 = vunpack.c.0.s8 %v3217
    %v3219 = vlaneseq
    %v3220 = vshrl.u32 %v3219, 7
    %v3221 = vsub.s32 %v3218, %v3220
    %v3222 = vrot.slane %v3214, %v3221
    %v3224 = vunpack.c.l.s4 1983009808
    %v3225 = vunpack.c.0.s8 %v3224
    %v3226 = vlaneseq
    %v3227 = vshrl.u32 %v3226, 7
    %v3228 = vsub.s32 %v3225, %v3227
    %v3229 = vrot.slane %v3215, %v3228
    %v3230 = vcombine.low %v3003, %v3005
    %v3231 = vcombine.high %v3003, %v3005
    %v3233 = vunpack.c.l.s4 1983009808
    %v3234 = vunpack.c.0.s8 %v3233
    %v3235 = vlaneseq
    %v3236 = vshrl.u32 %v3235, 7
    %v3237 = vsub.s32 %v3234, %v3236
    %v3238 = vrot.slane %v3230, %v3237
    %v3240 = vunpack.c.l.s4 1983009808
    %v3241 = vunpack.c.0.s8 %v3240
    %v3242 = vlaneseq
    %v3243 = vshrl.u32 %v3242, 7
    %v3244 = vsub.s32 %v3241, %v3243
    %v3245 = vrot.slane %v3231, %v3244
    %v3246 = vcombine.low %v3006, %v3008
    %v3247 = vcombine.high %v3006, %v3008
    %v3249 = vunpack.c.l.s4 1983009808
    %v3250 = vunpack.c.0.s8 %v3249
    %v3251 = vlaneseq
    %v3252 = vshrl.u32 %v3251, 7
    %v3253 = vsub.s32 %v3250, %v3252
    %v3254 = vrot.slane %v3246, %v3253
    %v3256 = vunpack.c.l.s4 1983009808
    %v3257 = vunpack.c.0.s8 %v3256
    %v3258 = vlaneseq
    %v3259 = vshrl.u32 %v3258, 7
    %v3260 = vsub.s32 %v3257, %v3259
    %v3261 = vrot.slane %v3247, %v3260
    %v3262 = vcombine.low %v3007, %v3009
    %v3263 = vcombine.high %v3007, %v3009
    %v3265 = vunpack.c.l.s4 1983009808
    %v3266 = vunpack.c.0.s8 %v3265
    %v3267 = vlaneseq
    %v3268 = vshrl.u32 %v3267, 7
    %v3269 = vsub.s32 %v3266, %v3268
    %v3270 = vrot.slane %v3262, %v3269
    %v3272 = vunpack.c.l.s4 1983009808
    %v3273 = vunpack.c.0.s8 %v3272
    %v3274 = vlaneseq
    %v3275 = vshrl.u32 %v3274, 7
    %v3276 = vsub.s32 %v3273, %v3275
    %v3277 = vrot.slane %v3263, %v3276
    %v3278 = vcombine.low %v3222, %v3238
    %v3279 = vcombine.high %v3222, %v3238
    %v3281 = vunpack.c.l.s4 1934713408
    %v3282 = vunpack.c.0.s8 %v3281
    %v3283 = vlaneseq
    %v3284 = vshrl.u32 %v3283, 7
    %v3285 = vsub.s32 %v3282, %v3284
    %v3286 = vrot.slane %v3278, %v3285
    %v3288 = vunpack.c.l.s4 1934713408
    %v3289 = vunpack.c.0.s8 %v3288
    %v3290 = vlaneseq
    %v3291 = vshrl.u32 %v3290, 7
    %v3292 = vsub.s32 %v3289, %v3291
    %v3293 = vrot.slane %v3279, %v3292
    %v3294 = vcombine.low %v3229, %v3245
    %v3295 = vcombine.high %v3229, %v3245
    %v3297 = vunpack.c.l.s4 1934713408
    %v3298 = vunpack.c.0.s8 %v3297
    %v3299 = vlaneseq
    %v3300 = vshrl.u32 %v3299, 7
    %v3301 = vsub.s32 %v3298, %v3300
    %v3302 = vrot.slane %v3294, %v3301
    %v3304 = vunpack.c.l.s4 1934713408
    %v3305 = vunpack.c.0.s8 %v3304
    %v3306 = vlaneseq
    %v3307 = vshrl.u32 %v3306, 7
    %v3308 = vsub.s32 %v3305, %v3307
    %v3309 = vrot.slane %v3295, %v3308
    %v3310 = vcombine.low %v3254, %v3270
    %v3311 = vcombine.high %v3254, %v3270
    %v3313 = vunpack.c.l.s4 1934713408
    %v3314 = vunpack.c.0.s8 %v3313
    %v3315 = vlaneseq
    %v3316 = vshrl.u32 %v3315, 7
    %v3317 = vsub.s32 %v3314, %v3316
    %v3318 = vrot.slane %v3310, %v3317
    %v3320 = vunpack.c.l.s4 1934713408
    %v3321 = vunpack.c.0.s8 %v3320
    %v3322 = vlaneseq
    %v3323 = vshrl.u32 %v3322, 7
    %v3324 = vsub.s32 %v3321, %v3323
    %v3325 = vrot.slane %v3311, %v3324
    %v3326 = vcombine.low %v3261, %v3277
    %v3327 = vcombine.high %v3261, %v3277
    %v3329 = vunpack.c.l.s4 1934713408
    %v3330 = vunpack.c.0.s8 %v3329
    %v3331 = vlaneseq
    %v3332 = vshrl.u32 %v3331, 7
    %v3333 = vsub.s32 %v3330, %v3332
    %v3334 = vrot.slane %v3326, %v3333
    %v3336 = vunpack.c.l.s4 1934713408
    %v3337 = vunpack.c.0.s8 %v3336
    %v3338 = vlaneseq
    %v3339 = vshrl.u32 %v3338, 7
    %v3340 = vsub.s32 %v3337, %v3339
    %v3341 = vrot.slane %v3327, %v3340
    %v3342 = vcombine.low %v3286, %v3318
    %v3343 = vcombine.high %v3286, %v3318
    %v3344 = vcombine.low %v3293, %v3325
    %v3345 = vcombine.high %v3293, %v3325
    %v3346 = vcombine.low %v3302, %v3334
    %v3347 = vcombine.high %v3302, %v3334
    %v3348 = vcombine.low %v3309, %v3341
    %v3349 = vcombine.high %v3309, %v3341
    %v3350 = vcombine.low %v2846, %v2853
    %v3352 = vunpack.c.l.s4 1983009808
    %v3353 = vunpack.c.0.s8 %v3352
    %v3354 = vlaneseq
    %v3355 = vshrl.u32 %v3354, 7
    %v3356 = vsub.s32 %v3353, %v3355
    %v3357 = vrot.slane %v3350, %v3356
    %v3358 = vcombine.low %v2870, %v2871
    %v3360 = vunpack.c.l.s4 1983009808
    %v3361 = vunpack.c.0.s8 %v3360
    %v3362 = vlaneseq
    %v3363 = vshrl.u32 %v3362, 7
    %v3364 = vsub.s32 %v3361, %v3363
    %v3365 = vrot.slane %v3358, %v3364
    %v3366 = vcombine.low %v2862, %v2869
    %v3368 = vunpack.c.l.s4 1983009808
    %v3369 = vunpack.c.0.s8 %v3368
    %v3370 = vlaneseq
    %v3371 = vshrl.u32 %v3370, 7
    %v3372 = vsub.s32 %v3369, %v3371
    %v3373 = vrot.slane %v3366, %v3372
    %v3374 = vcombine.low %v2872, %v2873
    %v3376 = vunpack.c.l.s4 1983009808
    %v3377 = vunpack.c.0.s8 %v3376
    %v3378 = vlaneseq
    %v3379 = vshrl.u32 %v3378, 7
    %v3380 = vsub.s32 %v3377, %v3379
    %v3381 = vrot.slane %v3374, %v3380
    %v3382 = vcombine.low %v3357, %v3365
    %v3383 = vcombine.high %v3357, %v3365
    %v3385 = vunpack.c.l.s4 1934713408
    %v3386 = vunpack.c.0.s8 %v3385
    %v3387 = vlaneseq
    %v3388 = vshrl.u32 %v3387, 7
    %v3389 = vsub.s32 %v3386, %v3388
    %v3390 = vrot.slane %v3382, %v3389
    %v3392 = vunpack.c.l.s4 1934713408
    %v3393 = vunpack.c.0.s8 %v3392
    %v3394 = vlaneseq
    %v3395 = vshrl.u32 %v3394, 7
    %v3396 = vsub.s32 %v3393, %v3395
    %v3397 = vrot.slane %v3383, %v3396
    %v3398 = vcombine.low %v3373, %v3381
    %v3399 = vcombine.high %v3373, %v3381
    %v3401 = vunpack.c.l.s4 1934713408
    %v3402 = vunpack.c.0.s8 %v3401
    %v3403 = vlaneseq
    %v3404 = vshrl.u32 %v3403, 7
    %v3405 = vsub.s32 %v3402, %v3404
    %v3406 = vrot.slane %v3398, %v3405
    %v3408 = vunpack.c.l.s4 1934713408
    %v3409 = vunpack.c.0.s8 %v3408
    %v3410 = vlaneseq
    %v3411 = vshrl.u32 %v3410, 7
    %v3412 = vsub.s32 %v3409, %v3411
    %v3413 = vrot.slane %v3399, %v3412
    %v3414 = vcombine.low %v3390, %v3406
    %v3415 = vcombine.high %v3390, %v3406
    %v3416 = vcombine.low %v3397, %v3413
    %v3417 = vcombine.high %v3397, %v3413
    %v3418 = vcombine.low %v3050, %v3057
    %v3420 = vunpack.c.l.s4 1983009808
    %v3421 = vunpack.c.0.s8 %v3420
    %v3422 = vlaneseq
    %v3423 = vshrl.u32 %v3422, 7
    %v3424 = vsub.s32 %v3421, %v3423
    %v3425 = vrot.slane %v3418, %v3424
    %v3426 = vcombine.low %v3074, %v3075
    %v3428 = vunpack.c.l.s4 1983009808
    %v3429 = vunpack.c.0.s8 %v3428
    %v3430 = vlaneseq
    %v3431 = vshrl.u32 %v3430, 7
    %v3432 = vsub.s32 %v3429, %v3431
    %v3433 = vrot.slane %v3426, %v3432
    %v3434 = vcombine.low %v3066, %v3073
    %v3436 = vunpack.c.l.s4 1983009808
    %v3437 = vunpack.c.0.s8 %v3436
    %v3438 = vlaneseq
    %v3439 = vshrl.u32 %v3438, 7
    %v3440 = vsub.s32 %v3437, %v3439
    %v3441 = vrot.slane %v3434, %v3440
    %v3442 = vcombine.low %v3076, %v3077
    %v3444 = vunpack.c.l.s4 1983009808
    %v3445 = vunpack.c.0.s8 %v3444
    %v3446 = vlaneseq
    %v3447 = vshrl.u32 %v3446, 7
    %v3448 = vsub.s32 %v3445, %v3447
    %v3449 = vrot.slane %v3442, %v3448
    %v3450 = vcombine.low %v3425, %v3433
    %v3451 = vcombine.high %v3425, %v3433
    %v3453 = vunpack.c.l.s4 1934713408
    %v3454 = vunpack.c.0.s8 %v3453
    %v3455 = vlaneseq
    %v3456 = vshrl.u32 %v3455, 7
    %v3457 = vsub.s32 %v3454, %v3456
    %v3458 = vrot.slane %v3450, %v3457
    %v3460 = vunpack.c.l.s4 1934713408
    %v3461 = vunpack.c.0.s8 %v3460
    %v3462 = vlaneseq
    %v3463 = vshrl.u32 %v3462, 7
    %v3464 = vsub.s32 %v3461, %v3463
    %v3465 = vrot.slane %v3451, %v3464
    %v3466 = vcombine.low %v3441, %v3449
    %v3467 = vcombine.high %v3441, %v3449
    %v3469 = vunpack.c.l.s4 1934713408
    %v3470 = vunpack.c.0.s8 %v3469
    %v3471 = vlaneseq
    %v3472 = vshrl.u32 %v3471, 7
    %v3473 = vsub.s32 %v3470, %v3472
    %v3474 = vrot.slane %v3466, %v3473
    %v3476 = vunpack.c.l.s4 1934713408
    %v3477 = vunpack.c.0.s8 %v3476
    %v3478 = vlaneseq
    %v3479 = vshrl.u32 %v3478, 7
    %v3480 = vsub.s32 %v3477, %v3479
    %v3481 = vrot.slane %v3467, %v3480
    %v3482 = vcombine.low %v3458, %v3474
    %v3483 = vcombine.high %v3458, %v3474
    %v3484 = vcombine.low %v3465, %v3481
    %v3485 = vcombine.high %v3465, %v3481
    %v3487 = vsel %vm1063, %v3206, 0
    %v3490 = vsel %vm1063, %v3342, 0
    %v3493 = vsel %vm1063, %v3210, 0
    %v3496 = vsel %vm1063, %v3346, 0
    %3498 = vmatprep.subr.mxu0 0.0
    %3499 = vmatpush1.xpose.msra.mxu0 0.0
    %3500 = vmatprep.subr.mxu0 0.0
    %3501 = vmatpush1.xpose.msra.mxu0 0.0
    %3502 = vmatprep.subr.mxu0 0.0
    %3503 = vmatpush1.xpose.msra.mxu0 0.0
    %3504 = vmatprep.subr.mxu0 0.0
    %3505 = vmatpush1.xpose.msra.mxu0 0.0
    %3506 = vmatprep.subr.mxu0 0.0
    %3507 = vmatpush1.xpose.msra.mxu0 0.0
    %3508 = vmatprep.subr.mxu0 0.0
    %3509 = vmatpush1.xpose.msra.mxu0 0.0
    %3510 = vmatprep.subr.mxu0 0.0
    %3511 = vmatpush1.xpose.msra.mxu0 0.0
    %3512 = vmatprep.subr.mxu0 0.0
    %3513 = vmatpush1.xpose.msra.mxu0 0.0
    %3514 = vmatprep.subr.mxu0 0.0
    %3515 = vmatpush1.xpose.msra.mxu0 0.0
    %3516 = vmatprep.subr.mxu0 0.0
    %3517 = vmatpush1.xpose.msra.mxu0 0.0
    %3518 = vmatprep.subr.mxu0 0.0
    %3519 = vmatpush1.xpose.msra.mxu0 0.0
    %3520 = vmatprep.subr.mxu0 0.0
    %3521 = vmatpush1.xpose.msra.mxu0 0.0
    %3522 = vmatprep.subr.mxu0 0.0
    %3523 = vmatpush1.xpose.msra.mxu0 0.0
    %3524 = vmatprep.subr.mxu0 0.0
    %3525 = vmatpush1.xpose.msra.mxu0 0.0
    %3526 = vmatprep.subr.mxu0 0.0
    %3527 = vmatpush1.xpose.msra.mxu0 %v3496
    %3528 = vmatprep.subr.mxu0 0.0
    %3529 = vmatpush1.xpose.msra.mxu0 %v3493
    %3530 = vmatprep.subr.mxu0 0.0
    %3531 = vmatpush2.xpose.msra.mxu0 0.0
    %3532 = vmatprep.subr.mxu0 0.0
    %3533 = vmatpush2.xpose.msra.mxu0 0.0
    %3534 = vmatprep.subr.mxu0 0.0
    %3535 = vmatpush2.xpose.msra.mxu0 0.0
    %3536 = vmatprep.subr.mxu0 0.0
    %3537 = vmatpush2.xpose.msra.mxu0 0.0
    %3538 = vmatprep.subr.mxu0 0.0
    %3539 = vmatpush2.xpose.msra.mxu0 0.0
    %3540 = vmatprep.subr.mxu0 0.0
    %3541 = vmatpush2.xpose.msra.mxu0 0.0
    %3542 = vmatprep.subr.mxu0 0.0
    %3543 = vmatpush2.xpose.msra.mxu0 0.0
    %3544 = vmatprep.subr.mxu0 0.0
    %3545 = vmatpush2.xpose.msra.mxu0 0.0
    %3546 = vmatprep.subr.mxu0 0.0
    %3547 = vmatpush2.xpose.msra.mxu0 0.0
    %3548 = vmatprep.subr.mxu0 0.0
    %3549 = vmatpush2.xpose.msra.mxu0 0.0
    %3550 = vmatprep.subr.mxu0 0.0
    %3551 = vmatpush2.xpose.msra.mxu0 0.0
    %3552 = vmatprep.subr.mxu0 0.0
    %3553 = vmatpush2.xpose.msra.mxu0 0.0
    %3554 = vmatprep.subr.mxu0 0.0
    %3555 = vmatpush2.xpose.msra.mxu0 0.0
    %3556 = vmatprep.subr.mxu0 0.0
    %3557 = vmatpush2.xpose.msra.mxu0 0.0
    %3558 = vmatprep.subr.mxu0 0.0
    %3559 = vmatpush2.xpose.msra.mxu0 0.0
    %3560 = vmatprep.subr.mxu0 0.0
    %3561 = vmatpush2.xpose.msra.mxu0 0.0
    %3562 = vmatprep.mubr.f32.mxu0 0.0
    %3563 = vmatmul.mubr.f32.gmra.mxu0 %v3487
    %v3564 = vpop.f32.mrf.mxu0
    %v3565 = vadd.f32 %v44, %v3564
    %v3566 = vpop.f32.mrf.mxu0
    %3567 = vmatprep.mubr.f32.mxu0 0.0
    %3568 = vmatmul.mubr.f32.gmra.mxu0 %v3490
    %v3569 = vpop.f32.mrf.mxu0
    %v3570 = vadd.f32 %v45, %v3569
    %v3571 = vpop.f32.mrf.mxu0
    %3572 = vdwg.mxu0
    %v3574 = vsel %vm1063, %v3207, 0
    %v3577 = vsel %vm1063, %v3343, 0
    %v3580 = vsel %vm1063, %v3211, 0
    %v3583 = vsel %vm1063, %v3347, 0
    %3585 = vmatprep.subr.mxu0 0.0
    %3586 = vmatpush1.xpose.msra.mxu0 0.0
    %3587 = vmatprep.subr.mxu0 0.0
    %3588 = vmatpush1.xpose.msra.mxu0 0.0
    %3589 = vmatprep.subr.mxu0 0.0
    %3590 = vmatpush1.xpose.msra.mxu0 0.0
    %3591 = vmatprep.subr.mxu0 0.0
    %3592 = vmatpush1.xpose.msra.mxu0 0.0
    %3593 = vmatprep.subr.mxu0 0.0
    %3594 = vmatpush1.xpose.msra.mxu0 0.0
    %3595 = vmatprep.subr.mxu0 0.0
    %3596 = vmatpush1.xpose.msra.mxu0 0.0
    %3597 = vmatprep.subr.mxu0 0.0
    %3598 = vmatpush1.xpose.msra.mxu0 0.0
    %3599 = vmatprep.subr.mxu0 0.0
    %3600 = vmatpush1.xpose.msra.mxu0 0.0
    %3601 = vmatprep.subr.mxu0 0.0
    %3602 = vmatpush1.xpose.msra.mxu0 0.0
    %3603 = vmatprep.subr.mxu0 0.0
    %3604 = vmatpush1.xpose.msra.mxu0 0.0
    %3605 = vmatprep.subr.mxu0 0.0
    %3606 = vmatpush1.xpose.msra.mxu0 0.0
    %3607 = vmatprep.subr.mxu0 0.0
    %3608 = vmatpush1.xpose.msra.mxu0 0.0
    %3609 = vmatprep.subr.mxu0 0.0
    %3610 = vmatpush1.xpose.msra.mxu0 0.0
    %3611 = vmatprep.subr.mxu0 0.0
    %3612 = vmatpush1.xpose.msra.mxu0 0.0
    %3613 = vmatprep.subr.mxu0 0.0
    %3614 = vmatpush1.xpose.msra.mxu0 %v3583
    %3615 = vmatprep.subr.mxu0 0.0
    %3616 = vmatpush1.xpose.msra.mxu0 %v3580
    %3617 = vmatprep.subr.mxu0 0.0
    %3618 = vmatpush2.xpose.msra.mxu0 0.0
    %3619 = vmatprep.subr.mxu0 0.0
    %3620 = vmatpush2.xpose.msra.mxu0 0.0
    %3621 = vmatprep.subr.mxu0 0.0
    %3622 = vmatpush2.xpose.msra.mxu0 0.0
    %3623 = vmatprep.subr.mxu0 0.0
    %3624 = vmatpush2.xpose.msra.mxu0 0.0
    %3625 = vmatprep.subr.mxu0 0.0
    %3626 = vmatpush2.xpose.msra.mxu0 0.0
    %3627 = vmatprep.subr.mxu0 0.0
    %3628 = vmatpush2.xpose.msra.mxu0 0.0
    %3629 = vmatprep.subr.mxu0 0.0
    %3630 = vmatpush2.xpose.msra.mxu0 0.0
    %3631 = vmatprep.subr.mxu0 0.0
    %3632 = vmatpush2.xpose.msra.mxu0 0.0
    %3633 = vmatprep.subr.mxu0 0.0
    %3634 = vmatpush2.xpose.msra.mxu0 0.0
    %3635 = vmatprep.subr.mxu0 0.0
    %3636 = vmatpush2.xpose.msra.mxu0 0.0
    %3637 = vmatprep.subr.mxu0 0.0
    %3638 = vmatpush2.xpose.msra.mxu0 0.0
    %3639 = vmatprep.subr.mxu0 0.0
    %3640 = vmatpush2.xpose.msra.mxu0 0.0
    %3641 = vmatprep.subr.mxu0 0.0
    %3642 = vmatpush2.xpose.msra.mxu0 0.0
    %3643 = vmatprep.subr.mxu0 0.0
    %3644 = vmatpush2.xpose.msra.mxu0 0.0
    %3645 = vmatprep.subr.mxu0 0.0
    %3646 = vmatpush2.xpose.msra.mxu0 0.0
    %3647 = vmatprep.subr.mxu0 0.0
    %3648 = vmatpush2.xpose.msra.mxu0 0.0
    %3649 = vmatprep.mubr.f32.mxu0 0.0
    %3650 = vmatmul.mubr.f32.gmra.mxu0 %v3574
    %v3651 = vpop.f32.mrf.mxu0
    %v3652 = vadd.f32 %v44, %v3651
    %v3653 = vpop.f32.mrf.mxu0
    %3654 = vmatprep.mubr.f32.mxu0 0.0
    %3655 = vmatmul.mubr.f32.gmra.mxu0 %v3577
    %v3656 = vpop.f32.mrf.mxu0
    %v3657 = vadd.f32 %v45, %v3656
    %v3658 = vpop.f32.mrf.mxu0
    %3659 = vdwg.mxu0
    %v3661 = vsel %vm1063, %v3208, 0
    %v3664 = vsel %vm1063, %v3344, 0
    %v3667 = vsel %vm1063, %v3212, 0
    %v3670 = vsel %vm1063, %v3348, 0
    %3672 = vmatprep.subr.mxu0 0.0
    %3673 = vmatpush1.xpose.msra.mxu0 0.0
    %3674 = vmatprep.subr.mxu0 0.0
    %3675 = vmatpush1.xpose.msra.mxu0 0.0
    %3676 = vmatprep.subr.mxu0 0.0
    %3677 = vmatpush1.xpose.msra.mxu0 0.0
    %3678 = vmatprep.subr.mxu0 0.0
    %3679 = vmatpush1.xpose.msra.mxu0 0.0
    %3680 = vmatprep.subr.mxu0 0.0
    %3681 = vmatpush1.xpose.msra.mxu0 0.0
    %3682 = vmatprep.subr.mxu0 0.0
    %3683 = vmatpush1.xpose.msra.mxu0 0.0
    %3684 = vmatprep.subr.mxu0 0.0
    %3685 = vmatpush1.xpose.msra.mxu0 0.0
    %3686 = vmatprep.subr.mxu0 0.0
    %3687 = vmatpush1.xpose.msra.mxu0 0.0
    %3688 = vmatprep.subr.mxu0 0.0
    %3689 = vmatpush1.xpose.msra.mxu0 0.0
    %3690 = vmatprep.subr.mxu0 0.0
    %3691 = vmatpush1.xpose.msra.mxu0 0.0
    %3692 = vmatprep.subr.mxu0 0.0
    %3693 = vmatpush1.xpose.msra.mxu0 0.0
    %3694 = vmatprep.subr.mxu0 0.0
    %3695 = vmatpush1.xpose.msra.mxu0 0.0
    %3696 = vmatprep.subr.mxu0 0.0
    %3697 = vmatpush1.xpose.msra.mxu0 0.0
    %3698 = vmatprep.subr.mxu0 0.0
    %3699 = vmatpush1.xpose.msra.mxu0 0.0
    %3700 = vmatprep.subr.mxu0 0.0
    %3701 = vmatpush1.xpose.msra.mxu0 %v3670
    %3702 = vmatprep.subr.mxu0 0.0
    %3703 = vmatpush1.xpose.msra.mxu0 %v3667
    %3704 = vmatprep.subr.mxu0 0.0
    %3705 = vmatpush2.xpose.msra.mxu0 0.0
    %3706 = vmatprep.subr.mxu0 0.0
    %3707 = vmatpush2.xpose.msra.mxu0 0.0
    %3708 = vmatprep.subr.mxu0 0.0
    %3709 = vmatpush2.xpose.msra.mxu0 0.0
    %3710 = vmatprep.subr.mxu0 0.0
    %3711 = vmatpush2.xpose.msra.mxu0 0.0
    %3712 = vmatprep.subr.mxu0 0.0
    %3713 = vmatpush2.xpose.msra.mxu0 0.0
    %3714 = vmatprep.subr.mxu0 0.0
    %3715 = vmatpush2.xpose.msra.mxu0 0.0
    %3716 = vmatprep.subr.mxu0 0.0
    %3717 = vmatpush2.xpose.msra.mxu0 0.0
    %3718 = vmatprep.subr.mxu0 0.0
    %3719 = vmatpush2.xpose.msra.mxu0 0.0
    %3720 = vmatprep.subr.mxu0 0.0
    %3721 = vmatpush2.xpose.msra.mxu0 0.0
    %3722 = vmatprep.subr.mxu0 0.0
    %3723 = vmatpush2.xpose.msra.mxu0 0.0
    %3724 = vmatprep.subr.mxu0 0.0
    %3725 = vmatpush2.xpose.msra.mxu0 0.0
    %3726 = vmatprep.subr.mxu0 0.0
    %3727 = vmatpush2.xpose.msra.mxu0 0.0
    %3728 = vmatprep.subr.mxu0 0.0
    %3729 = vmatpush2.xpose.msra.mxu0 0.0
    %3730 = vmatprep.subr.mxu0 0.0
    %3731 = vmatpush2.xpose.msra.mxu0 0.0
    %3732 = vmatprep.subr.mxu0 0.0
    %3733 = vmatpush2.xpose.msra.mxu0 0.0
    %3734 = vmatprep.subr.mxu0 0.0
    %3735 = vmatpush2.xpose.msra.mxu0 0.0
    %3736 = vmatprep.mubr.f32.mxu0 0.0
    %3737 = vmatmul.mubr.f32.gmra.mxu0 %v3661
    %v3738 = vpop.f32.mrf.mxu0
    %v3739 = vadd.f32 %v44, %v3738
    %v3740 = vpop.f32.mrf.mxu0
    %3741 = vmatprep.mubr.f32.mxu0 0.0
    %3742 = vmatmul.mubr.f32.gmra.mxu0 %v3664
    %v3743 = vpop.f32.mrf.mxu0
    %v3744 = vadd.f32 %v45, %v3743
    %v3745 = vpop.f32.mrf.mxu0
    %3746 = vdwg.mxu0
    %v3748 = vsel %vm1063, %v3209, 0
    %v3751 = vsel %vm1063, %v3345, 0
    %v3754 = vsel %vm1063, %v3213, 0
    %v3757 = vsel %vm1063, %v3349, 0
    %3759 = vmatprep.subr.mxu0 0.0
    %3760 = vmatpush1.xpose.msra.mxu0 0.0
    %3761 = vmatprep.subr.mxu0 0.0
    %3762 = vmatpush1.xpose.msra.mxu0 0.0
    %3763 = vmatprep.subr.mxu0 0.0
    %3764 = vmatpush1.xpose.msra.mxu0 0.0
    %3765 = vmatprep.subr.mxu0 0.0
    %3766 = vmatpush1.xpose.msra.mxu0 0.0
    %3767 = vmatprep.subr.mxu0 0.0
    %3768 = vmatpush1.xpose.msra.mxu0 0.0
    %3769 = vmatprep.subr.mxu0 0.0
    %3770 = vmatpush1.xpose.msra.mxu0 0.0
    %3771 = vmatprep.subr.mxu0 0.0
    %3772 = vmatpush1.xpose.msra.mxu0 0.0
    %3773 = vmatprep.subr.mxu0 0.0
    %3774 = vmatpush1.xpose.msra.mxu0 0.0
    %3775 = vmatprep.subr.mxu0 0.0
    %3776 = vmatpush1.xpose.msra.mxu0 0.0
    %3777 = vmatprep.subr.mxu0 0.0
    %3778 = vmatpush1.xpose.msra.mxu0 0.0
    %3779 = vmatprep.subr.mxu0 0.0
    %3780 = vmatpush1.xpose.msra.mxu0 0.0
    %3781 = vmatprep.subr.mxu0 0.0
    %3782 = vmatpush1.xpose.msra.mxu0 0.0
    %3783 = vmatprep.subr.mxu0 0.0
    %3784 = vmatpush1.xpose.msra.mxu0 0.0
    %3785 = vmatprep.subr.mxu0 0.0
    %3786 = vmatpush1.xpose.msra.mxu0 0.0
    %3787 = vmatprep.subr.mxu0 0.0
    %3788 = vmatpush1.xpose.msra.mxu0 %v3757
    %3789 = vmatprep.subr.mxu0 0.0
    %3790 = vmatpush1.xpose.msra.mxu0 %v3754
    %3791 = vmatprep.subr.mxu0 0.0
    %3792 = vmatpush2.xpose.msra.mxu0 0.0
    %3793 = vmatprep.subr.mxu0 0.0
    %3794 = vmatpush2.xpose.msra.mxu0 0.0
    %3795 = vmatprep.subr.mxu0 0.0
    %3796 = vmatpush2.xpose.msra.mxu0 0.0
    %3797 = vmatprep.subr.mxu0 0.0
    %3798 = vmatpush2.xpose.msra.mxu0 0.0
    %3799 = vmatprep.subr.mxu0 0.0
    %3800 = vmatpush2.xpose.msra.mxu0 0.0
    %3801 = vmatprep.subr.mxu0 0.0
    %3802 = vmatpush2.xpose.msra.mxu0 0.0
    %3803 = vmatprep.subr.mxu0 0.0
    %3804 = vmatpush2.xpose.msra.mxu0 0.0
    %3805 = vmatprep.subr.mxu0 0.0
    %3806 = vmatpush2.xpose.msra.mxu0 0.0
    %3807 = vmatprep.subr.mxu0 0.0
    %3808 = vmatpush2.xpose.msra.mxu0 0.0
    %3809 = vmatprep.subr.mxu0 0.0
    %3810 = vmatpush2.xpose.msra.mxu0 0.0
    %3811 = vmatprep.subr.mxu0 0.0
    %3812 = vmatpush2.xpose.msra.mxu0 0.0
    %3813 = vmatprep.subr.mxu0 0.0
    %3814 = vmatpush2.xpose.msra.mxu0 0.0
    %3815 = vmatprep.subr.mxu0 0.0
    %3816 = vmatpush2.xpose.msra.mxu0 0.0
    %3817 = vmatprep.subr.mxu0 0.0
    %3818 = vmatpush2.xpose.msra.mxu0 0.0
    %3819 = vmatprep.subr.mxu0 0.0
    %3820 = vmatpush2.xpose.msra.mxu0 0.0
    %3821 = vmatprep.subr.mxu0 0.0
    %3822 = vmatpush2.xpose.msra.mxu0 0.0
    %3823 = vmatprep.mubr.f32.mxu0 0.0
    %3824 = vmatmul.mubr.f32.gmra.mxu0 %v3748
    %v3825 = vpop.f32.mrf.mxu0
    %v3826 = vadd.f32 %v44, %v3825
    %v3827 = vpop.f32.mrf.mxu0
    %3828 = vmatprep.mubr.f32.mxu0 0.0
    %3829 = vmatmul.mubr.f32.gmra.mxu0 %v3751
    %v3830 = vpop.f32.mrf.mxu0
    %v3831 = vadd.f32 %v45, %v3830
    %v3832 = vpop.f32.mrf.mxu0
    %3833 = vdwg.mxu0
    %v3834 = vsel %vm1412, %v3565, -inf
    %3835 = vmax.xlane.f32.xlu0 %v3834
    %v3836 = vpop.xlane.xlu0 %3835
    %v3837 = vsel %vm1412, %v3570, -inf
    %3838 = vmax.xlane.f32.xlu0 %v3837
    %v3839 = vpop.xlane.xlu0 %3838
    %v3840 = vsel %vm1412, %v3652, -inf
    %3841 = vmax.xlane.f32.xlu0 %v3840
    %v3842 = vpop.xlane.xlu0 %3841
    %v3843 = vsel %vm1412, %v3657, -inf
    %3844 = vmax.xlane.f32.xlu0 %v3843
    %v3845 = vpop.xlane.xlu0 %3844
    %v3846 = vsel %vm1412, %v3739, -inf
    %3847 = vmax.xlane.f32.xlu0 %v3846
    %v3848 = vpop.xlane.xlu0 %3847
    %v3849 = vsel %vm1412, %v3744, -inf
    %3850 = vmax.xlane.f32.xlu0 %v3849
    %v3851 = vpop.xlane.xlu0 %3850
    %v3852 = vsel %vm1412, %v3826, -inf
    %3853 = vmax.xlane.f32.xlu0 %v3852
    %v3854 = vpop.xlane.xlu0 %3853
    %v3855 = vsel %vm1412, %v3831, -inf
    %3856 = vmax.xlane.f32.xlu0 %v3855
    %v3857 = vpop.xlane.xlu0 %3856
    %v3858 = vsub.f32 %v3565, %v3836
    %v3859 = vsub.f32 %v3570, %v3839
    %v3860 = vsub.f32 %v3652, %v3842
    %v3861 = vsub.f32 %v3657, %v3845
    %v3862 = vsub.f32 %v3739, %v3848
    %v3863 = vsub.f32 %v3744, %v3851
    %v3864 = vsub.f32 %v3826, %v3854
    %v3865 = vsub.f32 %v3831, %v3857
    %v3866 = vmul.f32 %v3858, 1.442695
    %v3867 = vpow.pop %v3866
    %v3868 = vmul.f32 %v3859, 1.442695
    %v3869 = vpow.pop %v3868
    %v3870 = vmul.f32 %v3860, 1.442695
    %v3871 = vpow.pop %v3870
    %v3872 = vmul.f32 %v3861, 1.442695
    %v3873 = vpow.pop %v3872
    %v3874 = vmul.f32 %v3862, 1.442695
    %v3875 = vpow.pop %v3874
    %v3876 = vmul.f32 %v3863, 1.442695
    %v3877 = vpow.pop %v3876
    %v3878 = vmul.f32 %v3864, 1.442695
    %v3879 = vpow.pop %v3878
    %v3880 = vmul.f32 %v3865, 1.442695
    %v3881 = vpow.pop %v3880
    %v3882 = vsel %vm1412, %v3867, 0.0
    %3883 = vadd.xlane.f32.xlu0 %v3882
    %v3884 = vpop.xlane.xlu0 %3883
    %v3885 = vsel %vm1412, %v3869, 0.0
    %3886 = vadd.xlane.f32.xlu0 %v3885
    %v3887 = vpop.xlane.xlu0 %3886
    %v3888 = vsel %vm1412, %v3871, 0.0
    %3889 = vadd.xlane.f32.xlu0 %v3888
    %v3890 = vpop.xlane.xlu0 %3889
    %v3891 = vsel %vm1412, %v3873, 0.0
    %3892 = vadd.xlane.f32.xlu0 %v3891
    %v3893 = vpop.xlane.xlu0 %3892
    %v3894 = vsel %vm1412, %v3875, 0.0
    %3895 = vadd.xlane.f32.xlu0 %v3894
    %v3896 = vpop.xlane.xlu0 %3895
    %v3897 = vsel %vm1412, %v3877, 0.0
    %3898 = vadd.xlane.f32.xlu0 %v3897
    %v3899 = vpop.xlane.xlu0 %3898
    %v3900 = vsel %vm1412, %v3879, 0.0
    %3901 = vadd.xlane.f32.xlu0 %v3900
    %v3902 = vpop.xlane.xlu0 %3901
    %v3903 = vsel %vm1412, %v3881, 0.0
    %3904 = vadd.xlane.f32.xlu0 %v3903
    %v3905 = vpop.xlane.xlu0 %3904
    %v3906 = vrcp.pop %v3884
    %v3907 = vrcp.pop %v3887
    %v3908 = vrcp.pop %v3890
    %v3909 = vrcp.pop %v3893
    %v3910 = vrcp.pop %v3896
    %v3911 = vrcp.pop %v3899
    %v3912 = vrcp.pop %v3902
    %v3913 = vrcp.pop %v3905
    %v3914 = vmul.f32 %v3867, %v3906
    %v3915 = vmul.f32 %v3869, %v3907
    %v3916 = vmul.f32 %v3871, %v3908
    %v3917 = vmul.f32 %v3873, %v3909
    %v3918 = vmul.f32 %v3875, %v3910
    %v3919 = vmul.f32 %v3877, %v3911
    %v3920 = vmul.f32 %v3879, %v3912
    %v3921 = vmul.f32 %v3881, %v3913
    %v3923 = vsel %vm1412, %v3914, 0
    %v3926 = vsel %vm1412, %v3915, 0
    %3928 = vmatprep.subr.mxu0 0.0
    %3929 = vmatpush1.msra.mxu0 0.0
    %3930 = vmatprep.subr.mxu0 0.0
    %3931 = vmatpush1.msra.mxu0 0.0
    %3932 = vmatprep.subr.mxu0 0.0
    %3933 = vmatpush1.msra.mxu0 0.0
    %3934 = vmatprep.subr.mxu0 0.0
    %3935 = vmatpush1.msra.mxu0 0.0
    %3936 = vmatprep.subr.mxu0 0.0
    %3937 = vmatpush1.msra.mxu0 0.0
    %3938 = vmatprep.subr.mxu0 0.0
    %3939 = vmatpush1.msra.mxu0 0.0
    %3940 = vmatprep.subr.mxu0 0.0
    %3941 = vmatpush1.msra.mxu0 0.0
    %3942 = vmatprep.subr.mxu0 0.0
    %3943 = vmatpush1.msra.mxu0 0.0
    %3944 = vmatprep.subr.mxu0 0.0
    %3945 = vmatpush1.msra.mxu0 0.0
    %3946 = vmatprep.subr.mxu0 0.0
    %3947 = vmatpush1.msra.mxu0 0.0
    %3948 = vmatprep.subr.mxu0 0.0
    %3949 = vmatpush1.msra.mxu0 0.0
    %3950 = vmatprep.subr.mxu0 0.0
    %3951 = vmatpush1.msra.mxu0 0.0
    %3952 = vmatprep.subr.mxu0 0.0
    %3953 = vmatpush1.msra.mxu0 0.0
    %3954 = vmatprep.subr.mxu0 0.0
    %3955 = vmatpush1.msra.mxu0 0.0
    %3956 = vmatprep.subr.mxu0 0.0
    %3957 = vmatpush1.msra.mxu0 %v3482
    %3958 = vmatprep.subr.mxu0 0.0
    %3959 = vmatpush1.msra.mxu0 %v3414
    %3960 = vmatprep.subr.mxu0 0.0
    %3961 = vmatpush2.msra.mxu0 0.0
    %3962 = vmatprep.subr.mxu0 0.0
    %3963 = vmatpush2.msra.mxu0 0.0
    %3964 = vmatprep.subr.mxu0 0.0
    %3965 = vmatpush2.msra.mxu0 0.0
    %3966 = vmatprep.subr.mxu0 0.0
    %3967 = vmatpush2.msra.mxu0 0.0
    %3968 = vmatprep.subr.mxu0 0.0
    %3969 = vmatpush2.msra.mxu0 0.0
    %3970 = vmatprep.subr.mxu0 0.0
    %3971 = vmatpush2.msra.mxu0 0.0
    %3972 = vmatprep.subr.mxu0 0.0
    %3973 = vmatpush2.msra.mxu0 0.0
    %3974 = vmatprep.subr.mxu0 0.0
    %3975 = vmatpush2.msra.mxu0 0.0
    %3976 = vmatprep.subr.mxu0 0.0
    %3977 = vmatpush2.msra.mxu0 0.0
    %3978 = vmatprep.subr.mxu0 0.0
    %3979 = vmatpush2.msra.mxu0 0.0
    %3980 = vmatprep.subr.mxu0 0.0
    %3981 = vmatpush2.msra.mxu0 0.0
    %3982 = vmatprep.subr.mxu0 0.0
    %3983 = vmatpush2.msra.mxu0 0.0
    %3984 = vmatprep.subr.mxu0 0.0
    %3985 = vmatpush2.msra.mxu0 0.0
    %3986 = vmatprep.subr.mxu0 0.0
    %3987 = vmatpush2.msra.mxu0 0.0
    %3988 = vmatprep.subr.mxu0 0.0
    %3989 = vmatpush2.msra.mxu0 0.0
    %3990 = vmatprep.subr.mxu0 0.0
    %3991 = vmatpush2.msra.mxu0 0.0
    %3992 = vmatprep.mubr.f32.mxu0 0.0
    %3993 = vmatmul.mubr.f32.gmra.mxu0 %v3923
    %v3994 = vpop.f32.mrf.mxu0
    %v3995 = vadd.f32 0.0, %v3994
    %v3996 = vpop.f32.mrf.mxu0
    %3997 = vmatprep.mubr.f32.mxu0 0.0
    %3998 = vmatmul.mubr.f32.gmra.mxu0 %v3926
    %v3999 = vpop.f32.mrf.mxu0
    %v4000 = vadd.f32 0.0, %v3999
    %v4001 = vpop.f32.mrf.mxu0
    %4002 = vdwg.mxu0
    %v4004 = vsel %vm1412, %v3916, 0
    %v4007 = vsel %vm1412, %v3917, 0
    %4009 = vmatprep.subr.mxu0 0.0
    %4010 = vmatpush1.msra.mxu0 0.0
    %4011 = vmatprep.subr.mxu0 0.0
    %4012 = vmatpush1.msra.mxu0 0.0
    %4013 = vmatprep.subr.mxu0 0.0
    %4014 = vmatpush1.msra.mxu0 0.0
    %4015 = vmatprep.subr.mxu0 0.0
    %4016 = vmatpush1.msra.mxu0 0.0
    %4017 = vmatprep.subr.mxu0 0.0
    %4018 = vmatpush1.msra.mxu0 0.0
    %4019 = vmatprep.subr.mxu0 0.0
    %4020 = vmatpush1.msra.mxu0 0.0
    %4021 = vmatprep.subr.mxu0 0.0
    %4022 = vmatpush1.msra.mxu0 0.0
    %4023 = vmatprep.subr.mxu0 0.0
    %4024 = vmatpush1.msra.mxu0 0.0
    %4025 = vmatprep.subr.mxu0 0.0
    %4026 = vmatpush1.msra.mxu0 0.0
    %4027 = vmatprep.subr.mxu0 0.0
    %4028 = vmatpush1.msra.mxu0 0.0
    %4029 = vmatprep.subr.mxu0 0.0
    %4030 = vmatpush1.msra.mxu0 0.0
    %4031 = vmatprep.subr.mxu0 0.0
    %4032 = vmatpush1.msra.mxu0 0.0
    %4033 = vmatprep.subr.mxu0 0.0
    %4034 = vmatpush1.msra.mxu0 0.0
    %4035 = vmatprep.subr.mxu0 0.0
    %4036 = vmatpush1.msra.mxu0 0.0
    %4037 = vmatprep.subr.mxu0 0.0
    %4038 = vmatpush1.msra.mxu0 %v3483
    %4039 = vmatprep.subr.mxu0 0.0
    %4040 = vmatpush1.msra.mxu0 %v3415
    %4041 = vmatprep.subr.mxu0 0.0
    %4042 = vmatpush2.msra.mxu0 0.0
    %4043 = vmatprep.subr.mxu0 0.0
    %4044 = vmatpush2.msra.mxu0 0.0
    %4045 = vmatprep.subr.mxu0 0.0
    %4046 = vmatpush2.msra.mxu0 0.0
    %4047 = vmatprep.subr.mxu0 0.0
    %4048 = vmatpush2.msra.mxu0 0.0
    %4049 = vmatprep.subr.mxu0 0.0
    %4050 = vmatpush2.msra.mxu0 0.0
    %4051 = vmatprep.subr.mxu0 0.0
    %4052 = vmatpush2.msra.mxu0 0.0
    %4053 = vmatprep.subr.mxu0 0.0
    %4054 = vmatpush2.msra.mxu0 0.0
    %4055 = vmatprep.subr.mxu0 0.0
    %4056 = vmatpush2.msra.mxu0 0.0
    %4057 = vmatprep.subr.mxu0 0.0
    %4058 = vmatpush2.msra.mxu0 0.0
    %4059 = vmatprep.subr.mxu0 0.0
    %4060 = vmatpush2.msra.mxu0 0.0
    %4061 = vmatprep.subr.mxu0 0.0
    %4062 = vmatpush2.msra.mxu0 0.0
    %4063 = vmatprep.subr.mxu0 0.0
    %4064 = vmatpush2.msra.mxu0 0.0
    %4065 = vmatprep.subr.mxu0 0.0
    %4066 = vmatpush2.msra.mxu0 0.0
    %4067 = vmatprep.subr.mxu0 0.0
    %4068 = vmatpush2.msra.mxu0 0.0
    %4069 = vmatprep.subr.mxu0 0.0
    %4070 = vmatpush2.msra.mxu0 0.0
    %4071 = vmatprep.subr.mxu0 0.0
    %4072 = vmatpush2.msra.mxu0 0.0
    %4073 = vmatprep.mubr.f32.mxu0 0.0
    %4074 = vmatmul.mubr.f32.gmra.mxu0 %v4004
    %v4075 = vpop.f32.mrf.mxu0
    %v4076 = vadd.f32 0.0, %v4075
    %v4077 = vpop.f32.mrf.mxu0
    %4078 = vmatprep.mubr.f32.mxu0 0.0
    %4079 = vmatmul.mubr.f32.gmra.mxu0 %v4007
    %v4080 = vpop.f32.mrf.mxu0
    %v4081 = vadd.f32 0.0, %v4080
    %v4082 = vpop.f32.mrf.mxu0
    %4083 = vdwg.mxu0
    %v4085 = vsel %vm1412, %v3918, 0
    %v4088 = vsel %vm1412, %v3919, 0
    %4090 = vmatprep.subr.mxu0 0.0
    %4091 = vmatpush1.msra.mxu0 0.0
    %4092 = vmatprep.subr.mxu0 0.0
    %4093 = vmatpush1.msra.mxu0 0.0
    %4094 = vmatprep.subr.mxu0 0.0
    %4095 = vmatpush1.msra.mxu0 0.0
    %4096 = vmatprep.subr.mxu0 0.0
    %4097 = vmatpush1.msra.mxu0 0.0
    %4098 = vmatprep.subr.mxu0 0.0
    %4099 = vmatpush1.msra.mxu0 0.0
    %4100 = vmatprep.subr.mxu0 0.0
    %4101 = vmatpush1.msra.mxu0 0.0
    %4102 = vmatprep.subr.mxu0 0.0
    %4103 = vmatpush1.msra.mxu0 0.0
    %4104 = vmatprep.subr.mxu0 0.0
    %4105 = vmatpush1.msra.mxu0 0.0
    %4106 = vmatprep.subr.mxu0 0.0
    %4107 = vmatpush1.msra.mxu0 0.0
    %4108 = vmatprep.subr.mxu0 0.0
    %4109 = vmatpush1.msra.mxu0 0.0
    %4110 = vmatprep.subr.mxu0 0.0
    %4111 = vmatpush1.msra.mxu0 0.0
    %4112 = vmatprep.subr.mxu0 0.0
    %4113 = vmatpush1.msra.mxu0 0.0
    %4114 = vmatprep.subr.mxu0 0.0
    %4115 = vmatpush1.msra.mxu0 0.0
    %4116 = vmatprep.subr.mxu0 0.0
    %4117 = vmatpush1.msra.mxu0 0.0
    %4118 = vmatprep.subr.mxu0 0.0
    %4119 = vmatpush1.msra.mxu0 %v3484
    %4120 = vmatprep.subr.mxu0 0.0
    %4121 = vmatpush1.msra.mxu0 %v3416
    %4122 = vmatprep.subr.mxu0 0.0
    %4123 = vmatpush2.msra.mxu0 0.0
    %4124 = vmatprep.subr.mxu0 0.0
    %4125 = vmatpush2.msra.mxu0 0.0
    %4126 = vmatprep.subr.mxu0 0.0
    %4127 = vmatpush2.msra.mxu0 0.0
    %4128 = vmatprep.subr.mxu0 0.0
    %4129 = vmatpush2.msra.mxu0 0.0
    %4130 = vmatprep.subr.mxu0 0.0
    %4131 = vmatpush2.msra.mxu0 0.0
    %4132 = vmatprep.subr.mxu0 0.0
    %4133 = vmatpush2.msra.mxu0 0.0
    %4134 = vmatprep.subr.mxu0 0.0
    %4135 = vmatpush2.msra.mxu0 0.0
    %4136 = vmatprep.subr.mxu0 0.0
    %4137 = vmatpush2.msra.mxu0 0.0
    %4138 = vmatprep.subr.mxu0 0.0
    %4139 = vmatpush2.msra.mxu0 0.0
    %4140 = vmatprep.subr.mxu0 0.0
    %4141 = vmatpush2.msra.mxu0 0.0
    %4142 = vmatprep.subr.mxu0 0.0
    %4143 = vmatpush2.msra.mxu0 0.0
    %4144 = vmatprep.subr.mxu0 0.0
    %4145 = vmatpush2.msra.mxu0 0.0
    %4146 = vmatprep.subr.mxu0 0.0
    %4147 = vmatpush2.msra.mxu0 0.0
    %4148 = vmatprep.subr.mxu0 0.0
    %4149 = vmatpush2.msra.mxu0 0.0
    %4150 = vmatprep.subr.mxu0 0.0
    %4151 = vmatpush2.msra.mxu0 0.0
    %4152 = vmatprep.subr.mxu0 0.0
    %4153 = vmatpush2.msra.mxu0 0.0
    %4154 = vmatprep.mubr.f32.mxu0 0.0
    %4155 = vmatmul.mubr.f32.gmra.mxu0 %v4085
    %v4156 = vpop.f32.mrf.mxu0
    %v4157 = vadd.f32 0.0, %v4156
    %v4158 = vpop.f32.mrf.mxu0
    %4159 = vmatprep.mubr.f32.mxu0 0.0
    %4160 = vmatmul.mubr.f32.gmra.mxu0 %v4088
    %v4161 = vpop.f32.mrf.mxu0
    %v4162 = vadd.f32 0.0, %v4161
    %v4163 = vpop.f32.mrf.mxu0
    %4164 = vdwg.mxu0
    %v4166 = vsel %vm1412, %v3920, 0
    %v4169 = vsel %vm1412, %v3921, 0
    %4171 = vmatprep.subr.mxu0 0.0
    %4172 = vmatpush1.msra.mxu0 0.0
    %4173 = vmatprep.subr.mxu0 0.0
    %4174 = vmatpush1.msra.mxu0 0.0
    %4175 = vmatprep.subr.mxu0 0.0
    %4176 = vmatpush1.msra.mxu0 0.0
    %4177 = vmatprep.subr.mxu0 0.0
    %4178 = vmatpush1.msra.mxu0 0.0
    %4179 = vmatprep.subr.mxu0 0.0
    %4180 = vmatpush1.msra.mxu0 0.0
    %4181 = vmatprep.subr.mxu0 0.0
    %4182 = vmatpush1.msra.mxu0 0.0
    %4183 = vmatprep.subr.mxu0 0.0
    %4184 = vmatpush1.msra.mxu0 0.0
    %4185 = vmatprep.subr.mxu0 0.0
    %4186 = vmatpush1.msra.mxu0 0.0
    %4187 = vmatprep.subr.mxu0 0.0
    %4188 = vmatpush1.msra.mxu0 0.0
    %4189 = vmatprep.subr.mxu0 0.0
    %4190 = vmatpush1.msra.mxu0 0.0
    %4191 = vmatprep.subr.mxu0 0.0
    %4192 = vmatpush1.msra.mxu0 0.0
    %4193 = vmatprep.subr.mxu0 0.0
    %4194 = vmatpush1.msra.mxu0 0.0
    %4195 = vmatprep.subr.mxu0 0.0
    %4196 = vmatpush1.msra.mxu0 0.0
    %4197 = vmatprep.subr.mxu0 0.0
    %4198 = vmatpush1.msra.mxu0 0.0
    %4199 = vmatprep.subr.mxu0 0.0
    %4200 = vmatpush1.msra.mxu0 %v3485
    %4201 = vmatprep.subr.mxu0 0.0
    %4202 = vmatpush1.msra.mxu0 %v3417
    %4203 = vmatprep.subr.mxu0 0.0
    %4204 = vmatpush2.msra.mxu0 0.0
    %4205 = vmatprep.subr.mxu0 0.0
    %4206 = vmatpush2.msra.mxu0 0.0
    %4207 = vmatprep.subr.mxu0 0.0
    %4208 = vmatpush2.msra.mxu0 0.0
    %4209 = vmatprep.subr.mxu0 0.0
    %4210 = vmatpush2.msra.mxu0 0.0
    %4211 = vmatprep.subr.mxu0 0.0
    %4212 = vmatpush2.msra.mxu0 0.0
    %4213 = vmatprep.subr.mxu0 0.0
    %4214 = vmatpush2.msra.mxu0 0.0
    %4215 = vmatprep.subr.mxu0 0.0
    %4216 = vmatpush2.msra.mxu0 0.0
    %4217 = vmatprep.subr.mxu0 0.0
    %4218 = vmatpush2.msra.mxu0 0.0
    %4219 = vmatprep.subr.mxu0 0.0
    %4220 = vmatpush2.msra.mxu0 0.0
    %4221 = vmatprep.subr.mxu0 0.0
    %4222 = vmatpush2.msra.mxu0 0.0
    %4223 = vmatprep.subr.mxu0 0.0
    %4224 = vmatpush2.msra.mxu0 0.0
    %4225 = vmatprep.subr.mxu0 0.0
    %4226 = vmatpush2.msra.mxu0 0.0
    %4227 = vmatprep.subr.mxu0 0.0
    %4228 = vmatpush2.msra.mxu0 0.0
    %4229 = vmatprep.subr.mxu0 0.0
    %4230 = vmatpush2.msra.mxu0 0.0
    %4231 = vmatprep.subr.mxu0 0.0
    %4232 = vmatpush2.msra.mxu0 0.0
    %4233 = vmatprep.subr.mxu0 0.0
    %4234 = vmatpush2.msra.mxu0 0.0
    %4235 = vmatprep.mubr.f32.mxu0 0.0
    %4236 = vmatmul.mubr.f32.gmra.mxu0 %v4166
    %v4237 = vpop.f32.mrf.mxu0
    %v4238 = vadd.f32 0.0, %v4237
    %v4239 = vpop.f32.mrf.mxu0
    %4240 = vmatprep.mubr.f32.mxu0 0.0
    %4241 = vmatmul.mubr.f32.gmra.mxu0 %v4169
    %v4242 = vpop.f32.mrf.mxu0
    %v4243 = vadd.f32 0.0, %v4242
    %v4244 = vpop.f32.mrf.mxu0
    %4245 = vdwg.mxu0
    %v4246 = vcombine.low %v3995, %v4157
    %v4247 = vcombine.high %v3995, %v4157
    %v4249 = vunpack.c.l.s4 1983009808
    %v4250 = vunpack.c.0.s8 %v4249
    %v4251 = vlaneseq
    %v4252 = vshrl.u32 %v4251, 7
    %v4253 = vsub.s32 %v4250, %v4252
    %v4254 = vrot.slane %v4246, %v4253
    %v4256 = vunpack.c.l.s4 1983009808
    %v4257 = vunpack.c.0.s8 %v4256
    %v4258 = vlaneseq
    %v4259 = vshrl.u32 %v4258, 7
    %v4260 = vsub.s32 %v4257, %v4259
    %v4261 = vrot.slane %v4247, %v4260
    %v4262 = vcombine.low %v4076, %v4238
    %v4263 = vcombine.high %v4076, %v4238
    %v4265 = vunpack.c.l.s4 1983009808
    %v4266 = vunpack.c.0.s8 %v4265
    %v4267 = vlaneseq
    %v4268 = vshrl.u32 %v4267, 7
    %v4269 = vsub.s32 %v4266, %v4268
    %v4270 = vrot.slane %v4262, %v4269
    %v4272 = vunpack.c.l.s4 1983009808
    %v4273 = vunpack.c.0.s8 %v4272
    %v4274 = vlaneseq
    %v4275 = vshrl.u32 %v4274, 7
    %v4276 = vsub.s32 %v4273, %v4275
    %v4277 = vrot.slane %v4263, %v4276
    %v4278 = vcombine.low %v4254, %v4270
    %v4279 = vcombine.high %v4254, %v4270
    %v4281 = vunpack.c.l.s4 1934713408
    %v4282 = vunpack.c.0.s8 %v4281
    %v4283 = vlaneseq
    %v4284 = vshrl.u32 %v4283, 7
    %v4285 = vsub.s32 %v4282, %v4284
    %v4286 = vrot.slane %v4278, %v4285
    %v4288 = vunpack.c.l.s4 1934713408
    %v4289 = vunpack.c.0.s8 %v4288
    %v4290 = vlaneseq
    %v4291 = vshrl.u32 %v4290, 7
    %v4292 = vsub.s32 %v4289, %v4291
    %v4293 = vrot.slane %v4279, %v4292
    %v4294 = vcombine.low %v4261, %v4277
    %v4295 = vcombine.high %v4261, %v4277
    %v4297 = vunpack.c.l.s4 1934713408
    %v4298 = vunpack.c.0.s8 %v4297
    %v4299 = vlaneseq
    %v4300 = vshrl.u32 %v4299, 7
    %v4301 = vsub.s32 %v4298, %v4300
    %v4302 = vrot.slane %v4294, %v4301
    %v4304 = vunpack.c.l.s4 1934713408
    %v4305 = vunpack.c.0.s8 %v4304
    %v4306 = vlaneseq
    %v4307 = vshrl.u32 %v4306, 7
    %v4308 = vsub.s32 %v4305, %v4307
    %v4309 = vrot.slane %v4295, %v4308
    %v4310 = vcombine.high %v4286, 0.0
    %v4311 = vcombine.high %v4293, 0.0
    %v4312 = vcombine.high %v4302, 0.0
    %v4313 = vcombine.high %v4309, 0.0
    %v4314 = vcombine.low %v4000, %v4162
    %v4315 = vcombine.high %v4000, %v4162
    %v4317 = vunpack.c.l.s4 1983009808
    %v4318 = vunpack.c.0.s8 %v4317
    %v4319 = vlaneseq
    %v4320 = vshrl.u32 %v4319, 7
    %v4321 = vsub.s32 %v4318, %v4320
    %v4322 = vrot.slane %v4314, %v4321
    %v4324 = vunpack.c.l.s4 1983009808
    %v4325 = vunpack.c.0.s8 %v4324
    %v4326 = vlaneseq
    %v4327 = vshrl.u32 %v4326, 7
    %v4328 = vsub.s32 %v4325, %v4327
    %v4329 = vrot.slane %v4315, %v4328
    %v4330 = vcombine.low %v4081, %v4243
    %v4331 = vcombine.high %v4081, %v4243
    %v4333 = vunpack.c.l.s4 1983009808
    %v4334 = vunpack.c.0.s8 %v4333
    %v4335 = vlaneseq
    %v4336 = vshrl.u32 %v4335, 7
    %v4337 = vsub.s32 %v4334, %v4336
    %v4338 = vrot.slane %v4330, %v4337
    %v4340 = vunpack.c.l.s4 1983009808
    %v4341 = vunpack.c.0.s8 %v4340
    %v4342 = vlaneseq
    %v4343 = vshrl.u32 %v4342, 7
    %v4344 = vsub.s32 %v4341, %v4343
    %v4345 = vrot.slane %v4331, %v4344
    %v4346 = vcombine.low %v4322, %v4338
    %v4347 = vcombine.high %v4322, %v4338
    %v4349 = vunpack.c.l.s4 1934713408
    %v4350 = vunpack.c.0.s8 %v4349
    %v4351 = vlaneseq
    %v4352 = vshrl.u32 %v4351, 7
    %v4353 = vsub.s32 %v4350, %v4352
    %v4354 = vrot.slane %v4346, %v4353
    %v4356 = vunpack.c.l.s4 1934713408
    %v4357 = vunpack.c.0.s8 %v4356
    %v4358 = vlaneseq
    %v4359 = vshrl.u32 %v4358, 7
    %v4360 = vsub.s32 %v4357, %v4359
    %v4361 = vrot.slane %v4347, %v4360
    %v4362 = vcombine.low %v4329, %v4345
    %v4363 = vcombine.high %v4329, %v4345
    %v4365 = vunpack.c.l.s4 1934713408
    %v4366 = vunpack.c.0.s8 %v4365
    %v4367 = vlaneseq
    %v4368 = vshrl.u32 %v4367, 7
    %v4369 = vsub.s32 %v4366, %v4368
    %v4370 = vrot.slane %v4362, %v4369
    %v4372 = vunpack.c.l.s4 1934713408
    %v4373 = vunpack.c.0.s8 %v4372
    %v4374 = vlaneseq
    %v4375 = vshrl.u32 %v4374, 7
    %v4376 = vsub.s32 %v4373, %v4375
    %v4377 = vrot.slane %v4363, %v4376
    %v4378 = vcombine.high %v4354, 0.0
    %v4379 = vcombine.high %v4361, 0.0
    %v4380 = vcombine.high %v4370, 0.0
    %v4381 = vcombine.high %v4377, 0.0
    %v4382 = vcombine.low %v4286, %v4293
    %v4384 = vunpack.c.l.s4 1983009808
    %v4385 = vunpack.c.0.s8 %v4384
    %v4386 = vlaneseq
    %v4387 = vshrl.u32 %v4386, 7
    %v4388 = vsub.s32 %v4385, %v4387
    %v4389 = vrot.slane %v4382, %v4388
    %v4390 = vcombine.low %v4310, %v4311
    %v4392 = vunpack.c.l.s4 1983009808
    %v4393 = vunpack.c.0.s8 %v4392
    %v4394 = vlaneseq
    %v4395 = vshrl.u32 %v4394, 7
    %v4396 = vsub.s32 %v4393, %v4395
    %v4397 = vrot.slane %v4390, %v4396
    %v4398 = vcombine.low %v4302, %v4309
    %v4400 = vunpack.c.l.s4 1983009808
    %v4401 = vunpack.c.0.s8 %v4400
    %v4402 = vlaneseq
    %v4403 = vshrl.u32 %v4402, 7
    %v4404 = vsub.s32 %v4401, %v4403
    %v4405 = vrot.slane %v4398, %v4404
    %v4406 = vcombine.low %v4312, %v4313
    %v4408 = vunpack.c.l.s4 1983009808
    %v4409 = vunpack.c.0.s8 %v4408
    %v4410 = vlaneseq
    %v4411 = vshrl.u32 %v4410, 7
    %v4412 = vsub.s32 %v4409, %v4411
    %v4413 = vrot.slane %v4406, %v4412
    %v4414 = vcombine.low %v4389, %v4397
    %v4415 = vcombine.high %v4389, %v4397
    %v4417 = vunpack.c.l.s4 1934713408
    %v4418 = vunpack.c.0.s8 %v4417
    %v4419 = vlaneseq
    %v4420 = vshrl.u32 %v4419, 7
    %v4421 = vsub.s32 %v4418, %v4420
    %v4422 = vrot.slane %v4414, %v4421
    %v4424 = vunpack.c.l.s4 1934713408
    %v4425 = vunpack.c.0.s8 %v4424
    %v4426 = vlaneseq
    %v4427 = vshrl.u32 %v4426, 7
    %v4428 = vsub.s32 %v4425, %v4427
    %v4429 = vrot.slane %v4415, %v4428
    %v4430 = vcombine.low %v4405, %v4413
    %v4431 = vcombine.high %v4405, %v4413
    %v4433 = vunpack.c.l.s4 1934713408
    %v4434 = vunpack.c.0.s8 %v4433
    %v4435 = vlaneseq
    %v4436 = vshrl.u32 %v4435, 7
    %v4437 = vsub.s32 %v4434, %v4436
    %v4438 = vrot.slane %v4430, %v4437
    %v4440 = vunpack.c.l.s4 1934713408
    %v4441 = vunpack.c.0.s8 %v4440
    %v4442 = vlaneseq
    %v4443 = vshrl.u32 %v4442, 7
    %v4444 = vsub.s32 %v4441, %v4443
    %v4445 = vrot.slane %v4431, %v4444
    %v4446 = vcombine.low %v4422, %v4438
    %v4447 = vcombine.high %v4422, %v4438
    %v4448 = vcombine.low %v4429, %v4445
    %v4449 = vcombine.high %v4429, %v4445
    %v4450 = vcombine.low %v4354, %v4361
    %v4452 = vunpack.c.l.s4 1983009808
    %v4453 = vunpack.c.0.s8 %v4452
    %v4454 = vlaneseq
    %v4455 = vshrl.u32 %v4454, 7
    %v4456 = vsub.s32 %v4453, %v4455
    %v4457 = vrot.slane %v4450, %v4456
    %v4458 = vcombine.low %v4378, %v4379
    %v4460 = vunpack.c.l.s4 1983009808
    %v4461 = vunpack.c.0.s8 %v4460
    %v4462 = vlaneseq
    %v4463 = vshrl.u32 %v4462, 7
    %v4464 = vsub.s32 %v4461, %v4463
    %v4465 = vrot.slane %v4458, %v4464
    %v4466 = vcombine.low %v4370, %v4377
    %v4468 = vunpack.c.l.s4 1983009808
    %v4469 = vunpack.c.0.s8 %v4468
    %v4470 = vlaneseq
    %v4471 = vshrl.u32 %v4470, 7
    %v4472 = vsub.s32 %v4469, %v4471
    %v4473 = vrot.slane %v4466, %v4472
    %v4474 = vcombine.low %v4380, %v4381
    %v4476 = vunpack.c.l.s4 1983009808
    %v4477 = vunpack.c.0.s8 %v4476
    %v4478 = vlaneseq
    %v4479 = vshrl.u32 %v4478, 7
    %v4480 = vsub.s32 %v4477, %v4479
    %v4481 = vrot.slane %v4474, %v4480
    %v4482 = vcombine.low %v4457, %v4465
    %v4483 = vcombine.high %v4457, %v4465
    %v4485 = vunpack.c.l.s4 1934713408
    %v4486 = vunpack.c.0.s8 %v4485
    %v4487 = vlaneseq
    %v4488 = vshrl.u32 %v4487, 7
    %v4489 = vsub.s32 %v4486, %v4488
    %v4490 = vrot.slane %v4482, %v4489
    %v4492 = vunpack.c.l.s4 1934713408
    %v4493 = vunpack.c.0.s8 %v4492
    %v4494 = vlaneseq
    %v4495 = vshrl.u32 %v4494, 7
    %v4496 = vsub.s32 %v4493, %v4495
    %v4497 = vrot.slane %v4483, %v4496
    %v4498 = vcombine.low %v4473, %v4481
    %v4499 = vcombine.high %v4473, %v4481
    %v4501 = vunpack.c.l.s4 1934713408
    %v4502 = vunpack.c.0.s8 %v4501
    %v4503 = vlaneseq
    %v4504 = vshrl.u32 %v4503, 7
    %v4505 = vsub.s32 %v4502, %v4504
    %v4506 = vrot.slane %v4498, %v4505
    %v4508 = vunpack.c.l.s4 1934713408
    %v4509 = vunpack.c.0.s8 %v4508
    %v4510 = vlaneseq
    %v4511 = vshrl.u32 %v4510, 7
    %v4512 = vsub.s32 %v4509, %v4511
    %v4513 = vrot.slane %v4499, %v4512
    %v4514 = vcombine.low %v4490, %v4506
    %v4515 = vcombine.high %v4490, %v4506
    %v4516 = vcombine.low %v4497, %v4513
    %v4517 = vcombine.high %v4497, %v4513
    %4520 = vrot.lane.b32.xlu0 %v4447, 8
    %v4521 = vpop.permute.xlu0 %4520
    %4522 = vrot.lane.b32.xlu0 %v4515, 8
    %v4523 = vpop.permute.xlu0 %4522
    %4528 = vrot.lane.b32.xlu0 %v4448, 16
    %v4529 = vpop.permute.xlu0 %4528
    %4530 = vrot.lane.b32.xlu0 %v4516, 16
    %v4531 = vpop.permute.xlu0 %4530
    %4536 = vrot.lane.b32.xlu0 %v4449, 24
    %v4537 = vpop.permute.xlu0 %4536
    %4538 = vrot.lane.b32.xlu0 %v4517, 24
    %v4539 = vpop.permute.xlu0 %4538
    %v4542 = vsel %vm1063, %v4446, %v4521
    %v4543 = vsel %vm1063, %v4514, %v4523
    %v4544 = vsel %vm1412, %v4542, %v4529
    %v4545 = vsel %vm1412, %v4543, %v4531
    %v4546 = vsel %vm2125, %v4544, %v4537
    %v4547 = vsel %vm2125, %v4545, %v4539
    %s4548 = scalar_lea.vmem %s3, 32
    %v4549 = vld [vmem:[%s4548] sm:$0xff]
    %v4550 = vld [vmem:[%s4548 + $0x8] sm:$0xff]
    %v4551 = vld [vmem:[%s4548 + $0x10] sm:$0xff]
    %v4552 = vld [vmem:[%s4548 + $0x18] sm:$0xff]
    %v4554 = vsel %vm47, %v4546, 0
    %v4557 = vsel %vm47, %v4547, 0
    %4559 = vmatprep.subr.mxu0 0.0
    %4560 = vmatpush1.msra.mxu0 0.0
    %4561 = vmatprep.subr.mxu0 0.0
    %4562 = vmatpush1.msra.mxu0 0.0
    %4563 = vmatprep.subr.mxu0 0.0
    %4564 = vmatpush1.msra.mxu0 0.0
    %4565 = vmatprep.subr.mxu0 0.0
    %4566 = vmatpush1.msra.mxu0 0.0
    %4567 = vmatprep.subr.mxu0 0.0
    %4568 = vmatpush1.msra.mxu0 0.0
    %4569 = vmatprep.subr.mxu0 0.0
    %4570 = vmatpush1.msra.mxu0 0.0
    %4571 = vmatprep.subr.mxu0 0.0
    %4572 = vmatpush1.msra.mxu0 0.0
    %4573 = vmatprep.subr.mxu0 0.0
    %4574 = vmatpush1.msra.mxu0 0.0
    %4575 = vmatprep.subr.mxu0 0.0
    %4576 = vmatpush1.msra.mxu0 0.0
    %4577 = vmatprep.subr.mxu0 0.0
    %4578 = vmatpush1.msra.mxu0 0.0
    %4579 = vmatprep.subr.mxu0 0.0
    %4580 = vmatpush1.msra.mxu0 0.0
    %4581 = vmatprep.subr.mxu0 0.0
    %4582 = vmatpush1.msra.mxu0 0.0
    %4583 = vmatprep.subr.mxu0 0.0
    %4584 = vmatpush1.msra.mxu0 %v4552
    %4585 = vmatprep.subr.mxu0 0.0
    %4586 = vmatpush1.msra.mxu0 %v4551
    %4587 = vmatprep.subr.mxu0 0.0
    %4588 = vmatpush1.msra.mxu0 %v4550
    %4589 = vmatprep.subr.mxu0 0.0
    %4590 = vmatpush1.msra.mxu0 %v4549
    %4591 = vmatprep.subr.mxu0 0.0
    %4592 = vmatpush2.msra.mxu0 0.0
    %4593 = vmatprep.subr.mxu0 0.0
    %4594 = vmatpush2.msra.mxu0 0.0
    %4595 = vmatprep.subr.mxu0 0.0
    %4596 = vmatpush2.msra.mxu0 0.0
    %4597 = vmatprep.subr.mxu0 0.0
    %4598 = vmatpush2.msra.mxu0 0.0
    %4599 = vmatprep.subr.mxu0 0.0
    %4600 = vmatpush2.msra.mxu0 0.0
    %4601 = vmatprep.subr.mxu0 0.0
    %4602 = vmatpush2.msra.mxu0 0.0
    %4603 = vmatprep.subr.mxu0 0.0
    %4604 = vmatpush2.msra.mxu0 0.0
    %4605 = vmatprep.subr.mxu0 0.0
    %4606 = vmatpush2.msra.mxu0 0.0
    %4607 = vmatprep.subr.mxu0 0.0
    %4608 = vmatpush2.msra.mxu0 0.0
    %4609 = vmatprep.subr.mxu0 0.0
    %4610 = vmatpush2.msra.mxu0 0.0
    %4611 = vmatprep.subr.mxu0 0.0
    %4612 = vmatpush2.msra.mxu0 0.0
    %4613 = vmatprep.subr.mxu0 0.0
    %4614 = vmatpush2.msra.mxu0 0.0
    %4615 = vmatprep.subr.mxu0 0.0
    %4616 = vmatpush2.msra.mxu0 0.0
    %4617 = vmatprep.subr.mxu0 0.0
    %4618 = vmatpush2.msra.mxu0 0.0
    %4619 = vmatprep.subr.mxu0 0.0
    %4620 = vmatpush2.msra.mxu0 0.0
    %4621 = vmatprep.subr.mxu0 0.0
    %4622 = vmatpush2.msra.mxu0 0.0
    %4623 = vmatprep.mubr.f32.mxu0 0.0
    %4624 = vmatmul.mubr.f32.gmra.mxu0 %v4554
    %v4625 = vpop.f32.mrf.mxu0
    %v4626 = vadd.f32 0.0, %v4625
    %v4627 = vpop.f32.mrf.mxu0
    %4628 = vmatprep.mubr.f32.mxu0 0.0
    %4629 = vmatmul.mubr.f32.gmra.mxu0 %v4557
    %v4630 = vpop.f32.mrf.mxu0
    %v4631 = vadd.f32 0.0, %v4630
    %v4632 = vpop.f32.mrf.mxu0
    %4633 = vdwg.mxu0
    %v4634 = vadd.f32 %v2466, %v4626
    %v4635 = vadd.f32 %v2467, %v4631
    %v4636 = vlaneseq
    %v4637 = vshrl.u32 %v4636, 7
    %v4638 = vsub.s32 4, %v4637
    %v4639 = vrot.slane %v2469, %v4638
    %v4640 = vadd.f32 %v4634, %v4639
    %v4641 = vadd.f32 %v4635, %v4639
    %v4642 = vsel %vm47, %v4640, 0.0
    %4643 = vadd.xlane.f32.xlu0 %v4642
    %v4644 = vpop.xlane.xlu0 %4643
    %v4645 = vsel %vm47, %v4641, 0.0
    %4646 = vadd.xlane.f32.xlu0 %v4645
    %v4647 = vpop.xlane.xlu0 %4646
    %v4648 = vmul.f32 %v4644, %v54
    %v4649 = vmul.f32 %v4647, %v54
    %v4650 = vsub.f32 %v4640, %v4648
    %v4651 = vsub.f32 %v4641, %v4649
    %v4652 = vmul.f32 %v4650, %v4650
    %v4653 = vmul.f32 %v4651, %v4651
    %v4654 = vsel %vm47, %v4652, 0.0
    %4655 = vadd.xlane.f32.xlu0 %v4654
    %v4656 = vpop.xlane.xlu0 %4655
    %v4657 = vsel %vm47, %v4653, 0.0
    %4658 = vadd.xlane.f32.xlu0 %v4657
    %v4659 = vpop.xlane.xlu0 %4658
    %v4660 = vmul.f32 %v4656, %v54
    %v4661 = vmul.f32 %v4659, %v54
    %v4662 = vadd.f32 %v4660, 1e-05
    %v4663 = vadd.f32 %v4661, 1e-05
    %v4664 = vrsqrt.pop %v4662
    %v4665 = vrsqrt.pop %v4663
    %v4666 = vmul.f32 %v4650, %v4664
    %v4667 = vmul.f32 %v4651, %v4665
    %v4668 = vlaneseq
    %v4669 = vshrl.u32 %v4668, 7
    %v4670 = vsub.s32 2, %v4669
    %v4671 = vrot.slane %v2469, %v4670
    %v4672 = vmul.f32 %v4666, %v4671
    %v4673 = vmul.f32 %v4667, %v4671
    %v4674 = vlaneseq
    %v4675 = vshrl.u32 %v4674, 7
    %v4676 = vsub.s32 3, %v4675
    %v4677 = vrot.slane %v2469, %v4676
    %v4678 = vadd.f32 %v4672, %v4677
    %v4679 = vadd.f32 %v4673, %v4677
    %s4680 = scalar_lea.vmem %s4, 32
    %v4681 = vld [vmem:[%s4680] sm:$0xff]
    %v4682 = vld [vmem:[%s4680 + $0x8] sm:$0xff]
    %v4683 = vld [vmem:[%s4680 + $0x10] sm:$0xff]
    %v4684 = vld [vmem:[%s4680 + $0x18] sm:$0xff]
    %s4685 = scalar_lea.vmem %s7, 1
    %v4686 = vld [vmem:[%s4685] sm:$0x1]
    %v4688 = vlaneseq
    %v4689 = vshrl.u32 %v4688, 7
    %v4690 = vsub.s32 0, %v4689
    %v4691 = vrot.slane %v4686, %v4690
    %v4694 = vsel %vm47, %v4678, 0
    %v4697 = vsel %vm47, %v4679, 0
    %4699 = vmatprep.subr.mxu0 0.0
    %4700 = vmatpush1.msra.mxu0 0.0
    %4701 = vmatprep.subr.mxu0 0.0
    %4702 = vmatpush1.msra.mxu0 0.0
    %4703 = vmatprep.subr.mxu0 0.0
    %4704 = vmatpush1.msra.mxu0 0.0
    %4705 = vmatprep.subr.mxu0 0.0
    %4706 = vmatpush1.msra.mxu0 0.0
    %4707 = vmatprep.subr.mxu0 0.0
    %4708 = vmatpush1.msra.mxu0 0.0
    %4709 = vmatprep.subr.mxu0 0.0
    %4710 = vmatpush1.msra.mxu0 0.0
    %4711 = vmatprep.subr.mxu0 0.0
    %4712 = vmatpush1.msra.mxu0 0.0
    %4713 = vmatprep.subr.mxu0 0.0
    %4714 = vmatpush1.msra.mxu0 0.0
    %4715 = vmatprep.subr.mxu0 0.0
    %4716 = vmatpush1.msra.mxu0 0.0
    %4717 = vmatprep.subr.mxu0 0.0
    %4718 = vmatpush1.msra.mxu0 0.0
    %4719 = vmatprep.subr.mxu0 0.0
    %4720 = vmatpush1.msra.mxu0 0.0
    %4721 = vmatprep.subr.mxu0 0.0
    %4722 = vmatpush1.msra.mxu0 0.0
    %4723 = vmatprep.subr.mxu0 0.0
    %4724 = vmatpush1.msra.mxu0 %v4684
    %4725 = vmatprep.subr.mxu0 0.0
    %4726 = vmatpush1.msra.mxu0 %v4683
    %4727 = vmatprep.subr.mxu0 0.0
    %4728 = vmatpush1.msra.mxu0 %v4682
    %4729 = vmatprep.subr.mxu0 0.0
    %4730 = vmatpush1.msra.mxu0 %v4681
    %4731 = vmatprep.subr.mxu0 0.0
    %4732 = vmatpush2.msra.mxu0 0.0
    %4733 = vmatprep.subr.mxu0 0.0
    %4734 = vmatpush2.msra.mxu0 0.0
    %4735 = vmatprep.subr.mxu0 0.0
    %4736 = vmatpush2.msra.mxu0 0.0
    %4737 = vmatprep.subr.mxu0 0.0
    %4738 = vmatpush2.msra.mxu0 0.0
    %4739 = vmatprep.subr.mxu0 0.0
    %4740 = vmatpush2.msra.mxu0 0.0
    %4741 = vmatprep.subr.mxu0 0.0
    %4742 = vmatpush2.msra.mxu0 0.0
    %4743 = vmatprep.subr.mxu0 0.0
    %4744 = vmatpush2.msra.mxu0 0.0
    %4745 = vmatprep.subr.mxu0 0.0
    %4746 = vmatpush2.msra.mxu0 0.0
    %4747 = vmatprep.subr.mxu0 0.0
    %4748 = vmatpush2.msra.mxu0 0.0
    %4749 = vmatprep.subr.mxu0 0.0
    %4750 = vmatpush2.msra.mxu0 0.0
    %4751 = vmatprep.subr.mxu0 0.0
    %4752 = vmatpush2.msra.mxu0 0.0
    %4753 = vmatprep.subr.mxu0 0.0
    %4754 = vmatpush2.msra.mxu0 0.0
    %4755 = vmatprep.subr.mxu0 0.0
    %4756 = vmatpush2.msra.mxu0 0.0
    %4757 = vmatprep.subr.mxu0 0.0
    %4758 = vmatpush2.msra.mxu0 0.0
    %4759 = vmatprep.subr.mxu0 0.0
    %4760 = vmatpush2.msra.mxu0 0.0
    %4761 = vmatprep.subr.mxu0 0.0
    %4762 = vmatpush2.msra.mxu0 0.0
    %4763 = vmatprep.mubr.f32.mxu0 0.0
    %4764 = vmatmul.mubr.f32.gmra.mxu0 %v4694
    %v4765 = vpop.f32.mrf.mxu0
    %v4766 = vadd.f32 %v4691, %v4765
    %v4767 = vpop.f32.mrf.mxu0
    %4768 = vmatprep.mubr.f32.mxu0 0.0
    %4769 = vmatmul.mubr.f32.gmra.mxu0 %v4697
    %v4770 = vpop.f32.mrf.mxu0
    %v4771 = vadd.f32 %v4691, %v4770
    %v4772 = vpop.f32.mrf.mxu0
    %4773 = vdwg.mxu0
    %v4774 = vmul.f32 %v4766, 0.5
    %v4775 = vmul.f32 %v4771, 0.5
    %v4776 = vmul.f32 %v4766, %v4766
    %v4777 = vmul.f32 %v4771, %v4771
    %v4778 = vmul.f32 %v4766, %v4776
    %v4779 = vmul.f32 %v4771, %v4777
    %v4780 = vmul.f32 %v4778, 0.044715
    %v4781 = vmul.f32 %v4779, 0.044715
    %v4782 = vadd.f32 %v4766, %v4780
    %v4783 = vadd.f32 %v4771, %v4781
    %v4784 = vmul.f32 %v4782, 0.7978846
    %v4785 = vmul.f32 %v4783, 0.7978846
    %v4786 = vtanh.pop %v4784
    %v4787 = vtanh.pop %v4785
    %v4788 = vadd.f32 %v4786, 1.0
    %v4789 = vadd.f32 %v4787, 1.0
    %v4790 = vmul.f32 %v4774, %v4788
    %v4791 = vmul.f32 %v4775, %v4789
    %s4792 = scalar_lea.vmem %s5, 128
    %v4793 = vld [vmem:[%s4792] sm:$0xff]
    %v4794 = vld [vmem:[%s4792 + $0x8] sm:$0xff]
    %v4795 = vld [vmem:[%s4792 + $0x10] sm:$0xff]
    %v4796 = vld [vmem:[%s4792 + $0x18] sm:$0xff]
    %v4797 = vld [vmem:[%s4792 + $0x20] sm:$0xff]
    %v4798 = vld [vmem:[%s4792 + $0x28] sm:$0xff]
    %v4799 = vld [vmem:[%s4792 + $0x30] sm:$0xff]
    %v4800 = vld [vmem:[%s4792 + $0x38] sm:$0xff]
    %v4801 = vld [vmem:[%s4792 + $0x40] sm:$0xff]
    %v4802 = vld [vmem:[%s4792 + $0x48] sm:$0xff]
    %v4803 = vld [vmem:[%s4792 + $0x50] sm:$0xff]
    %v4804 = vld [vmem:[%s4792 + $0x58] sm:$0xff]
    %v4805 = vld [vmem:[%s4792 + $0x60] sm:$0xff]
    %v4806 = vld [vmem:[%s4792 + $0x68] sm:$0xff]
    %v4807 = vld [vmem:[%s4792 + $0x70] sm:$0xff]
    %v4808 = vld [vmem:[%s4792 + $0x78] sm:$0xff]
    %4809 = vmatprep.subr.mxu0 0.0
    %4810 = vmatpush1.msra.mxu0 %v4808
    %4811 = vmatprep.subr.mxu0 0.0
    %4812 = vmatpush1.msra.mxu0 %v4807
    %4813 = vmatprep.subr.mxu0 0.0
    %4814 = vmatpush1.msra.mxu0 %v4806
    %4815 = vmatprep.subr.mxu0 0.0
    %4816 = vmatpush1.msra.mxu0 %v4805
    %4817 = vmatprep.subr.mxu0 0.0
    %4818 = vmatpush1.msra.mxu0 %v4804
    %4819 = vmatprep.subr.mxu0 0.0
    %4820 = vmatpush1.msra.mxu0 %v4803
    %4821 = vmatprep.subr.mxu0 0.0
    %4822 = vmatpush1.msra.mxu0 %v4802
    %4823 = vmatprep.subr.mxu0 0.0
    %4824 = vmatpush1.msra.mxu0 %v4801
    %4825 = vmatprep.subr.mxu0 0.0
    %4826 = vmatpush1.msra.mxu0 %v4800
    %4827 = vmatprep.subr.mxu0 0.0
    %4828 = vmatpush1.msra.mxu0 %v4799
    %4829 = vmatprep.subr.mxu0 0.0
    %4830 = vmatpush1.msra.mxu0 %v4798
    %4831 = vmatprep.subr.mxu0 0.0
    %4832 = vmatpush1.msra.mxu0 %v4797
    %4833 = vmatprep.subr.mxu0 0.0
    %4834 = vmatpush1.msra.mxu0 %v4796
    %4835 = vmatprep.subr.mxu0 0.0
    %4836 = vmatpush1.msra.mxu0 %v4795
    %4837 = vmatprep.subr.mxu0 0.0
    %4838 = vmatpush1.msra.mxu0 %v4794
    %4839 = vmatprep.subr.mxu0 0.0
    %4840 = vmatpush1.msra.mxu0 %v4793
    %4841 = vmatprep.subr.mxu0 0.0
    %4842 = vmatpush2.msra.mxu0 0.0
    %4843 = vmatprep.subr.mxu0 0.0
    %4844 = vmatpush2.msra.mxu0 0.0
    %4845 = vmatprep.subr.mxu0 0.0
    %4846 = vmatpush2.msra.mxu0 0.0
    %4847 = vmatprep.subr.mxu0 0.0
    %4848 = vmatpush2.msra.mxu0 0.0
    %4849 = vmatprep.subr.mxu0 0.0
    %4850 = vmatpush2.msra.mxu0 0.0
    %4851 = vmatprep.subr.mxu0 0.0
    %4852 = vmatpush2.msra.mxu0 0.0
    %4853 = vmatprep.subr.mxu0 0.0
    %4854 = vmatpush2.msra.mxu0 0.0
    %4855 = vmatprep.subr.mxu0 0.0
    %4856 = vmatpush2.msra.mxu0 0.0
    %4857 = vmatprep.subr.mxu0 0.0
    %4858 = vmatpush2.msra.mxu0 0.0
    %4859 = vmatprep.subr.mxu0 0.0
    %4860 = vmatpush2.msra.mxu0 0.0
    %4861 = vmatprep.subr.mxu0 0.0
    %4862 = vmatpush2.msra.mxu0 0.0
    %4863 = vmatprep.subr.mxu0 0.0
    %4864 = vmatpush2.msra.mxu0 0.0
    %4865 = vmatprep.subr.mxu0 0.0
    %4866 = vmatpush2.msra.mxu0 0.0
    %4867 = vmatprep.subr.mxu0 0.0
    %4868 = vmatpush2.msra.mxu0 0.0
    %4869 = vmatprep.subr.mxu0 0.0
    %4870 = vmatpush2.msra.mxu0 0.0
    %4871 = vmatprep.subr.mxu0 0.0
    %4872 = vmatpush2.msra.mxu0 0.0
    %4873 = vmatprep.mubr.f32.mxu0 0.0
    %4874 = vmatmul.mubr.f32.gmra.mxu0 %v4790
    %v4875 = vpop.f32.mrf.mxu0
    %v4876 = vadd.f32 0.0, %v4875
    %v4877 = vpop.f32.mrf.mxu0
    %4878 = vmatprep.mubr.f32.mxu0 0.0
    %4879 = vmatmul.mubr.f32.gmra.mxu0 %v4791
    %v4880 = vpop.f32.mrf.mxu0
    %v4881 = vadd.f32 0.0, %v4880
    %v4882 = vpop.f32.mrf.mxu0
    %4883 = vdwg.mxu0
    %v4884 = vadd.f32 %v4640, %v4876
    %v4885 = vadd.f32 %v4641, %v4881
    %v4886 = vlaneseq
    %v4887 = vshrl.u32 %v4886, 7
    %v4888 = vsub.s32 5, %v4887
    %v4889 = vrot.slane %v2469, %v4888
    %v4890 = vadd.f32 %v4884, %v4889
    %v4891 = vadd.f32 %v4885, %v4889
    %v4892 = vld [vmem:[%s9] sm:$0x3]
    %v4894 = vrot.slane %v4890, 7
    %v4897 = vrot.slane %v4891, 6
    %vm4899 = vcmask 1040384
    %v4900 = vsel %vm4899, %v4894, %v4897
    %vm4901 = vcmask 254976
    %v4902 = vsel %vm4901, %v4900, 0.0
    %4903 = vadd.xlane.f32.xlu0 %v4902
    %v4904 = vpop.xlane.xlu0 %4903
    %v4905 = vmul.f32 %v4904, %v54
    %v4906 = vsub.f32 %v4900, %v4905
    %v4907 = vmul.f32 %v4906, %v4906
    %v4908 = vsel %vm4901, %v4907, 0.0
    %4909 = vadd.xlane.f32.xlu0 %v4908
    %v4910 = vpop.xlane.xlu0 %4909
    %v4911 = vmul.f32 %v4910, %v54
    %v4912 = vadd.f32 %v4911, 1e-05
    %v4913 = vrsqrt.pop %v4912
    %v4914 = vmul.f32 %v4906, %v4913
    %v4915 = vlaneseq
    %v4916 = vshrl.u32 %v4915, 7
    %v4917 = vsub.s32 0, %v4916
    %v4918 = vrot.slane %v4892, %v4917
    %v4919 = vmul.f32 %v4914, %v4918
    %v4920 = vlaneseq
    %v4921 = vshrl.u32 %v4920, 7
    %v4922 = vsub.s32 1, %v4921
    %v4923 = vrot.slane %v4892, %v4922
    %v4924 = vadd.f32 %v4919, %v4923
    %v4925 = vld [vmem:[%s10] sm:$0xff]
    %v4926 = vld [vmem:[%s10 + $0x8] sm:$0xff]
    %v4927 = vld [vmem:[%s10 + $0x10] sm:$0xff]
    %v4928 = vld [vmem:[%s10 + $0x18] sm:$0xff]
    %v4929 = vld [vmem:[%s11] sm:$0x1]
    %v4931 = vlaneseq
    %v4932 = vshrl.u32 %v4931, 7
    %v4933 = vsub.s32 0, %v4932
    %v4934 = vrot.slane %v4929, %v4933
    %v4937 = vsel %vm47, %v4924, 0
    %4939 = vmatprep.subr.mxu0 0.0
    %4940 = vmatpush1.msra.mxu0 0.0
    %4941 = vmatprep.subr.mxu0 0.0
    %4942 = vmatpush1.msra.mxu0 0.0
    %4943 = vmatprep.subr.mxu0 0.0
    %4944 = vmatpush1.msra.mxu0 0.0
    %4945 = vmatprep.subr.mxu0 0.0
    %4946 = vmatpush1.msra.mxu0 0.0
    %4947 = vmatprep.subr.mxu0 0.0
    %4948 = vmatpush1.msra.mxu0 0.0
    %4949 = vmatprep.subr.mxu0 0.0
    %4950 = vmatpush1.msra.mxu0 0.0
    %4951 = vmatprep.subr.mxu0 0.0
    %4952 = vmatpush1.msra.mxu0 0.0
    %4953 = vmatprep.subr.mxu0 0.0
    %4954 = vmatpush1.msra.mxu0 0.0
    %4955 = vmatprep.subr.mxu0 0.0
    %4956 = vmatpush1.msra.mxu0 0.0
    %4957 = vmatprep.subr.mxu0 0.0
    %4958 = vmatpush1.msra.mxu0 0.0
    %4959 = vmatprep.subr.mxu0 0.0
    %4960 = vmatpush1.msra.mxu0 0.0
    %4961 = vmatprep.subr.mxu0 0.0
    %4962 = vmatpush1.msra.mxu0 0.0
    %4963 = vmatprep.subr.mxu0 0.0
    %4964 = vmatpush1.msra.mxu0 %v4928
    %4965 = vmatprep.subr.mxu0 0.0
    %4966 = vmatpush1.msra.mxu0 %v4927
    %4967 = vmatprep.subr.mxu0 0.0
    %4968 = vmatpush1.msra.mxu0 %v4926
    %4969 = vmatprep.subr.mxu0 0.0
    %4970 = vmatpush1.msra.mxu0 %v4925
    %4971 = vmatprep.subr.mxu0 0.0
    %4972 = vmatpush2.msra.mxu0 0.0
    %4973 = vmatprep.subr.mxu0 0.0
    %4974 = vmatpush2.msra.mxu0 0.0
    %4975 = vmatprep.subr.mxu0 0.0
    %4976 = vmatpush2.msra.mxu0 0.0
    %4977 = vmatprep.subr.mxu0 0.0
    %4978 = vmatpush2.msra.mxu0 0.0
    %4979 = vmatprep.subr.mxu0 0.0
    %4980 = vmatpush2.msra.mxu0 0.0
    %4981 = vmatprep.subr.mxu0 0.0
    %4982 = vmatpush2.msra.mxu0 0.0
    %4983 = vmatprep.subr.mxu0 0.0
    %4984 = vmatpush2.msra.mxu0 0.0
    %4985 = vmatprep.subr.mxu0 0.0
    %4986 = vmatpush2.msra.mxu0 0.0
    %4987 = vmatprep.subr.mxu0 0.0
    %4988 = vmatpush2.msra.mxu0 0.0
    %4989 = vmatprep.subr.mxu0 0.0
    %4990 = vmatpush2.msra.mxu0 0.0
    %4991 = vmatprep.subr.mxu0 0.0
    %4992 = vmatpush2.msra.mxu0 0.0
    %4993 = vmatprep.subr.mxu0 0.0
    %4994 = vmatpush2.msra.mxu0 0.0
    %4995 = vmatprep.subr.mxu0 0.0
    %4996 = vmatpush2.msra.mxu0 0.0
    %4997 = vmatprep.subr.mxu0 0.0
    %4998 = vmatpush2.msra.mxu0 0.0
    %4999 = vmatprep.subr.mxu0 0.0
    %5000 = vmatpush2.msra.mxu0 0.0
    %5001 = vmatprep.subr.mxu0 0.0
    %5002 = vmatpush2.msra.mxu0 0.0
    %5003 = vmatprep.mubr.f32.mxu0 0.0
    %5004 = vmatmul.mubr.f32.gmra.mxu0 %v4937
    %v5005 = vpop.f32.mrf.mxu0
    %v5006 = vadd.f32 %v4934, %v5005
    %v5007 = vpop.f32.mrf.mxu0
    %5008 = vdwg.mxu0
    %5009 = vst [vmem:[#allocation2] sm:$0x3] %v5006
    // Predicated region
    $region50: #{tpu_custom_call.1} parent=1 // pred_check
      _
    $region51: #{tpu_custom_call.1} parent=1 // pred_check_branch
      %5011 = sbr.rel (0) target = $region53
    $region52: #{tpu_custom_call.1} parent=1 // pred_region
      %s5013 = ssub.s32 32, 32
      %5014 = vsyncadd [#allocation3], %s5013
      %s5016 = sshll.u32 [#allocation2], 4
      %s5017 = int_to_ptr.vmem [resolvable:$true] %s5016
      %5019 = dma.vmem_to_hbm [thread:$0]  %s5017, 32, %s12, [#allocation3]
    $region53: #{tpu_custom_call.1} parent=1 // pred_fallthru
      _
    // Predicated region
    $region54: #{tpu_custom_call.1} parent=1 // pred_check
      _
    $region55: #{tpu_custom_call.1} parent=1 // pred_check_branch
      %5021 = sbr.rel (0) target = $region57
    $region56: #{tpu_custom_call.1} parent=1 // pred_region
      %5022 = dma.done [#allocation3], 32
    $region57: #{tpu_custom_call.1} parent=1 // pred_fallthru
      _
    %5023 = vsyncpa [#allocation3], 1

</llo_original>
